<compile_context>
chip_gen: v5e
topology: v5e:2x2
jax: 0.10.0
libtpu: 0.0.40
codegen_flags: <defaults>
</compile_context>

<pallas_src>
import functools
import math
import numpy as np
import jax
import jax.numpy as jnp
from jax.experimental import pallas as pl
from jax.experimental.pallas import tpu as pltpu

_F32 = jnp.float32
_BF16 = jnp.bfloat16

# Row layout of the packed small-vector parameter array ("vecs").
_VEC_ROWS = ("b1", "b2", "ca_b1", "ca_b2", "ln1_w", "ln1_b",
             "bqkv", "bo", "ln2_w", "ln2_b", "ff_b1", "ff_b2",
             "bps", "lnp_w", "lnp_b", "bp2")
_VROW = {n: i for i, n in enumerate(_VEC_ROWS)}


def _gelu(v):
    # TODO(synk): PyTorch nn.GELU() default is the exact erf form; tanh approximation used here.
    c = 0.7978845608028654  # sqrt(2/pi)
    return 0.5 * v * (1.0 + jnp.tanh(c * (v + 0.044715 * v * v * v)))


# --------------------------------------------------------------------------- #
# Fused kernel: one grid step == one batch element, full forward pass.
# --------------------------------------------------------------------------- #
def _fused_encoder_kernel(x_ref, w1f_ref, w2f_ref, ca_w1_ref, ca_w2_ref,
                          pool_ref, pe_ref, wqkv_ref, wo_ref,
                          ff_w1_ref, ff_w2_ref, wp2_ref, vecs_ref, wps_hbm_ref,
                          o_ref,
                          wps_vmem, wps_sem, h1_buf, stack2, oh_buf, qkv_buf,
                          *, nh):
    L = x_ref.shape[0]
    C1 = w1f_ref.shape[-1]
    D = w2f_ref.shape[-1]
    K2 = w2f_ref.shape[0] // C1
    red = ca_w1_ref.shape[-1]
    T = pool_ref.shape[0]
    hd = D // nh
    FF = ff_w1_ref.shape[-1]
    PH = wp2_ref.shape[0]
    latent = wp2_ref.shape[-1]

    # Kick off the big projector/skip weight DMA first so it overlaps everything
    # up to the projector (re-issued every grid step -> megacore-safe).
    wps_copy = pltpu.make_async_copy(wps_hbm_ref, wps_vmem, wps_sem)
    wps_copy.start()

    def vrow(name, width):
        r = _VROW[name]
        return vecs_ref[r:r + 1, :width]                   # (1, width) f32

    def layernorm(v, w, b):
        mu = jnp.mean(v, axis=-1, keepdims=True)
        var = jnp.mean((v - mu) ** 2, axis=-1, keepdims=True)
        return (v - mu) * jax.lax.rsqrt(var + 1e-5) * w + b

    # ---- conv stage 1: input arrives im2col-stacked (L, K1*Cin) -> ONE matmul ----
    h = jnp.dot(x_ref[...].astype(_BF16), w1f_ref[...],
                preferred_element_type=_F32) + vrow("b1", C1)
    h = _gelu(h)                                                      # (L, C1) f32

    # ---- conv stage 2: build 3-tap shifted stack in VMEM (vld/vst), ONE matmul ----
    h1_buf[...] = h
    pad2 = (K2 - 1) // 2
    for k in range(K2):                                   # static unroll over taps
        off = k - pad2
        c0 = k * C1
        if off == 0:
            stack2[:, c0:c0 + C1] = h
        elif off > 0:
            stack2[0:L - off, c0:c0 + C1] = h1_buf[off:L, :]
            stack2[L - off:L, c0:c0 + C1] = jnp.zeros((off, C1), _F32)
        else:
            o = -off
            stack2[o:L, c0:c0 + C1] = h1_buf[0:L - o, :]
            stack2[0:o, c0:c0 + C1] = jnp.zeros((o, C1), _F32)
    h = jnp.dot(stack2[...].astype(_BF16), w2f_ref[...],
                preferred_element_type=_F32) + vrow("b2", D)
    h = _gelu(h)                                                      # (L, D) f32

    # ---- ChannelAttention(D, reduction): avg & max batched through one MLP pass ---
    avg = jnp.mean(h, axis=0, keepdims=True)                          # (1, D)
    mx = jnp.max(h, axis=0, keepdims=True)                            # (1, D)
    rsel = jax.lax.broadcasted_iota(jnp.int32, (2, D), 0)
    st = jnp.where(rsel == 0, jnp.broadcast_to(avg, (2, D)),
                   jnp.broadcast_to(mx, (2, D)))                      # (2, D)
    a = jnp.dot(st.astype(_BF16), ca_w1_ref[...],
                preferred_element_type=_F32) + vrow("ca_b1", red)
    a = jnp.maximum(a, 0.0)
    g = jax.nn.sigmoid(jnp.dot(a.astype(_BF16), ca_w2_ref[...],
                               preferred_element_type=_F32) + vrow("ca_b2", D))
    # NOTE: double sigmoid matches the reference module exactly
    # (fc ends in nn.Sigmoid, then torch.sigmoid(avg_out + max_out)).
    h = h * jax.nn.sigmoid(g[0:1, :] + g[1:2, :])

    # ---- AdaptiveAvgPool1d(T) as an exact (T, L) pooling matmul + pos. encoding ---
    y = jnp.dot(pool_ref[...], h.astype(_BF16),
                preferred_element_type=_F32)                          # (T, D)
    y = y + pe_ref[...]                                               # scale*pe precomputed

    # ---- TransformerEncoderLayer (norm_first, nh heads, relu FF, dropout=id) ------
    inv_sqrt = 1.0 / math.sqrt(hd)
    n1 = layernorm(y, vrow("ln1_w", D), vrow("ln1_b", D)).astype(_BF16)
    # fused QKV projection: one (T,D)x(D,3D) matmul, per-head slices from scratch
    qkv_buf[...] = jnp.dot(n1, wqkv_ref[...],
                           preferred_element_type=_F32) + vrow("bqkv", 3 * D)
    for hi in range(nh):                                   # static unroll over heads
        lo = hi * hd
        qh = qkv_buf[:, lo:lo + hd]
        kh = qkv_buf[:, D + lo:D + lo + hd]
        vh = qkv_buf[:, 2 * D + lo:2 * D + lo + hd]
        s = jax.lax.dot_general(qh * inv_sqrt, kh, (((1,), (1,)), ((), ())),
                                preferred_element_type=_F32)          # (T, T)
        s = s - jnp.max(s, axis=-1, keepdims=True)
        p = jnp.exp(s)
        p = p / jnp.sum(p, axis=-1, keepdims=True)
        oh_buf[:, lo:lo + hd] = jnp.dot(p.astype(_BF16), vh.astype(_BF16),
                                        preferred_element_type=_F32)  # (T, hd)
    # fused output projection: one (T,D)x(D,D) matmul against the original Wo
    attn = jnp.dot(oh_buf[...].astype(_BF16), wo_ref[...],
                   preferred_element_type=_F32)                       # (T, D)
    y = y + attn + vrow("bo", D)

    n2 = layernorm(y, vrow("ln2_w", D), vrow("ln2_b", D)).astype(_BF16)
    f = jnp.dot(n2, ff_w1_ref[...], preferred_element_type=_F32) + vrow("ff_b1", FF)
    f = jnp.maximum(f, 0.0)
    f = jnp.dot(f.astype(_BF16), ff_w2_ref[...],
                preferred_element_type=_F32) + vrow("ff_b2", D)
    y = y + f                                                         # (T, D)

    # ---- projector + skip on the flattened (1, T*D) vector: ONE fused matmul ------
    wps_copy.wait()                                                   # overlapped DMA
    y_flat = jnp.concatenate([y[t:t + 1, :] for t in range(T)],
                             axis=-1).astype(_BF16)                   # (1, T*D), 128-aligned concat
    res = jnp.dot(y_flat, wps_vmem[...],
                  preferred_element_type=_F32) + vrow("bps", PH + latent)  # (1, PH+latent)
    h1 = res[:, :PH]
    skip = res[:, PH:PH + latent]
    h1 = _gelu(layernorm(h1, vrow("lnp_w", PH), vrow("lnp_b", PH)))   # dropout = identity
    proj = jnp.dot(h1.astype(_BF16), wp2_ref[...],
                   preferred_element_type=_F32) + vrow("bp2", latent)
    o_ref[...] = (proj + skip).astype(o_ref.dtype)


# --------------------------------------------------------------------------- #
# Wrapper: one pallas_call over the batch.
# --------------------------------------------------------------------------- #
def enhanced_hybrid_encoder_forward(x, kp, nh=4):
    """x: (batch, seq_len, features) f32; kp: kernel-ready params (prepare_params)."""
    B, L, Cin = x.shape
    K1 = kp["w1f"].shape[0] // Cin
    C1 = kp["w1f"].shape[1]
    K2C1 = kp["w2f"].shape[0]
    D = kp["w2f"].shape[1]
    T = kp["pool"].shape[0]
    PH = kp["wp2"].shape[0]
    latent = kp["wp2"].shape[1]
    Fdim = kp["wps"].shape[0]

    # im2col for conv stage 1 (layout plumbing only): (B, L, Cin) -> (B, L, K1*Cin),
    # tap k holds x shifted by (k - (K1-1)//2) with exact zero padding.
    pad = (K1 - 1) // 2
    xp = jnp.pad(x, ((0, 0), (pad, pad), (0, 0)))
    x_stack = jnp.concatenate([xp[:, k:k + L, :] for k in range(K1)], axis=-1)

    ops = [kp[k] for k in ("w1f", "w2f", "ca_w1", "ca_w2", "pool", "pe",
                           "wqkv", "wo", "ff_w1", "ff_w2", "wp2", "vecs")]

    def full_spec(a):
        nd = a.ndim
        return pl.BlockSpec(a.shape, lambda b, _nd=nd: (0,) * _nd)

    kernel = functools.partial(_fused_encoder_kernel, nh=nh)

    out = pl.pallas_call(
        kernel,
        grid=(B,),
        in_specs=[pl.BlockSpec((None, L, K1 * Cin), lambda b: (b, 0, 0))]
                 + [full_spec(a) for a in ops]
                 + [pl.BlockSpec(memory_space=pl.ANY)],        # wps stays in HBM; manual DMA
        out_specs=pl.BlockSpec((None, 1, latent), lambda b: (b, 0, 0)),
        out_shape=jax.ShapeDtypeStruct((B, 1, latent), jnp.float32),
        scratch_shapes=[
            pltpu.VMEM((Fdim, PH + latent), _BF16),            # wps VMEM landing buffer
            pltpu.SemaphoreType.DMA(()),                       # its DMA semaphore
            pltpu.VMEM((L, C1), _F32),                         # stage-2 input buffer
            pltpu.VMEM((L, K2C1), _F32),                       # stage-2 shifted-tap stack
            pltpu.VMEM((T, D), _F32),                          # concat of head outputs
            pltpu.VMEM((T, 3 * D), _F32),                      # fused QKV activations
        ],
        compiler_params=pltpu.CompilerParams(
            dimension_semantics=("parallel",)),
    )(x_stack, *ops, kp["wps"])
    return out.reshape(B, latent)


# --------------------------------------------------------------------------- #
# Logical parameters (mirror the PyTorch module; matmul weights pre-transposed
# to (in_features, out_features)).
# --------------------------------------------------------------------------- #
def init_params(key, input_dim, seq_len, latent_dim=128, transformer_seq_len=8):
    conv1_out = 64
    if input_dim > 0 and conv1_out % input_dim != 0:
        conv1_out = (conv1_out // input_dim + 1) * input_dim
    D = 128
    T = transformer_seq_len
    eps = 1e-5

    keys = iter(jax.random.split(key, 48))

    def w(shape, scale=0.05):
        return scale * jax.random.normal(next(keys), shape, dtype=jnp.float32)

    p = {}
    # depthwise-separable block 1
    p["dw1_w"] = w((5, input_dim)); p["dw1_b"] = w((1, input_dim))
    p["pw1_w"] = w((input_dim, conv1_out)); p["pw1_b"] = w((1, conv1_out))
    g1 = 1.0 + w((1, conv1_out)); b1 = w((1, conv1_out))
    p["bn1_s"] = g1 / jnp.sqrt(1.0 + eps)   # running_var=1, running_mean=0 (eval mode)
    p["bn1_t"] = b1
    # depthwise-separable block 2
    p["dw2_w"] = w((3, conv1_out)); p["dw2_b"] = w((1, conv1_out))
    p["pw2_w"] = w((conv1_out, D)); p["pw2_b"] = w((1, D))
    g2 = 1.0 + w((1, D)); b2 = w((1, D))
    p["bn2_s"] = g2 / jnp.sqrt(1.0 + eps); p["bn2_t"] = b2
    # ChannelAttention(128, reduction=8)
    r = D // 8
    p["ca_w1"] = w((D, r)); p["ca_b1"] = w((1, r))
    p["ca_w2"] = w((r, D)); p["ca_b2"] = w((1, D))
    # AdaptiveAvgPool1d(T) pooling matrix (exact PyTorch semantics)
    P = np.zeros((T, seq_len), np.float32)
    for i in range(T):
        s = (i * seq_len) // T
        e = -((-(i + 1) * seq_len) // T)
        P[i, s:e] = 1.0 / (e - s)
    p["pool"] = jnp.asarray(P)
    # PositionalEncoding (scale param = 1.0; dropout = identity)
    pe = np.zeros((T, D), np.float32)
    pos = np.arange(T, dtype=np.float32)[:, None]
    div = np.exp(np.arange(0, D, 2, dtype=np.float32) * (-math.log(10000.0) / D))
    pe[:, 0::2] = np.sin(pos * div)
    pe[:, 1::2] = np.cos(pos * div)
    p["pe"] = jnp.asarray(1.0 * pe)
    # TransformerEncoderLayer (norm_first, nhead=4, dim_feedforward=512, relu)
    p["ln1_w"] = 1.0 + w((1, D)); p["ln1_b"] = w((1, D))
    p["wq"] = w((D, D)); p["wk"] = w((D, D)); p["wv"] = w((D, D))
    p["bq"] = w((1, D)); p["bk"] = w((1, D)); p["bv"] = w((1, D))
    p["wo"] = w((D, D)); p["bo"] = w((1, D))
    p["ln2_w"] = 1.0 + w((1, D)); p["ln2_b"] = w((1, D))
    p["ff_w1"] = w((D, 512)); p["ff_b1"] = w((1, 512))
    p["ff_w2"] = w((512, D)); p["ff_b2"] = w((1, D))
    # projector + skip
    F = D * T
    p["wp1"] = w((F, 512)); p["bp1"] = w((1, 512))
    p["lnp_w"] = 1.0 + w((1, 512)); p["lnp_b"] = w((1, 512))
    p["wp2"] = w((512, latent_dim)); p["bp2"] = w((1, latent_dim))
    p["ws"] = w((F, latent_dim)); p["bs"] = w((1, latent_dim))
    return p


# --------------------------------------------------------------------------- #
# Host-side folding / packing into the kernel-ready parameter dict.
# --------------------------------------------------------------------------- #
def prepare_params(p):
    dw1, db1 = np.asarray(p["dw1_w"]), np.asarray(p["dw1_b"])
    pw1, pb1 = np.asarray(p["pw1_w"]), np.asarray(p["pw1_b"])
    s1, t1 = np.asarray(p["bn1_s"]), np.asarray(p["bn1_t"])
    dw2, db2 = np.asarray(p["dw2_w"]), np.asarray(p["dw2_b"])
    pw2, pb2 = np.asarray(p["pw2_w"]), np.asarray(p["pw2_b"])
    s2, t2 = np.asarray(p["bn2_s"]), np.asarray(p["bn2_t"])

    K1, Cin = dw1.shape
    C1 = pw1.shape[1]
    K2 = dw2.shape[0]
    D = pw2.shape[1]

    # fold depthwise * pointwise * BN-scale (eval) into flattened per-tap dense weights
    # + one bias; row block k of the flattened weight matches im2col tap k.
    w1f = (dw1[:, :, None] * pw1[None, :, :] * s1[None, :, :]).reshape(K1 * Cin, C1)
    b1f = (db1 @ pw1 + pb1) * s1 + t1                               # (1, C1)
    w2f = (dw2[:, :, None] * pw2[None, :, :] * s2[None, :, :]).reshape(K2 * C1, D)
    b2f = (db2 @ pw2 + pb2) * s2 + t2                               # (1, D)

    # fused QKV weight / bias, lane order [Q | K | V], per-head slices inside each block
    wqkv = np.concatenate([np.asarray(p["wq"]), np.asarray(p["wk"]),
                           np.asarray(p["wv"])], axis=1)            # (D, 3D)
    bqkv = np.concatenate([np.asarray(p["bq"]), np.asarray(p["bk"]),
                           np.asarray(p["bv"])], axis=1)            # (1, 3D)

    # fused projector-hidden + skip weight / bias, lane order [proj_hidden | skip]
    wps = np.concatenate([np.asarray(p["wp1"]), np.asarray(p["ws"])], axis=1)   # (T*D, 512+latent)
    bps = np.concatenate([np.asarray(p["bp1"]), np.asarray(p["bs"])], axis=1)   # (1, 512+latent)

    vec_vals = {"b1": b1f, "b2": b2f, "ca_b1": p["ca_b1"], "ca_b2": p["ca_b2"],
                "ln1_w": p["ln1_w"], "ln1_b": p["ln1_b"],
                "bqkv": bqkv, "bo": p["bo"],
                "ln2_w": p["ln2_w"], "ln2_b": p["ln2_b"],
                "ff_b1": p["ff_b1"], "ff_b2": p["ff_b2"],
                "bps": bps, "lnp_w": p["lnp_w"], "lnp_b": p["lnp_b"],
                "bp2": p["bp2"]}
    width = max(128, max(int(np.asarray(v).size) for v in vec_vals.values()))
    vecs = np.zeros((len(_VEC_ROWS), width), np.float32)
    for name in _VEC_ROWS:
        v = np.asarray(vec_vals[name]).reshape(-1)
        vecs[_VROW[name], :v.size] = v

    bf = lambda a: jnp.asarray(a, dtype=_BF16)
    return {
        "w1f": bf(w1f), "w2f": bf(w2f),
        "ca_w1": bf(p["ca_w1"]), "ca_w2": bf(p["ca_w2"]),
        "pool": bf(p["pool"]),
        "pe": jnp.asarray(p["pe"], dtype=_F32),
        "wqkv": bf(wqkv), "wo": bf(p["wo"]),
        "ff_w1": bf(p["ff_w1"]), "ff_w2": bf(p["ff_w2"]),
        "wp2": bf(p["wp2"]), "wps": bf(wps),
        "vecs": jnp.asarray(vecs, dtype=_F32),
    }


if __name__ == "__main__":
    B, L, Cin = 2, 64, 4            # (batch, seq_len, features)
    T, latent = 8, 128              # transformer_seq_len=8, latent_dim=128

    key = jax.random.PRNGKey(0)
    kx, kw = jax.random.split(key)
    x = jax.random.normal(kx, (B, L, Cin), dtype=jnp.float32)
    params = init_params(kw, input_dim=Cin, seq_len=L,
                         latent_dim=latent, transformer_seq_len=T)
    kparams = prepare_params(params)

    fwd = jax.jit(enhanced_hybrid_encoder_forward)
    z = jax.block_until_ready(fwd(x, kparams))
    assert z.shape == (B, latent), z.shape
    assert bool(jnp.all(jnp.isfinite(z)))
    print("KERNEL_OK")
</pallas_src>

<mosaic_0001>
module attributes {stable_mosaic.version = 11 : i64} {
  func.func @_fused_encoder_kernel(%arg0: i32, %arg1: memref<1x64x20xf32, #tpu.memory_space<vmem>>, %arg2: memref<20x64xbf16, #tpu.memory_space<vmem>>, %arg3: memref<192x128xbf16, #tpu.memory_space<vmem>>, %arg4: memref<128x16xbf16, #tpu.memory_space<vmem>>, %arg5: memref<16x128xbf16, #tpu.memory_space<vmem>>, %arg6: memref<8x64xbf16, #tpu.memory_space<vmem>>, %arg7: memref<8x128xf32, #tpu.memory_space<vmem>>, %arg8: memref<128x384xbf16, #tpu.memory_space<vmem>>, %arg9: memref<128x128xbf16, #tpu.memory_space<vmem>>, %arg10: memref<128x512xbf16, #tpu.memory_space<vmem>>, %arg11: memref<512x128xbf16, #tpu.memory_space<vmem>>, %arg12: memref<512x128xbf16, #tpu.memory_space<vmem>>, %arg13: memref<16x640xf32, #tpu.memory_space<vmem>>, %arg14: memref<1024x640xbf16, #tpu.memory_space<any>>, %arg15: memref<1x1x128xf32, #tpu.memory_space<vmem>>, %arg16: memref<1024x640xbf16, #tpu.memory_space<vmem>>, %arg17: memref<!tpu.dma_semaphore, #tpu.memory_space<semaphore_mem>>, %arg18: memref<64x64xf32, #tpu.memory_space<vmem>>, %arg19: memref<64x192xf32, #tpu.memory_space<vmem>>, %arg20: memref<8x128xf32, #tpu.memory_space<vmem>>, %arg21: memref<8x384xf32, #tpu.memory_space<vmem>>) attributes {dimension_semantics = [#tpu.dimension_semantics<parallel>], iteration_bounds = array<i64: 2>, scalar_prefetch = 0 : i64, scratch_operands = 6 : i64, tpu.core_type = #tpu.core_type<tc>, window_params = [{transform_indices = @transform_0, window_bounds = array<i64: 1, 64, 20>}, {pipeline_mode = #tpu.pipeline_mode<synchronous>, transform_indices = @transform_1, window_bounds = array<i64: 20, 64>}, {pipeline_mode = #tpu.pipeline_mode<synchronous>, transform_indices = @transform_2, window_bounds = array<i64: 192, 128>}, {pipeline_mode = #tpu.pipeline_mode<synchronous>, transform_indices = @transform_3, window_bounds = array<i64: 128, 16>}, {pipeline_mode = #tpu.pipeline_mode<synchronous>, transform_indices = @transform_4, window_bounds = array<i64: 16, 128>}, {pipeline_mode = #tpu.pipeline_mode<synchronous>, transform_indices = @transform_5, window_bounds = array<i64: 8, 64>}, {pipeline_mode = #tpu.pipeline_mode<synchronous>, transform_indices = @transform_6, window_bounds = array<i64: 8, 128>}, {pipeline_mode = #tpu.pipeline_mode<synchronous>, transform_indices = @transform_7, window_bounds = array<i64: 128, 384>}, {pipeline_mode = #tpu.pipeline_mode<synchronous>, transform_indices = @transform_8, window_bounds = array<i64: 128, 128>}, {pipeline_mode = #tpu.pipeline_mode<synchronous>, transform_indices = @transform_9, window_bounds = array<i64: 128, 512>}, {pipeline_mode = #tpu.pipeline_mode<synchronous>, transform_indices = @transform_10, window_bounds = array<i64: 512, 128>}, {pipeline_mode = #tpu.pipeline_mode<synchronous>, transform_indices = @transform_11, window_bounds = array<i64: 512, 128>}, {pipeline_mode = #tpu.pipeline_mode<synchronous>, transform_indices = @transform_12, window_bounds = array<i64: 16, 640>}, {}, {transform_indices = @transform_14, window_bounds = array<i64: 1, 1, 128>}]} {
    tpu.enqueue_dma source(%arg14 : memref<1024x640xbf16, #tpu.memory_space<any>>) target(%arg16 : memref<1024x640xbf16, #tpu.memory_space<vmem>>) target_semaphore(%arg17 : memref<!tpu.dma_semaphore, #tpu.memory_space<semaphore_mem>>)
    %c0 = arith.constant 0 : index
    %c0_0 = arith.constant 0 : index
    %c0_1 = arith.constant 0 : index
    %0 = vector.load %arg1[%c0, %c0_0, %c0_1] : memref<1x64x20xf32, #tpu.memory_space<vmem>>, vector<1x64x20xf32>
    %1 = vector.shape_cast %0 : vector<1x64x20xf32> to vector<64x20xf32>
    %2 = arith.truncf %1 : vector<64x20xf32> to vector<64x20xbf16>
    %c0_2 = arith.constant 0 : index
    %c0_3 = arith.constant 0 : index
    %3 = vector.load %arg2[%c0_2, %c0_3] : memref<20x64xbf16, #tpu.memory_space<vmem>>, vector<20x64xbf16>
    %cst = arith.constant dense<0.000000e+00> : vector<64x64xf32>
    %4 = tpu.matmul %2, %3, %cst {dimension_numbers = #tpu.dot_dimension_numbers<[1], [0], [0], [1], [0, 0, 1, 1], [], []>} : vector<64x20xbf16>, vector<20x64xbf16>, vector<64x64xf32> -> vector<64x64xf32>
    %c0_4 = arith.constant 0 : index
    %c0_5 = arith.constant 0 : index
    %5 = vector.load %arg13[%c0_4, %c0_5] : memref<16x640xf32, #tpu.memory_space<vmem>>, vector<1x64xf32>
    %6 = vector.broadcast %5 : vector<1x64xf32> to vector<64x64xf32>
    %7 = arith.addf %4, %6 : vector<64x64xf32>
    %cst_6 = arith.constant 5.000000e-01 : f32
    %8 = vector.broadcast %cst_6 : f32 to vector<64x64xf32>
    %9 = arith.mulf %8, %7 : vector<64x64xf32>
    %cst_7 = arith.constant 4.471500e-02 : f32
    %10 = vector.broadcast %cst_7 : f32 to vector<64x64xf32>
    %11 = arith.mulf %10, %7 : vector<64x64xf32>
    %12 = arith.mulf %11, %7 : vector<64x64xf32>
    %13 = arith.mulf %12, %7 : vector<64x64xf32>
    %14 = arith.addf %7, %13 : vector<64x64xf32>
    %cst_8 = arith.constant 0.797884583 : f32
    %15 = vector.broadcast %cst_8 : f32 to vector<64x64xf32>
    %16 = arith.mulf %15, %14 : vector<64x64xf32>
    %17 = math.tanh %16 : vector<64x64xf32>
    %cst_9 = arith.constant 1.000000e+00 : f32
    %18 = vector.broadcast %cst_9 : f32 to vector<64x64xf32>
    %19 = arith.addf %18, %17 : vector<64x64xf32>
    %20 = arith.mulf %9, %19 : vector<64x64xf32>
    %c0_10 = arith.constant 0 : index
    %c0_11 = arith.constant 0 : index
    %21 = vector.load %arg18[%c0_10, %c0_11] : memref<64x64xf32, #tpu.memory_space<vmem>>, vector<64x64xf32>
    tpu.vector_store %arg18[%c0_10, %c0_11], %20 {strides = array<i32>} : memref<64x64xf32, #tpu.memory_space<vmem>>, vector<64x64xf32>,
    %c0_12 = arith.constant 0 : index
    %c0_13 = arith.constant 0 : index
    %22 = vector.load %arg18[%c0_12, %c0_13] : memref<64x64xf32, #tpu.memory_space<vmem>>, vector<63x64xf32>
    %c1 = arith.constant 1 : index
    %c0_14 = arith.constant 0 : index
    %23 = vector.load %arg19[%c1, %c0_14] : memref<64x192xf32, #tpu.memory_space<vmem>>, vector<63x64xf32>
    tpu.vector_store %arg19[%c1, %c0_14], %22 {strides = array<i32>} : memref<64x192xf32, #tpu.memory_space<vmem>>, vector<63x64xf32>,
    %cst_15 = arith.constant 0.000000e+00 : f32
    %24 = vector.broadcast %cst_15 : f32 to vector<1x64xf32>
    %c0_16 = arith.constant 0 : index
    %c0_17 = arith.constant 0 : index
    %25 = vector.load %arg19[%c0_16, %c0_17] : memref<64x192xf32, #tpu.memory_space<vmem>>, vector<1x64xf32>
    tpu.vector_store %arg19[%c0_16, %c0_17], %24 {strides = array<i32>} : memref<64x192xf32, #tpu.memory_space<vmem>>, vector<1x64xf32>,
    %c0_18 = arith.constant 0 : index
    %c64 = arith.constant 64 : index
    %26 = vector.load %arg19[%c0_18, %c64] : memref<64x192xf32, #tpu.memory_space<vmem>>, vector<64x64xf32>
    tpu.vector_store %arg19[%c0_18, %c64], %20 {strides = array<i32>} : memref<64x192xf32, #tpu.memory_space<vmem>>, vector<64x64xf32>,
    %c1_19 = arith.constant 1 : index
    %c0_20 = arith.constant 0 : index
    %27 = vector.load %arg18[%c1_19, %c0_20] : memref<64x64xf32, #tpu.memory_space<vmem>>, vector<63x64xf32>
    %c0_21 = arith.constant 0 : index
    %c128 = arith.constant 128 : index
    %28 = vector.load %arg19[%c0_21, %c128] : memref<64x192xf32, #tpu.memory_space<vmem>>, vector<63x64xf32>
    tpu.vector_store %arg19[%c0_21, %c128], %27 {strides = array<i32>} : memref<64x192xf32, #tpu.memory_space<vmem>>, vector<63x64xf32>,
    %cst_22 = arith.constant 0.000000e+00 : f32
    %29 = vector.broadcast %cst_22 : f32 to vector<1x64xf32>
    %c63 = arith.constant 63 : index
    %c128_23 = arith.constant 128 : index
    %30 = vector.load %arg19[%c63, %c128_23] : memref<64x192xf32, #tpu.memory_space<vmem>>, vector<1x64xf32>
    tpu.vector_store %arg19[%c63, %c128_23], %29 {strides = array<i32>} : memref<64x192xf32, #tpu.memory_space<vmem>>, vector<1x64xf32>,
    %c0_24 = arith.constant 0 : index
    %c0_25 = arith.constant 0 : index
    %31 = vector.load %arg19[%c0_24, %c0_25] : memref<64x192xf32, #tpu.memory_space<vmem>>, vector<64x192xf32>
    %32 = arith.truncf %31 : vector<64x192xf32> to vector<64x192xbf16>
    %c0_26 = arith.constant 0 : index
    %c0_27 = arith.constant 0 : index
    %33 = vector.load %arg3[%c0_26, %c0_27] : memref<192x128xbf16, #tpu.memory_space<vmem>>, vector<192x128xbf16>
    %cst_28 = arith.constant dense<0.000000e+00> : vector<64x128xf32>
    %34 = tpu.matmul %32, %33, %cst_28 {dimension_numbers = #tpu.dot_dimension_numbers<[1], [0], [0], [1], [0, 0, 1, 1], [], []>} : vector<64x192xbf16>, vector<192x128xbf16>, vector<64x128xf32> -> vector<64x128xf32>
    %c1_29 = arith.constant 1 : index
    %c0_30 = arith.constant 0 : index
    %35 = vector.load %arg13[%c1_29, %c0_30] : memref<16x640xf32, #tpu.memory_space<vmem>>, vector<1x128xf32>
    %36 = vector.broadcast %35 : vector<1x128xf32> to vector<64x128xf32>
    %37 = arith.addf %34, %36 : vector<64x128xf32>
    %cst_31 = arith.constant 5.000000e-01 : f32
    %38 = vector.broadcast %cst_31 : f32 to vector<64x128xf32>
    %39 = arith.mulf %38, %37 : vector<64x128xf32>
    %cst_32 = arith.constant 4.471500e-02 : f32
    %40 = vector.broadcast %cst_32 : f32 to vector<64x128xf32>
    %41 = arith.mulf %40, %37 : vector<64x128xf32>
    %42 = arith.mulf %41, %37 : vector<64x128xf32>
    %43 = arith.mulf %42, %37 : vector<64x128xf32>
    %44 = arith.addf %37, %43 : vector<64x128xf32>
    %cst_33 = arith.constant 0.797884583 : f32
    %45 = vector.broadcast %cst_33 : f32 to vector<64x128xf32>
    %46 = arith.mulf %45, %44 : vector<64x128xf32>
    %47 = math.tanh %46 : vector<64x128xf32>
    %cst_34 = arith.constant 1.000000e+00 : f32
    %48 = vector.broadcast %cst_34 : f32 to vector<64x128xf32>
    %49 = arith.addf %48, %47 : vector<64x128xf32>
    %50 = arith.mulf %39, %49 : vector<64x128xf32>
    %cst_35 = arith.constant dense<0.000000e+00> : vector<128xf32>
    %51 = vector.multi_reduction <add>, %50, %cst_35 [0] : vector<64x128xf32> to vector<128xf32>
    %52 = vector.shape_cast %51 : vector<128xf32> to vector<1x128xf32>
    %cst_36 = arith.constant 6.400000e+01 : f32
    %53 = vector.broadcast %cst_36 : f32 to vector<1x128xf32>
    %54 = arith.divf %52, %53 : vector<1x128xf32>
    %cst_37 = arith.constant dense<0xFF800000> : vector<128xf32>
    %55 = vector.multi_reduction <maximumf>, %50, %cst_37 [0] : vector<64x128xf32> to vector<128xf32>
    %56 = vector.shape_cast %55 : vector<128xf32> to vector<1x128xf32>
    %57 = tpu.iota {dimensions = array<i32: 0>} : vector<2x128xi32>
    %c0_i32 = arith.constant 0 : i32
    %58 = vector.broadcast %c0_i32 : i32 to vector<2x128xi32>
    %59 = arith.cmpi eq, %57, %58 : vector<2x128xi32>
    %60 = vector.shape_cast %54 : vector<1x128xf32> to vector<1x128xf32>
    %61 = vector.broadcast %60 : vector<1x128xf32> to vector<2x128xf32>
    %62 = vector.shape_cast %56 : vector<1x128xf32> to vector<1x128xf32>
    %63 = vector.broadcast %62 : vector<1x128xf32> to vector<2x128xf32>
    %64 = arith.select %59, %61, %63 : vector<2x128xi1>, vector<2x128xf32>
    %65 = arith.truncf %64 : vector<2x128xf32> to vector<2x128xbf16>
    %c0_38 = arith.constant 0 : index
    %c0_39 = arith.constant 0 : index
    %66 = vector.load %arg4[%c0_38, %c0_39] : memref<128x16xbf16, #tpu.memory_space<vmem>>, vector<128x16xbf16>
    %cst_40 = arith.constant dense<0.000000e+00> : vector<2x16xf32>
    %67 = tpu.matmul %65, %66, %cst_40 {dimension_numbers = #tpu.dot_dimension_numbers<[1], [0], [0], [1], [0, 0, 1, 1], [], []>} : vector<2x128xbf16>, vector<128x16xbf16>, vector<2x16xf32> -> vector<2x16xf32>
    %c2 = arith.constant 2 : index
    %c0_41 = arith.constant 0 : index
    %68 = vector.load %arg13[%c2, %c0_41] : memref<16x640xf32, #tpu.memory_space<vmem>>, vector<1x16xf32>
    %69 = vector.broadcast %68 : vector<1x16xf32> to vector<2x16xf32>
    %70 = arith.addf %67, %69 : vector<2x16xf32>
    %cst_42 = arith.constant 0.000000e+00 : f32
    %71 = vector.broadcast %cst_42 : f32 to vector<2x16xf32>
    %72 = arith.maximumf %70, %71 : vector<2x16xf32>
    %73 = arith.truncf %72 : vector<2x16xf32> to vector<2x16xbf16>
    %c0_43 = arith.constant 0 : index
    %c0_44 = arith.constant 0 : index
    %74 = vector.load %arg5[%c0_43, %c0_44] : memref<16x128xbf16, #tpu.memory_space<vmem>>, vector<16x128xbf16>
    %cst_45 = arith.constant dense<0.000000e+00> : vector<2x128xf32>
    %75 = tpu.matmul %73, %74, %cst_45 {dimension_numbers = #tpu.dot_dimension_numbers<[1], [0], [0], [1], [0, 0, 1, 1], [], []>} : vector<2x16xbf16>, vector<16x128xbf16>, vector<2x128xf32> -> vector<2x128xf32>
    %c3 = arith.constant 3 : index
    %c0_46 = arith.constant 0 : index
    %76 = vector.load %arg13[%c3, %c0_46] : memref<16x640xf32, #tpu.memory_space<vmem>>, vector<1x128xf32>
    %77 = vector.broadcast %76 : vector<1x128xf32> to vector<2x128xf32>
    %78 = arith.addf %75, %77 : vector<2x128xf32>
    %79 = arith.negf %78 : vector<2x128xf32>
    %80 = math.exp %79 : vector<2x128xf32>
    %cst_47 = arith.constant 1.000000e+00 : f32
    %81 = vector.broadcast %cst_47 : f32 to vector<2x128xf32>
    %82 = arith.addf %81, %80 : vector<2x128xf32>
    %83 = arith.divf %81, %82 : vector<2x128xf32>
    %84 = vector.extract_strided_slice %83 {offsets = [0, 0], sizes = [1, 128], strides = [1, 1]} : vector<2x128xf32> to vector<1x128xf32>
    %85 = vector.extract_strided_slice %83 {offsets = [1, 0], sizes = [1, 128], strides = [1, 1]} : vector<2x128xf32> to vector<1x128xf32>
    %86 = arith.addf %84, %85 : vector<1x128xf32>
    %87 = arith.negf %86 : vector<1x128xf32>
    %88 = math.exp %87 : vector<1x128xf32>
    %cst_48 = arith.constant 1.000000e+00 : f32
    %89 = vector.broadcast %cst_48 : f32 to vector<1x128xf32>
    %90 = arith.addf %89, %88 : vector<1x128xf32>
    %91 = arith.divf %89, %90 : vector<1x128xf32>
    %92 = vector.broadcast %91 : vector<1x128xf32> to vector<64x128xf32>
    %93 = arith.mulf %50, %92 : vector<64x128xf32>
    %c0_49 = arith.constant 0 : index
    %c0_50 = arith.constant 0 : index
    %94 = vector.load %arg6[%c0_49, %c0_50] : memref<8x64xbf16, #tpu.memory_space<vmem>>, vector<8x64xbf16>
    %95 = arith.truncf %93 : vector<64x128xf32> to vector<64x128xbf16>
    %cst_51 = arith.constant dense<0.000000e+00> : vector<8x128xf32>
    %96 = tpu.matmul %94, %95, %cst_51 {dimension_numbers = #tpu.dot_dimension_numbers<[1], [0], [0], [1], [0, 0, 1, 1], [], []>} : vector<8x64xbf16>, vector<64x128xbf16>, vector<8x128xf32> -> vector<8x128xf32>
    %c0_52 = arith.constant 0 : index
    %c0_53 = arith.constant 0 : index
    %97 = vector.load %arg7[%c0_52, %c0_53] : memref<8x128xf32, #tpu.memory_space<vmem>>, vector<8x128xf32>
    %98 = arith.addf %96, %97 : vector<8x128xf32>
    %c4 = arith.constant 4 : index
    %c0_54 = arith.constant 0 : index
    %99 = vector.load %arg13[%c4, %c0_54] : memref<16x640xf32, #tpu.memory_space<vmem>>, vector<1x128xf32>
    %c5 = arith.constant 5 : index
    %c0_55 = arith.constant 0 : index
    %100 = vector.load %arg13[%c5, %c0_55] : memref<16x640xf32, #tpu.memory_space<vmem>>, vector<1x128xf32>
    %cst_56 = arith.constant dense<0.000000e+00> : vector<8xf32>
    %101 = vector.multi_reduction <add>, %98, %cst_56 [1] : vector<8x128xf32> to vector<8xf32>
    %102 = vector.shape_cast %101 : vector<8xf32> to vector<8x1xf32>
    %cst_57 = arith.constant 1.280000e+02 : f32
    %103 = vector.broadcast %cst_57 : f32 to vector<8x1xf32>
    %104 = arith.divf %102, %103 : vector<8x1xf32>
    %105 = vector.broadcast %104 : vector<8x1xf32> to vector<8x128xf32>
    %106 = arith.subf %98, %105 : vector<8x128xf32>
    %107 = arith.mulf %106, %106 : vector<8x128xf32>
    %cst_58 = arith.constant dense<0.000000e+00> : vector<8xf32>
    %108 = vector.multi_reduction <add>, %107, %cst_58 [1] : vector<8x128xf32> to vector<8xf32>
    %109 = vector.shape_cast %108 : vector<8xf32> to vector<8x1xf32>
    %cst_59 = arith.constant 1.280000e+02 : f32
    %110 = vector.broadcast %cst_59 : f32 to vector<8x1xf32>
    %111 = arith.divf %109, %110 : vector<8x1xf32>
    %112 = vector.broadcast %104 : vector<8x1xf32> to vector<8x128xf32>
    %113 = arith.subf %98, %112 : vector<8x128xf32>
    %cst_60 = arith.constant 9.99999974E-6 : f32
    %114 = vector.broadcast %cst_60 : f32 to vector<8x1xf32>
    %115 = arith.addf %111, %114 : vector<8x1xf32>
    %116 = math.rsqrt %115 : vector<8x1xf32>
    %117 = vector.broadcast %116 : vector<8x1xf32> to vector<8x128xf32>
    %118 = arith.mulf %113, %117 : vector<8x128xf32>
    %119 = vector.broadcast %99 : vector<1x128xf32> to vector<8x128xf32>
    %120 = arith.mulf %118, %119 : vector<8x128xf32>
    %121 = vector.broadcast %100 : vector<1x128xf32> to vector<8x128xf32>
    %122 = arith.addf %120, %121 : vector<8x128xf32>
    %123 = arith.truncf %122 : vector<8x128xf32> to vector<8x128xbf16>
    %c0_61 = arith.constant 0 : index
    %c0_62 = arith.constant 0 : index
    %124 = vector.load %arg8[%c0_61, %c0_62] : memref<128x384xbf16, #tpu.memory_space<vmem>>, vector<128x384xbf16>
    %cst_63 = arith.constant dense<0.000000e+00> : vector<8x384xf32>
    %125 = tpu.matmul %123, %124, %cst_63 {dimension_numbers = #tpu.dot_dimension_numbers<[1], [0], [0], [1], [0, 0, 1, 1], [], []>} : vector<8x128xbf16>, vector<128x384xbf16>, vector<8x384xf32> -> vector<8x384xf32>
    %c6 = arith.constant 6 : index
    %c0_64 = arith.constant 0 : index
    %126 = vector.load %arg13[%c6, %c0_64] : memref<16x640xf32, #tpu.memory_space<vmem>>, vector<1x384xf32>
    %127 = vector.broadcast %126 : vector<1x384xf32> to vector<8x384xf32>
    %128 = arith.addf %125, %127 : vector<8x384xf32>
    %c0_65 = arith.constant 0 : index
    %c0_66 = arith.constant 0 : index
    %129 = vector.load %arg21[%c0_65, %c0_66] : memref<8x384xf32, #tpu.memory_space<vmem>>, vector<8x384xf32>
    tpu.vector_store %arg21[%c0_65, %c0_66], %128 {strides = array<i32>} : memref<8x384xf32, #tpu.memory_space<vmem>>, vector<8x384xf32>,
    %c0_67 = arith.constant 0 : index
    %c0_68 = arith.constant 0 : index
    %130 = vector.load %arg21[%c0_67, %c0_68] : memref<8x384xf32, #tpu.memory_space<vmem>>, vector<8x32xf32>
    %c0_69 = arith.constant 0 : index
    %c128_70 = arith.constant 128 : index
    %131 = vector.load %arg21[%c0_69, %c128_70] : memref<8x384xf32, #tpu.memory_space<vmem>>, vector<8x32xf32>
    %c0_71 = arith.constant 0 : index
    %c256 = arith.constant 256 : index
    %132 = vector.load %arg21[%c0_71, %c256] : memref<8x384xf32, #tpu.memory_space<vmem>>, vector<8x32xf32>
    %cst_72 = arith.constant 0.176776692 : f32
    %133 = vector.broadcast %cst_72 : f32 to vector<8x32xf32>
    %134 = arith.mulf %130, %133 : vector<8x32xf32>
    %cst_73 = arith.constant dense<0.000000e+00> : vector<8x8xf32>
    %135 = tpu.matmul %134, %131, %cst_73 {dimension_numbers = #tpu.dot_dimension_numbers<[1], [1], [0], [0], [0, 0, 1, 0], [], []>} : vector<8x32xf32>, vector<8x32xf32>, vector<8x8xf32> -> vector<8x8xf32>
    %cst_74 = arith.constant dense<0xFF800000> : vector<8xf32>
    %136 = vector.multi_reduction <maximumf>, %135, %cst_74 [1] : vector<8x8xf32> to vector<8xf32>
    %137 = vector.shape_cast %136 : vector<8xf32> to vector<8x1xf32>
    %138 = vector.broadcast %137 : vector<8x1xf32> to vector<8x8xf32>
    %139 = arith.subf %135, %138 : vector<8x8xf32>
    %140 = math.exp %139 : vector<8x8xf32>
    %cst_75 = arith.constant dense<0.000000e+00> : vector<8xf32>
    %141 = vector.multi_reduction <add>, %140, %cst_75 [1] : vector<8x8xf32> to vector<8xf32>
    %142 = vector.shape_cast %141 : vector<8xf32> to vector<8x1xf32>
    %143 = vector.broadcast %142 : vector<8x1xf32> to vector<8x8xf32>
    %144 = arith.divf %140, %143 : vector<8x8xf32>
    %145 = arith.truncf %144 : vector<8x8xf32> to vector<8x8xbf16>
    %146 = arith.truncf %132 : vector<8x32xf32> to vector<8x32xbf16>
    %cst_76 = arith.constant dense<0.000000e+00> : vector<8x32xf32>
    %147 = tpu.matmul %145, %146, %cst_76 {dimension_numbers = #tpu.dot_dimension_numbers<[1], [0], [0], [1], [0, 0, 1, 1], [], []>} : vector<8x8xbf16>, vector<8x32xbf16>, vector<8x32xf32> -> vector<8x32xf32>
    %c0_77 = arith.constant 0 : index
    %c0_78 = arith.constant 0 : index
    %148 = vector.load %arg20[%c0_77, %c0_78] : memref<8x128xf32, #tpu.memory_space<vmem>>, vector<8x32xf32>
    tpu.vector_store %arg20[%c0_77, %c0_78], %147 {strides = array<i32>} : memref<8x128xf32, #tpu.memory_space<vmem>>, vector<8x32xf32>,
    %c0_79 = arith.constant 0 : index
    %c32 = arith.constant 32 : index
    %149 = vector.load %arg21[%c0_79, %c32] : memref<8x384xf32, #tpu.memory_space<vmem>>, vector<8x32xf32>
    %c0_80 = arith.constant 0 : index
    %c160 = arith.constant 160 : index
    %150 = vector.load %arg21[%c0_80, %c160] : memref<8x384xf32, #tpu.memory_space<vmem>>, vector<8x32xf32>
    %c0_81 = arith.constant 0 : index
    %c288 = arith.constant 288 : index
    %151 = vector.load %arg21[%c0_81, %c288] : memref<8x384xf32, #tpu.memory_space<vmem>>, vector<8x32xf32>
    %cst_82 = arith.constant 0.176776692 : f32
    %152 = vector.broadcast %cst_82 : f32 to vector<8x32xf32>
    %153 = arith.mulf %149, %152 : vector<8x32xf32>
    %cst_83 = arith.constant dense<0.000000e+00> : vector<8x8xf32>
    %154 = tpu.matmul %153, %150, %cst_83 {dimension_numbers = #tpu.dot_dimension_numbers<[1], [1], [0], [0], [0, 0, 1, 0], [], []>} : vector<8x32xf32>, vector<8x32xf32>, vector<8x8xf32> -> vector<8x8xf32>
    %cst_84 = arith.constant dense<0xFF800000> : vector<8xf32>
    %155 = vector.multi_reduction <maximumf>, %154, %cst_84 [1] : vector<8x8xf32> to vector<8xf32>
    %156 = vector.shape_cast %155 : vector<8xf32> to vector<8x1xf32>
    %157 = vector.broadcast %156 : vector<8x1xf32> to vector<8x8xf32>
    %158 = arith.subf %154, %157 : vector<8x8xf32>
    %159 = math.exp %158 : vector<8x8xf32>
    %cst_85 = arith.constant dense<0.000000e+00> : vector<8xf32>
    %160 = vector.multi_reduction <add>, %159, %cst_85 [1] : vector<8x8xf32> to vector<8xf32>
    %161 = vector.shape_cast %160 : vector<8xf32> to vector<8x1xf32>
    %162 = vector.broadcast %161 : vector<8x1xf32> to vector<8x8xf32>
    %163 = arith.divf %159, %162 : vector<8x8xf32>
    %164 = arith.truncf %163 : vector<8x8xf32> to vector<8x8xbf16>
    %165 = arith.truncf %151 : vector<8x32xf32> to vector<8x32xbf16>
    %cst_86 = arith.constant dense<0.000000e+00> : vector<8x32xf32>
    %166 = tpu.matmul %164, %165, %cst_86 {dimension_numbers = #tpu.dot_dimension_numbers<[1], [0], [0], [1], [0, 0, 1, 1], [], []>} : vector<8x8xbf16>, vector<8x32xbf16>, vector<8x32xf32> -> vector<8x32xf32>
    %c0_87 = arith.constant 0 : index
    %c32_88 = arith.constant 32 : index
    %167 = vector.load %arg20[%c0_87, %c32_88] : memref<8x128xf32, #tpu.memory_space<vmem>>, vector<8x32xf32>
    tpu.vector_store %arg20[%c0_87, %c32_88], %166 {strides = array<i32>} : memref<8x128xf32, #tpu.memory_space<vmem>>, vector<8x32xf32>,
    %c0_89 = arith.constant 0 : index
    %c64_90 = arith.constant 64 : index
    %168 = vector.load %arg21[%c0_89, %c64_90] : memref<8x384xf32, #tpu.memory_space<vmem>>, vector<8x32xf32>
    %c0_91 = arith.constant 0 : index
    %c192 = arith.constant 192 : index
    %169 = vector.load %arg21[%c0_91, %c192] : memref<8x384xf32, #tpu.memory_space<vmem>>, vector<8x32xf32>
    %c0_92 = arith.constant 0 : index
    %c320 = arith.constant 320 : index
    %170 = vector.load %arg21[%c0_92, %c320] : memref<8x384xf32, #tpu.memory_space<vmem>>, vector<8x32xf32>
    %cst_93 = arith.constant 0.176776692 : f32
    %171 = vector.broadcast %cst_93 : f32 to vector<8x32xf32>
    %172 = arith.mulf %168, %171 : vector<8x32xf32>
    %cst_94 = arith.constant dense<0.000000e+00> : vector<8x8xf32>
    %173 = tpu.matmul %172, %169, %cst_94 {dimension_numbers = #tpu.dot_dimension_numbers<[1], [1], [0], [0], [0, 0, 1, 0], [], []>} : vector<8x32xf32>, vector<8x32xf32>, vector<8x8xf32> -> vector<8x8xf32>
    %cst_95 = arith.constant dense<0xFF800000> : vector<8xf32>
    %174 = vector.multi_reduction <maximumf>, %173, %cst_95 [1] : vector<8x8xf32> to vector<8xf32>
    %175 = vector.shape_cast %174 : vector<8xf32> to vector<8x1xf32>
    %176 = vector.broadcast %175 : vector<8x1xf32> to vector<8x8xf32>
    %177 = arith.subf %173, %176 : vector<8x8xf32>
    %178 = math.exp %177 : vector<8x8xf32>
    %cst_96 = arith.constant dense<0.000000e+00> : vector<8xf32>
    %179 = vector.multi_reduction <add>, %178, %cst_96 [1] : vector<8x8xf32> to vector<8xf32>
    %180 = vector.shape_cast %179 : vector<8xf32> to vector<8x1xf32>
    %181 = vector.broadcast %180 : vector<8x1xf32> to vector<8x8xf32>
    %182 = arith.divf %178, %181 : vector<8x8xf32>
    %183 = arith.truncf %182 : vector<8x8xf32> to vector<8x8xbf16>
    %184 = arith.truncf %170 : vector<8x32xf32> to vector<8x32xbf16>
    %cst_97 = arith.constant dense<0.000000e+00> : vector<8x32xf32>
    %185 = tpu.matmul %183, %184, %cst_97 {dimension_numbers = #tpu.dot_dimension_numbers<[1], [0], [0], [1], [0, 0, 1, 1], [], []>} : vector<8x8xbf16>, vector<8x32xbf16>, vector<8x32xf32> -> vector<8x32xf32>
    %c0_98 = arith.constant 0 : index
    %c64_99 = arith.constant 64 : index
    %186 = vector.load %arg20[%c0_98, %c64_99] : memref<8x128xf32, #tpu.memory_space<vmem>>, vector<8x32xf32>
    tpu.vector_store %arg20[%c0_98, %c64_99], %185 {strides = array<i32>} : memref<8x128xf32, #tpu.memory_space<vmem>>, vector<8x32xf32>,
    %c0_100 = arith.constant 0 : index
    %c96 = arith.constant 96 : index
    %187 = vector.load %arg21[%c0_100, %c96] : memref<8x384xf32, #tpu.memory_space<vmem>>, vector<8x32xf32>
    %c0_101 = arith.constant 0 : index
    %c224 = arith.constant 224 : index
    %188 = vector.load %arg21[%c0_101, %c224] : memref<8x384xf32, #tpu.memory_space<vmem>>, vector<8x32xf32>
    %c0_102 = arith.constant 0 : index
    %c352 = arith.constant 352 : index
    %189 = vector.load %arg21[%c0_102, %c352] : memref<8x384xf32, #tpu.memory_space<vmem>>, vector<8x32xf32>
    %cst_103 = arith.constant 0.176776692 : f32
    %190 = vector.broadcast %cst_103 : f32 to vector<8x32xf32>
    %191 = arith.mulf %187, %190 : vector<8x32xf32>
    %cst_104 = arith.constant dense<0.000000e+00> : vector<8x8xf32>
    %192 = tpu.matmul %191, %188, %cst_104 {dimension_numbers = #tpu.dot_dimension_numbers<[1], [1], [0], [0], [0, 0, 1, 0], [], []>} : vector<8x32xf32>, vector<8x32xf32>, vector<8x8xf32> -> vector<8x8xf32>
    %cst_105 = arith.constant dense<0xFF800000> : vector<8xf32>
    %193 = vector.multi_reduction <maximumf>, %192, %cst_105 [1] : vector<8x8xf32> to vector<8xf32>
    %194 = vector.shape_cast %193 : vector<8xf32> to vector<8x1xf32>
    %195 = vector.broadcast %194 : vector<8x1xf32> to vector<8x8xf32>
    %196 = arith.subf %192, %195 : vector<8x8xf32>
    %197 = math.exp %196 : vector<8x8xf32>
    %cst_106 = arith.constant dense<0.000000e+00> : vector<8xf32>
    %198 = vector.multi_reduction <add>, %197, %cst_106 [1] : vector<8x8xf32> to vector<8xf32>
    %199 = vector.shape_cast %198 : vector<8xf32> to vector<8x1xf32>
    %200 = vector.broadcast %199 : vector<8x1xf32> to vector<8x8xf32>
    %201 = arith.divf %197, %200 : vector<8x8xf32>
    %202 = arith.truncf %201 : vector<8x8xf32> to vector<8x8xbf16>
    %203 = arith.truncf %189 : vector<8x32xf32> to vector<8x32xbf16>
    %cst_107 = arith.constant dense<0.000000e+00> : vector<8x32xf32>
    %204 = tpu.matmul %202, %203, %cst_107 {dimension_numbers = #tpu.dot_dimension_numbers<[1], [0], [0], [1], [0, 0, 1, 1], [], []>} : vector<8x8xbf16>, vector<8x32xbf16>, vector<8x32xf32> -> vector<8x32xf32>
    %c0_108 = arith.constant 0 : index
    %c96_109 = arith.constant 96 : index
    %205 = vector.load %arg20[%c0_108, %c96_109] : memref<8x128xf32, #tpu.memory_space<vmem>>, vector<8x32xf32>
    tpu.vector_store %arg20[%c0_108, %c96_109], %204 {strides = array<i32>} : memref<8x128xf32, #tpu.memory_space<vmem>>, vector<8x32xf32>,
    %c0_110 = arith.constant 0 : index
    %c0_111 = arith.constant 0 : index
    %206 = vector.load %arg20[%c0_110, %c0_111] : memref<8x128xf32, #tpu.memory_space<vmem>>, vector<8x128xf32>
    %207 = arith.truncf %206 : vector<8x128xf32> to vector<8x128xbf16>
    %c0_112 = arith.constant 0 : index
    %c0_113 = arith.constant 0 : index
    %208 = vector.load %arg9[%c0_112, %c0_113] : memref<128x128xbf16, #tpu.memory_space<vmem>>, vector<128x128xbf16>
    %cst_114 = arith.constant dense<0.000000e+00> : vector<8x128xf32>
    %209 = tpu.matmul %207, %208, %cst_114 {dimension_numbers = #tpu.dot_dimension_numbers<[1], [0], [0], [1], [0, 0, 1, 1], [], []>} : vector<8x128xbf16>, vector<128x128xbf16>, vector<8x128xf32> -> vector<8x128xf32>
    %210 = arith.addf %98, %209 : vector<8x128xf32>
    %c7 = arith.constant 7 : index
    %c0_115 = arith.constant 0 : index
    %211 = vector.load %arg13[%c7, %c0_115] : memref<16x640xf32, #tpu.memory_space<vmem>>, vector<1x128xf32>
    %212 = vector.broadcast %211 : vector<1x128xf32> to vector<8x128xf32>
    %213 = arith.addf %210, %212 : vector<8x128xf32>
    %c8 = arith.constant 8 : index
    %c0_116 = arith.constant 0 : index
    %214 = vector.load %arg13[%c8, %c0_116] : memref<16x640xf32, #tpu.memory_space<vmem>>, vector<1x128xf32>
    %c9 = arith.constant 9 : index
    %c0_117 = arith.constant 0 : index
    %215 = vector.load %arg13[%c9, %c0_117] : memref<16x640xf32, #tpu.memory_space<vmem>>, vector<1x128xf32>
    %cst_118 = arith.constant dense<0.000000e+00> : vector<8xf32>
    %216 = vector.multi_reduction <add>, %213, %cst_118 [1] : vector<8x128xf32> to vector<8xf32>
    %217 = vector.shape_cast %216 : vector<8xf32> to vector<8x1xf32>
    %cst_119 = arith.constant 1.280000e+02 : f32
    %218 = vector.broadcast %cst_119 : f32 to vector<8x1xf32>
    %219 = arith.divf %217, %218 : vector<8x1xf32>
    %220 = vector.broadcast %219 : vector<8x1xf32> to vector<8x128xf32>
    %221 = arith.subf %213, %220 : vector<8x128xf32>
    %222 = arith.mulf %221, %221 : vector<8x128xf32>
    %cst_120 = arith.constant dense<0.000000e+00> : vector<8xf32>
    %223 = vector.multi_reduction <add>, %222, %cst_120 [1] : vector<8x128xf32> to vector<8xf32>
    %224 = vector.shape_cast %223 : vector<8xf32> to vector<8x1xf32>
    %cst_121 = arith.constant 1.280000e+02 : f32
    %225 = vector.broadcast %cst_121 : f32 to vector<8x1xf32>
    %226 = arith.divf %224, %225 : vector<8x1xf32>
    %227 = vector.broadcast %219 : vector<8x1xf32> to vector<8x128xf32>
    %228 = arith.subf %213, %227 : vector<8x128xf32>
    %cst_122 = arith.constant 9.99999974E-6 : f32
    %229 = vector.broadcast %cst_122 : f32 to vector<8x1xf32>
    %230 = arith.addf %226, %229 : vector<8x1xf32>
    %231 = math.rsqrt %230 : vector<8x1xf32>
    %232 = vector.broadcast %231 : vector<8x1xf32> to vector<8x128xf32>
    %233 = arith.mulf %228, %232 : vector<8x128xf32>
    %234 = vector.broadcast %214 : vector<1x128xf32> to vector<8x128xf32>
    %235 = arith.mulf %233, %234 : vector<8x128xf32>
    %236 = vector.broadcast %215 : vector<1x128xf32> to vector<8x128xf32>
    %237 = arith.addf %235, %236 : vector<8x128xf32>
    %238 = arith.truncf %237 : vector<8x128xf32> to vector<8x128xbf16>
    %c0_123 = arith.constant 0 : index
    %c0_124 = arith.constant 0 : index
    %239 = vector.load %arg10[%c0_123, %c0_124] : memref<128x512xbf16, #tpu.memory_space<vmem>>, vector<128x512xbf16>
    %cst_125 = arith.constant dense<0.000000e+00> : vector<8x512xf32>
    %240 = tpu.matmul %238, %239, %cst_125 {dimension_numbers = #tpu.dot_dimension_numbers<[1], [0], [0], [1], [0, 0, 1, 1], [], []>} : vector<8x128xbf16>, vector<128x512xbf16>, vector<8x512xf32> -> vector<8x512xf32>
    %c10 = arith.constant 10 : index
    %c0_126 = arith.constant 0 : index
    %241 = vector.load %arg13[%c10, %c0_126] : memref<16x640xf32, #tpu.memory_space<vmem>>, vector<1x512xf32>
    %242 = vector.broadcast %241 : vector<1x512xf32> to vector<8x512xf32>
    %243 = arith.addf %240, %242 : vector<8x512xf32>
    %cst_127 = arith.constant 0.000000e+00 : f32
    %244 = vector.broadcast %cst_127 : f32 to vector<8x512xf32>
    %245 = arith.maximumf %243, %244 : vector<8x512xf32>
    %246 = arith.truncf %245 : vector<8x512xf32> to vector<8x512xbf16>
    %c0_128 = arith.constant 0 : index
    %c0_129 = arith.constant 0 : index
    %247 = vector.load %arg11[%c0_128, %c0_129] : memref<512x128xbf16, #tpu.memory_space<vmem>>, vector<512x128xbf16>
    %cst_130 = arith.constant dense<0.000000e+00> : vector<8x128xf32>
    %248 = tpu.matmul %246, %247, %cst_130 {dimension_numbers = #tpu.dot_dimension_numbers<[1], [0], [0], [1], [0, 0, 1, 1], [], []>} : vector<8x512xbf16>, vector<512x128xbf16>, vector<8x128xf32> -> vector<8x128xf32>
    %c11 = arith.constant 11 : index
    %c0_131 = arith.constant 0 : index
    %249 = vector.load %arg13[%c11, %c0_131] : memref<16x640xf32, #tpu.memory_space<vmem>>, vector<1x128xf32>
    %250 = vector.broadcast %249 : vector<1x128xf32> to vector<8x128xf32>
    %251 = arith.addf %248, %250 : vector<8x128xf32>
    %252 = arith.addf %213, %251 : vector<8x128xf32>
    tpu.wait_dma2 semaphore(%arg17 : memref<!tpu.dma_semaphore, #tpu.memory_space<semaphore_mem>>) src(%arg14 : memref<1024x640xbf16, #tpu.memory_space<any>>) dst(%arg16 : memref<1024x640xbf16, #tpu.memory_space<vmem>>)
    %253 = vector.extract_strided_slice %252 {offsets = [0, 0], sizes = [1, 128], strides = [1, 1]} : vector<8x128xf32> to vector<1x128xf32>
    %254 = vector.extract_strided_slice %252 {offsets = [1, 0], sizes = [1, 128], strides = [1, 1]} : vector<8x128xf32> to vector<1x128xf32>
    %255 = vector.extract_strided_slice %252 {offsets = [2, 0], sizes = [1, 128], strides = [1, 1]} : vector<8x128xf32> to vector<1x128xf32>
    %256 = vector.extract_strided_slice %252 {offsets = [3, 0], sizes = [1, 128], strides = [1, 1]} : vector<8x128xf32> to vector<1x128xf32>
    %257 = vector.extract_strided_slice %252 {offsets = [4, 0], sizes = [1, 128], strides = [1, 1]} : vector<8x128xf32> to vector<1x128xf32>
    %258 = vector.extract_strided_slice %252 {offsets = [5, 0], sizes = [1, 128], strides = [1, 1]} : vector<8x128xf32> to vector<1x128xf32>
    %259 = vector.extract_strided_slice %252 {offsets = [6, 0], sizes = [1, 128], strides = [1, 1]} : vector<8x128xf32> to vector<1x128xf32>
    %260 = vector.extract_strided_slice %252 {offsets = [7, 0], sizes = [1, 128], strides = [1, 1]} : vector<8x128xf32> to vector<1x128xf32>
    %261 = tpu.concatenate %253, %254, %255, %256, %257, %258, %259, %260 in 1 : vector<1x128xf32>, vector<1x128xf32>, vector<1x128xf32>, vector<1x128xf32>, vector<1x128xf32>, vector<1x128xf32>, vector<1x128xf32>, vector<1x128xf32> -> vector<1x1024xf32>
    %262 = arith.truncf %261 : vector<1x1024xf32> to vector<1x1024xbf16>
    %c0_132 = arith.constant 0 : index
    %c0_133 = arith.constant 0 : index
    %263 = vector.load %arg16[%c0_132, %c0_133] : memref<1024x640xbf16, #tpu.memory_space<vmem>>, vector<1024x640xbf16>
    %cst_134 = arith.constant dense<0.000000e+00> : vector<1x640xf32>
    %264 = tpu.matmul %262, %263, %cst_134 {dimension_numbers = #tpu.dot_dimension_numbers<[1], [0], [0], [1], [0, 0, 1, 1], [], []>} : vector<1x1024xbf16>, vector<1024x640xbf16>, vector<1x640xf32> -> vector<1x640xf32>
    %c12 = arith.constant 12 : index
    %c0_135 = arith.constant 0 : index
    %265 = vector.load %arg13[%c12, %c0_135] : memref<16x640xf32, #tpu.memory_space<vmem>>, vector<1x640xf32>
    %266 = arith.addf %264, %265 : vector<1x640xf32>
    %267 = vector.extract_strided_slice %266 {offsets = [0, 0], sizes = [1, 512], strides = [1, 1]} : vector<1x640xf32> to vector<1x512xf32>
    %268 = vector.extract_strided_slice %266 {offsets = [0, 512], sizes = [1, 128], strides = [1, 1]} : vector<1x640xf32> to vector<1x128xf32>
    %c13 = arith.constant 13 : index
    %c0_136 = arith.constant 0 : index
    %269 = vector.load %arg13[%c13, %c0_136] : memref<16x640xf32, #tpu.memory_space<vmem>>, vector<1x512xf32>
    %c14 = arith.constant 14 : index
    %c0_137 = arith.constant 0 : index
    %270 = vector.load %arg13[%c14, %c0_137] : memref<16x640xf32, #tpu.memory_space<vmem>>, vector<1x512xf32>
    %cst_138 = arith.constant dense<0.000000e+00> : vector<1xf32>
    %271 = vector.multi_reduction <add>, %267, %cst_138 [1] : vector<1x512xf32> to vector<1xf32>
    %272 = vector.shape_cast %271 : vector<1xf32> to vector<1x1xf32>
    %cst_139 = arith.constant 5.120000e+02 : f32
    %273 = vector.broadcast %cst_139 : f32 to vector<1x1xf32>
    %274 = arith.divf %272, %273 : vector<1x1xf32>
    %275 = vector.broadcast %274 : vector<1x1xf32> to vector<1x512xf32>
    %276 = arith.subf %267, %275 : vector<1x512xf32>
    %277 = arith.mulf %276, %276 : vector<1x512xf32>
    %cst_140 = arith.constant dense<0.000000e+00> : vector<1xf32>
    %278 = vector.multi_reduction <add>, %277, %cst_140 [1] : vector<1x512xf32> to vector<1xf32>
    %279 = vector.shape_cast %278 : vector<1xf32> to vector<1x1xf32>
    %cst_141 = arith.constant 5.120000e+02 : f32
    %280 = vector.broadcast %cst_141 : f32 to vector<1x1xf32>
    %281 = arith.divf %279, %280 : vector<1x1xf32>
    %282 = vector.broadcast %274 : vector<1x1xf32> to vector<1x512xf32>
    %283 = arith.subf %267, %282 : vector<1x512xf32>
    %cst_142 = arith.constant 9.99999974E-6 : f32
    %284 = vector.broadcast %cst_142 : f32 to vector<1x1xf32>
    %285 = arith.addf %281, %284 : vector<1x1xf32>
    %286 = math.rsqrt %285 : vector<1x1xf32>
    %287 = vector.broadcast %286 : vector<1x1xf32> to vector<1x512xf32>
    %288 = arith.mulf %283, %287 : vector<1x512xf32>
    %289 = arith.mulf %288, %269 : vector<1x512xf32>
    %290 = arith.addf %289, %270 : vector<1x512xf32>
    %cst_143 = arith.constant 5.000000e-01 : f32
    %291 = vector.broadcast %cst_143 : f32 to vector<1x512xf32>
    %292 = arith.mulf %291, %290 : vector<1x512xf32>
    %cst_144 = arith.constant 4.471500e-02 : f32
    %293 = vector.broadcast %cst_144 : f32 to vector<1x512xf32>
    %294 = arith.mulf %293, %290 : vector<1x512xf32>
    %295 = arith.mulf %294, %290 : vector<1x512xf32>
    %296 = arith.mulf %295, %290 : vector<1x512xf32>
    %297 = arith.addf %290, %296 : vector<1x512xf32>
    %cst_145 = arith.constant 0.797884583 : f32
    %298 = vector.broadcast %cst_145 : f32 to vector<1x512xf32>
    %299 = arith.mulf %298, %297 : vector<1x512xf32>
    %300 = math.tanh %299 : vector<1x512xf32>
    %cst_146 = arith.constant 1.000000e+00 : f32
    %301 = vector.broadcast %cst_146 : f32 to vector<1x512xf32>
    %302 = arith.addf %301, %300 : vector<1x512xf32>
    %303 = arith.mulf %292, %302 : vector<1x512xf32>
    %304 = arith.truncf %303 : vector<1x512xf32> to vector<1x512xbf16>
    %c0_147 = arith.constant 0 : index
    %c0_148 = arith.constant 0 : index
    %305 = vector.load %arg12[%c0_147, %c0_148] : memref<512x128xbf16, #tpu.memory_space<vmem>>, vector<512x128xbf16>
    %cst_149 = arith.constant dense<0.000000e+00> : vector<1x128xf32>
    %306 = tpu.matmul %304, %305, %cst_149 {dimension_numbers = #tpu.dot_dimension_numbers<[1], [0], [0], [1], [0, 0, 1, 1], [], []>} : vector<1x512xbf16>, vector<512x128xbf16>, vector<1x128xf32> -> vector<1x128xf32>
    %c15 = arith.constant 15 : index
    %c0_150 = arith.constant 0 : index
    %307 = vector.load %arg13[%c15, %c0_150] : memref<16x640xf32, #tpu.memory_space<vmem>>, vector<1x128xf32>
    %308 = arith.addf %306, %307 : vector<1x128xf32>
    %309 = arith.addf %308, %268 : vector<1x128xf32>
    %c0_151 = arith.constant 0 : index
    %c0_152 = arith.constant 0 : index
    %c0_153 = arith.constant 0 : index
    %310 = vector.load %arg15[%c0_151, %c0_152, %c0_153] : memref<1x1x128xf32, #tpu.memory_space<vmem>>, vector<1x1x128xf32>
    %311 = vector.shape_cast %310 : vector<1x1x128xf32> to vector<1x128xf32>
    %312 = vector.shape_cast %309 : vector<1x128xf32> to vector<1x1x128xf32>
    tpu.vector_store %arg15[%c0_151, %c0_152, %c0_153], %312 {strides = array<i32>} : memref<1x1x128xf32, #tpu.memory_space<vmem>>, vector<1x1x128xf32>,
    return
  }
  func.func @transform_0(%arg0: i32) -> (i32, i32, i32) {
    %c0_i32 = arith.constant 0 : i32
    %c0_i32_0 = arith.constant 0 : i32
    %c0_i32_1 = arith.constant 0 : i32
    return %arg0, %c0_i32, %c0_i32_0 : i32, i32, i32
  }
  func.func @transform_1(%arg0: i32) -> (i32, i32) {
    %c0_i32 = arith.constant 0 : i32
    %c0_i32_0 = arith.constant 0 : i32
    %c0_i32_1 = arith.constant 0 : i32
    return %c0_i32, %c0_i32_0 : i32, i32
  }
  func.func @transform_2(%arg0: i32) -> (i32, i32) {
    %c0_i32 = arith.constant 0 : i32
    %c0_i32_0 = arith.constant 0 : i32
    %c0_i32_1 = arith.constant 0 : i32
    return %c0_i32, %c0_i32_0 : i32, i32
  }
  func.func @transform_3(%arg0: i32) -> (i32, i32) {
    %c0_i32 = arith.constant 0 : i32
    %c0_i32_0 = arith.constant 0 : i32
    %c0_i32_1 = arith.constant 0 : i32
    return %c0_i32, %c0_i32_0 : i32, i32
  }
  func.func @transform_4(%arg0: i32) -> (i32, i32) {
    %c0_i32 = arith.constant 0 : i32
    %c0_i32_0 = arith.constant 0 : i32
    %c0_i32_1 = arith.constant 0 : i32
    return %c0_i32, %c0_i32_0 : i32, i32
  }
  func.func @transform_5(%arg0: i32) -> (i32, i32) {
    %c0_i32 = arith.constant 0 : i32
    %c0_i32_0 = arith.constant 0 : i32
    %c0_i32_1 = arith.constant 0 : i32
    return %c0_i32, %c0_i32_0 : i32, i32
  }
  func.func @transform_6(%arg0: i32) -> (i32, i32) {
    %c0_i32 = arith.constant 0 : i32
    %c0_i32_0 = arith.constant 0 : i32
    %c0_i32_1 = arith.constant 0 : i32
    return %c0_i32, %c0_i32_0 : i32, i32
  }
  func.func @transform_7(%arg0: i32) -> (i32, i32) {
    %c0_i32 = arith.constant 0 : i32
    %c0_i32_0 = arith.constant 0 : i32
    %c0_i32_1 = arith.constant 0 : i32
    return %c0_i32, %c0_i32_0 : i32, i32
  }
  func.func @transform_8(%arg0: i32) -> (i32, i32) {
    %c0_i32 = arith.constant 0 : i32
    %c0_i32_0 = arith.constant 0 : i32
    %c0_i32_1 = arith.constant 0 : i32
    return %c0_i32, %c0_i32_0 : i32, i32
  }
  func.func @transform_9(%arg0: i32) -> (i32, i32) {
    %c0_i32 = arith.constant 0 : i32
    %c0_i32_0 = arith.constant 0 : i32
    %c0_i32_1 = arith.constant 0 : i32
    return %c0_i32, %c0_i32_0 : i32, i32
  }
  func.func @transform_10(%arg0: i32) -> (i32, i32) {
    %c0_i32 = arith.constant 0 : i32
    %c0_i32_0 = arith.constant 0 : i32
    %c0_i32_1 = arith.constant 0 : i32
    return %c0_i32, %c0_i32_0 : i32, i32
  }
  func.func @transform_11(%arg0: i32) -> (i32, i32) {
    %c0_i32 = arith.constant 0 : i32
    %c0_i32_0 = arith.constant 0 : i32
    %c0_i32_1 = arith.constant 0 : i32
    return %c0_i32, %c0_i32_0 : i32, i32
  }
  func.func @transform_12(%arg0: i32) -> (i32, i32) {
    %c0_i32 = arith.constant 0 : i32
    %c0_i32_0 = arith.constant 0 : i32
    %c0_i32_1 = arith.constant 0 : i32
    return %c0_i32, %c0_i32_0 : i32, i32
  }
  func.func @transform_14(%arg0: i32) -> (i32, i32, i32) {
    %c0_i32 = arith.constant 0 : i32
    %c0_i32_0 = arith.constant 0 : i32
    %c0_i32_1 = arith.constant 0 : i32
    return %arg0, %c0_i32, %c0_i32_0 : i32, i32, i32
  }
}

</mosaic_0001>

<llo_original>
// kernel: enhanced_hybrid_encoder_forward.1
$region0: #{enhanced_hybrid_encoder_forward.1}
  #allocation0 [shape = 'u32[]', space=smem, size = 0x4, offset = 0x4, fixed_abs, tag = 'smem constant byte address 0x4 - core index']
  #allocation1 [shape = 'u32[72,128]{1,0:T(1,128)}', space=vmem, size = 0x9000, scoped, tag = 'internal scratch']
  #allocation2 [shape = 'bf16[1024,640]{1,0:T(8,128)(2,1)}', space=vmem, size = 0x140000, scoped, tag = 'scratch operand']
  #allocation3 [shape = 's32[1]{0}', space=sflag, size = 0x4, scoped, tag = 'scratch operand']
  #allocation4 [shape = 'f32[64,64]{1,0:T(8,128)}', space=vmem, size = 0x8000, scoped, tag = 'scratch operand']
  #allocation5 [shape = 'f32[64,192]{1,0:T(8,128)}', space=vmem, size = 0x10000, scoped, tag = 'scratch operand']
  #allocation6 [shape = 'f32[8,128]{1,0:T(8,128)}', space=vmem, size = 0x1000, scoped, tag = 'scratch operand']
  #allocation7 [shape = 'f32[8,384]{1,0:T(8,128)}', space=vmem, size = 0x3000, scoped, tag = 'scratch operand']
  #allocation27 [shape = 's32[]', space=sflag, size = 0x4, offset = 0, fixed_abs, tag = 'sflag constant byte address 0x0 - dummy sync flag']
  #allocation28 [shape = 's32[]', space=sflag, size = 0x4, offset = 0, fixed_abs, tag = 'sflag constant byte address 0x0 - dummy sync flag']
  #allocation29 [shape = 'u32[]', space=smem, size = 0x4, offset = 0x44, fixed_abs, tag = 'smem constant byte address 0x44 - assertion arg 0']
  #allocation30 [shape = 'u32[]', space=smem, size = 0x4, offset = 0x48, fixed_abs, tag = 'smem constant byte address 0x48 - assertion arg 1']
  %s0 = inlined_call_operand.vmem [shape: f32[2,64,20], index: 0, kind: input, shape index: {}]
  %s1 = inlined_call_operand.hbm [shape: bf16[20,64], index: 1, kind: input, shape index: {}]
  %s2 = inlined_call_operand.hbm [shape: bf16[192,128], index: 2, kind: input, shape index: {}]
  %s3 = inlined_call_operand.vmem [shape: bf16[128,16], index: 3, kind: input, shape index: {}]
  %s4 = inlined_call_operand.hbm [shape: bf16[16,128], index: 4, kind: input, shape index: {}]
  %s5 = inlined_call_operand.hbm [shape: bf16[8,64], index: 5, kind: input, shape index: {}]
  %s6 = inlined_call_operand.hbm [shape: f32[8,128], index: 6, kind: input, shape index: {}]
  %s7 = inlined_call_operand.hbm [shape: bf16[128,384], index: 7, kind: input, shape index: {}]
  %s8 = inlined_call_operand.hbm [shape: bf16[128,128], index: 8, kind: input, shape index: {}]
  %s9 = inlined_call_operand.hbm [shape: bf16[128,512], index: 9, kind: input, shape index: {}]
  %s10 = inlined_call_operand.hbm [shape: bf16[512,128], index: 10, kind: input, shape index: {}]
  %s11 = inlined_call_operand.hbm [shape: bf16[512,128], index: 11, kind: input, shape index: {}]
  %s12 = inlined_call_operand.hbm [shape: f32[16,640], index: 12, kind: input, shape index: {}]
  %s13 = inlined_call_operand.hbm [shape: bf16[1024,640], index: 13, kind: input, shape index: {}]
  %s14 = inlined_call_operand.hbm [shape: f32[2,1,128], index: 14, kind: output, shape index: {}]
  %s15 = sld [smem:[#allocation0]]
  $region133: #{enhanced_hybrid_encoder_forward.1} parent=0
    _
  %s17 = ssub.s32 1, %s15
  %s18 = scalar_select 0, %s17, %s15
  $region1: #{enhanced_hybrid_encoder_forward.1} parent=0
    #allocation8 [shape = 'u8[6144]{0}', space=vmem, size = 0x1800, scoped, tag = 'input window, operand 1, single buffered']
    #allocation9 [shape = 's32[2]{0}', space=sflag, size = 0x8, scoped, tag = 'scoped memory for enhanced_hybrid_encoder_forward.1']
    #allocation10 [shape = 's32[2]{0}', space=sflag, size = 0x8, scoped, tag = 'scoped memory for enhanced_hybrid_encoder_forward.1']
    #allocation11 [shape = 'u8[49152]{0}', space=vmem, size = 0xc000, scoped, tag = 'input window, operand 2, single buffered']
    #allocation12 [shape = 's32[1]{0}', space=sflag, size = 0x4, scoped, tag = 'scoped memory for enhanced_hybrid_encoder_forward.1']
    #allocation13 [shape = 'u8[4096]{0}', space=vmem, size = 0x1000, scoped, tag = 'input window, operand 4, single buffered']
    #allocation14 [shape = 'u8[2048]{0}', space=vmem, size = 0x800, scoped, tag = 'input window, operand 5, single buffered']
    #allocation15 [shape = 's32[1]{0}', space=sflag, size = 0x4, scoped, tag = 'scoped memory for enhanced_hybrid_encoder_forward.1']
    #allocation16 [shape = 'u8[4096]{0}', space=vmem, size = 0x1000, scoped, tag = 'input window, operand 6, single buffered']
    #allocation17 [shape = 'u8[98304]{0}', space=vmem, size = 0x18000, scoped, tag = 'input window, operand 7, single buffered']
    #allocation18 [shape = 's32[1]{0}', space=sflag, size = 0x4, scoped, tag = 'scoped memory for enhanced_hybrid_encoder_forward.1']
    #allocation19 [shape = 'u8[32768]{0}', space=vmem, size = 0x8000, scoped, tag = 'input window, operand 8, single buffered']
    #allocation20 [shape = 'u8[131072]{0}', space=vmem, size = 0x20000, scoped, tag = 'input window, operand 9, single buffered']
    #allocation21 [shape = 's32[1]{0}', space=sflag, size = 0x4, scoped, tag = 'scoped memory for enhanced_hybrid_encoder_forward.1']
    #allocation22 [shape = 'u8[131072]{0}', space=vmem, size = 0x20000, scoped, tag = 'input window, operand 10, single buffered']
    #allocation23 [shape = 'u8[131072]{0}', space=vmem, size = 0x20000, scoped, tag = 'input window, operand 11, single buffered']
    #allocation24 [shape = 's32[1]{0}', space=sflag, size = 0x4, scoped, tag = 'scoped memory for enhanced_hybrid_encoder_forward.1']
    #allocation25 [shape = 'u8[40960]{0}', space=vmem, size = 0xa000, scoped, tag = 'input window, operand 12, single buffered']
    #allocation26 [shape = 'u8[1024]{0}', space=vmem, size = 0x400, scoped, tag = 'output window, operand 0']
    %19 = vsyncpa [#allocation9], 0
    %20 = vsyncpa [#allocation12], 0
    %21 = vsyncpa [#allocation15], 0
    %22 = vsyncpa [#allocation18], 0
    %23 = vsyncpa [#allocation21], 0
    %24 = vsyncpa [#allocation24], 0
    %25 = vsyncpa [#allocation10], 0
    %s26 = scalar_lea.sflag [#allocation10], 1
    %27 = vsyncpa %s26, 0
    loop: start=0, step=1, limit=4
    $region2: #{enhanced_hybrid_encoder_forward.1} parent=1 // loop_pre_header
      _
    $region3: #{enhanced_hybrid_encoder_forward.1} parent=1 // loop_header
      %s29 = sphi 0, %s33
      %p30 = scmp.ge.s32.totalorder %s29, 4
      %s39 = sphi 0, %s41
      %s42 = sphi 0, %s39
      %s43 = sphi 0, %s42
      %s59 = sphi 0, %s43
      %s63 = sphi 0, %s63
      %s65 = sphi 0, %s63
      %s66 = sphi 0, %s65
      %s80 = sphi 0, %s66
      %s84 = sphi 0, %s84
      %s86 = sphi 0, %s84
      %s87 = sphi 0, %s86
      %s101 = sphi 0, %s87
      %s105 = sphi 0, %s105
      %s107 = sphi 0, %s105
      %s108 = sphi 0, %s107
      %s122 = sphi 0, %s108
      %s126 = sphi 0, %s126
      %s128 = sphi 0, %s126
      %s129 = sphi 0, %s128
      %s143 = sphi 0, %s129
      %s147 = sphi 0, %s147
      %s149 = sphi 0, %s147
      %s150 = sphi 0, %s149
      %s164 = sphi 0, %s150
      %s168 = sphi 0, %s168
      %s170 = sphi 0, %s168
      %s171 = sphi 0, %s170
      %s185 = sphi 0, %s171
      %s189 = sphi 0, %s189
      %s191 = sphi 0, %s189
      %s192 = sphi 0, %s191
      %s206 = sphi 0, %s192
      %s210 = sphi 0, %s210
      %s212 = sphi 0, %s210
      %s213 = sphi 0, %s212
      %s227 = sphi 0, %s213
      %s231 = sphi 0, %s231
      %s233 = sphi 0, %s231
      %s234 = sphi 0, %s233
      %s248 = sphi 0, %s234
      %s252 = sphi 0, %s252
      %s254 = sphi 0, %s252
      %s255 = sphi 0, %s254
      %s269 = sphi 0, %s255
      %s273 = sphi 0, %s273
      %s275 = sphi 0, %s273
      %s276 = sphi 0, %s275
      %s290 = sphi 0, %s276
      %s294 = sphi 0, %s294
      %s296 = sphi 0, %s294
      %s297 = sphi 0, %s296
      %s311 = sphi 0, %s297
      %s317 = sphi 0, %s319
      %s320 = sphi 0, %s317
      %s321 = sphi 0, %s320
      %s337 = sphi 0, %s321
    $region4: #{enhanced_hybrid_encoder_forward.1} parent=1 // loop_header_branch
      %32 = sbr.rel (%p30) target = $region8
    $region5: #{enhanced_hybrid_encoder_forward.1} parent=1 // loop_body
      %s34 = ssub.s32 %s29, 1
      %s35 = ssub.s32 %s29, 2
      %s36 = sadd.s32 %s29, 1
      %s37 = ssub.s32 %s29, %s36
      %p38 = scmp.eq.s32.totalorder %s37, 0
      %s40 = sadd.s32 %s39, 1
      %s41 = scalar_select %p38, %s39, %s40
      %p44 = pneg %p38
      %p45 = scmp.eq.s32.totalorder %s29, 1
      %p46 = por %p44, %p45
      %p47 = scmp.ne.s32.totalorder %s39, %s42
      %p48 = scmp.eq.s32.totalorder %s29, 0
      %p49 = por %p47, %p48
      %p50 = scmp.ne.s32.totalorder %s39, %s42
      %p51 = scmp.eq.s32.totalorder %s34, 1
      %p52 = por %p50, %p51
      %p53 = scmp.ne.s32.totalorder %s42, %s43
      %p54 = scmp.eq.s32.totalorder %s34, 0
      %p55 = por %p53, %p54
      %p56 = scmp.ne.s32.totalorder %s42, %s43
      %p57 = scmp.eq.s32.totalorder %s35, 1
      %p58 = por %p56, %p57
      %p60 = scmp.ne.s32.totalorder %s43, %s59
      %p61 = scmp.eq.s32.totalorder %s35, 0
      %p62 = por %p60, %p61
      %s64 = sadd.s32 %s63, 1
      %p67 = scmp.eq.s32.totalorder %s29, 1
      %p68 = scmp.ne.s32.totalorder %s63, %s65
      %p69 = scmp.eq.s32.totalorder %s29, 0
      %p70 = por %p68, %p69
      %p71 = scmp.ne.s32.totalorder %s63, %s65
      %p72 = scmp.eq.s32.totalorder %s34, 1
      %p73 = por %p71, %p72
      %p74 = scmp.ne.s32.totalorder %s65, %s66
      %p75 = scmp.eq.s32.totalorder %s34, 0
      %p76 = por %p74, %p75
      %p77 = scmp.ne.s32.totalorder %s65, %s66
      %p78 = scmp.eq.s32.totalorder %s35, 1
      %p79 = por %p77, %p78
      %p81 = scmp.ne.s32.totalorder %s66, %s80
      %p82 = scmp.eq.s32.totalorder %s35, 0
      %p83 = por %p81, %p82
      %s85 = sadd.s32 %s84, 1
      %p88 = scmp.eq.s32.totalorder %s29, 1
      %p89 = scmp.ne.s32.totalorder %s84, %s86
      %p90 = scmp.eq.s32.totalorder %s29, 0
      %p91 = por %p89, %p90
      %p92 = scmp.ne.s32.totalorder %s84, %s86
      %p93 = scmp.eq.s32.totalorder %s34, 1
      %p94 = por %p92, %p93
      %p95 = scmp.ne.s32.totalorder %s86, %s87
      %p96 = scmp.eq.s32.totalorder %s34, 0
      %p97 = por %p95, %p96
      %p98 = scmp.ne.s32.totalorder %s86, %s87
      %p99 = scmp.eq.s32.totalorder %s35, 1
      %p100 = por %p98, %p99
      %p102 = scmp.ne.s32.totalorder %s87, %s101
      %p103 = scmp.eq.s32.totalorder %s35, 0
      %p104 = por %p102, %p103
      %s106 = sadd.s32 %s105, 1
      %p109 = scmp.eq.s32.totalorder %s29, 1
      %p110 = scmp.ne.s32.totalorder %s105, %s107
      %p111 = scmp.eq.s32.totalorder %s29, 0
      %p112 = por %p110, %p111
      %p113 = scmp.ne.s32.totalorder %s105, %s107
      %p114 = scmp.eq.s32.totalorder %s34, 1
      %p115 = por %p113, %p114
      %p116 = scmp.ne.s32.totalorder %s107, %s108
      %p117 = scmp.eq.s32.totalorder %s34, 0
      %p118 = por %p116, %p117
      %p119 = scmp.ne.s32.totalorder %s107, %s108
      %p120 = scmp.eq.s32.totalorder %s35, 1
      %p121 = por %p119, %p120
      %p123 = scmp.ne.s32.totalorder %s108, %s122
      %p124 = scmp.eq.s32.totalorder %s35, 0
      %p125 = por %p123, %p124
      %s127 = sadd.s32 %s126, 1
      %p130 = scmp.eq.s32.totalorder %s29, 1
      %p131 = scmp.ne.s32.totalorder %s126, %s128
      %p132 = scmp.eq.s32.totalorder %s29, 0
      %p133 = por %p131, %p132
      %p134 = scmp.ne.s32.totalorder %s126, %s128
      %p135 = scmp.eq.s32.totalorder %s34, 1
      %p136 = por %p134, %p135
      %p137 = scmp.ne.s32.totalorder %s128, %s129
      %p138 = scmp.eq.s32.totalorder %s34, 0
      %p139 = por %p137, %p138
      %p140 = scmp.ne.s32.totalorder %s128, %s129
      %p141 = scmp.eq.s32.totalorder %s35, 1
      %p142 = por %p140, %p141
      %p144 = scmp.ne.s32.totalorder %s129, %s143
      %p145 = scmp.eq.s32.totalorder %s35, 0
      %p146 = por %p144, %p145
      %s148 = sadd.s32 %s147, 1
      %p151 = scmp.eq.s32.totalorder %s29, 1
      %p152 = scmp.ne.s32.totalorder %s147, %s149
      %p153 = scmp.eq.s32.totalorder %s29, 0
      %p154 = por %p152, %p153
      %p155 = scmp.ne.s32.totalorder %s147, %s149
      %p156 = scmp.eq.s32.totalorder %s34, 1
      %p157 = por %p155, %p156
      %p158 = scmp.ne.s32.totalorder %s149, %s150
      %p159 = scmp.eq.s32.totalorder %s34, 0
      %p160 = por %p158, %p159
      %p161 = scmp.ne.s32.totalorder %s149, %s150
      %p162 = scmp.eq.s32.totalorder %s35, 1
      %p163 = por %p161, %p162
      %p165 = scmp.ne.s32.totalorder %s150, %s164
      %p166 = scmp.eq.s32.totalorder %s35, 0
      %p167 = por %p165, %p166
      %s169 = sadd.s32 %s168, 1
      %p172 = scmp.eq.s32.totalorder %s29, 1
      %p173 = scmp.ne.s32.totalorder %s168, %s170
      %p174 = scmp.eq.s32.totalorder %s29, 0
      %p175 = por %p173, %p174
      %p176 = scmp.ne.s32.totalorder %s168, %s170
      %p177 = scmp.eq.s32.totalorder %s34, 1
      %p178 = por %p176, %p177
      %p179 = scmp.ne.s32.totalorder %s170, %s171
      %p180 = scmp.eq.s32.totalorder %s34, 0
      %p181 = por %p179, %p180
      %p182 = scmp.ne.s32.totalorder %s170, %s171
      %p183 = scmp.eq.s32.totalorder %s35, 1
      %p184 = por %p182, %p183
      %p186 = scmp.ne.s32.totalorder %s171, %s185
      %p187 = scmp.eq.s32.totalorder %s35, 0
      %p188 = por %p186, %p187
      %s190 = sadd.s32 %s189, 1
      %p193 = scmp.eq.s32.totalorder %s29, 1
      %p194 = scmp.ne.s32.totalorder %s189, %s191
      %p195 = scmp.eq.s32.totalorder %s29, 0
      %p196 = por %p194, %p195
      %p197 = scmp.ne.s32.totalorder %s189, %s191
      %p198 = scmp.eq.s32.totalorder %s34, 1
      %p199 = por %p197, %p198
      %p200 = scmp.ne.s32.totalorder %s191, %s192
      %p201 = scmp.eq.s32.totalorder %s34, 0
      %p202 = por %p200, %p201
      %p203 = scmp.ne.s32.totalorder %s191, %s192
      %p204 = scmp.eq.s32.totalorder %s35, 1
      %p205 = por %p203, %p204
      %p207 = scmp.ne.s32.totalorder %s192, %s206
      %p208 = scmp.eq.s32.totalorder %s35, 0
      %p209 = por %p207, %p208
      %s211 = sadd.s32 %s210, 1
      %p214 = scmp.eq.s32.totalorder %s29, 1
      %p215 = scmp.ne.s32.totalorder %s210, %s212
      %p216 = scmp.eq.s32.totalorder %s29, 0
      %p217 = por %p215, %p216
      %p218 = scmp.ne.s32.totalorder %s210, %s212
      %p219 = scmp.eq.s32.totalorder %s34, 1
      %p220 = por %p218, %p219
      %p221 = scmp.ne.s32.totalorder %s212, %s213
      %p222 = scmp.eq.s32.totalorder %s34, 0
      %p223 = por %p221, %p222
      %p224 = scmp.ne.s32.totalorder %s212, %s213
      %p225 = scmp.eq.s32.totalorder %s35, 1
      %p226 = por %p224, %p225
      %p228 = scmp.ne.s32.totalorder %s213, %s227
      %p229 = scmp.eq.s32.totalorder %s35, 0
      %p230 = por %p228, %p229
      %s232 = sadd.s32 %s231, 1
      %p235 = scmp.eq.s32.totalorder %s29, 1
      %p236 = scmp.ne.s32.totalorder %s231, %s233
      %p237 = scmp.eq.s32.totalorder %s29, 0
      %p238 = por %p236, %p237
      %p239 = scmp.ne.s32.totalorder %s231, %s233
      %p240 = scmp.eq.s32.totalorder %s34, 1
      %p241 = por %p239, %p240
      %p242 = scmp.ne.s32.totalorder %s233, %s234
      %p243 = scmp.eq.s32.totalorder %s34, 0
      %p244 = por %p242, %p243
      %p245 = scmp.ne.s32.totalorder %s233, %s234
      %p246 = scmp.eq.s32.totalorder %s35, 1
      %p247 = por %p245, %p246
      %p249 = scmp.ne.s32.totalorder %s234, %s248
      %p250 = scmp.eq.s32.totalorder %s35, 0
      %p251 = por %p249, %p250
      %s253 = sadd.s32 %s252, 1
      %p256 = scmp.eq.s32.totalorder %s29, 1
      %p257 = scmp.ne.s32.totalorder %s252, %s254
      %p258 = scmp.eq.s32.totalorder %s29, 0
      %p259 = por %p257, %p258
      %p260 = scmp.ne.s32.totalorder %s252, %s254
      %p261 = scmp.eq.s32.totalorder %s34, 1
      %p262 = por %p260, %p261
      %p263 = scmp.ne.s32.totalorder %s254, %s255
      %p264 = scmp.eq.s32.totalorder %s34, 0
      %p265 = por %p263, %p264
      %p266 = scmp.ne.s32.totalorder %s254, %s255
      %p267 = scmp.eq.s32.totalorder %s35, 1
      %p268 = por %p266, %p267
      %p270 = scmp.ne.s32.totalorder %s255, %s269
      %p271 = scmp.eq.s32.totalorder %s35, 0
      %p272 = por %p270, %p271
      %s274 = sadd.s32 %s273, 1
      %p277 = scmp.eq.s32.totalorder %s29, 1
      %p278 = scmp.ne.s32.totalorder %s273, %s275
      %p279 = scmp.eq.s32.totalorder %s29, 0
      %p280 = por %p278, %p279
      %p281 = scmp.ne.s32.totalorder %s273, %s275
      %p282 = scmp.eq.s32.totalorder %s34, 1
      %p283 = por %p281, %p282
      %p284 = scmp.ne.s32.totalorder %s275, %s276
      %p285 = scmp.eq.s32.totalorder %s34, 0
      %p286 = por %p284, %p285
      %p287 = scmp.ne.s32.totalorder %s275, %s276
      %p288 = scmp.eq.s32.totalorder %s35, 1
      %p289 = por %p287, %p288
      %p291 = scmp.ne.s32.totalorder %s276, %s290
      %p292 = scmp.eq.s32.totalorder %s35, 0
      %p293 = por %p291, %p292
      %s295 = sadd.s32 %s294, 1
      %p298 = scmp.eq.s32.totalorder %s29, 1
      %p299 = scmp.ne.s32.totalorder %s294, %s296
      %p300 = scmp.eq.s32.totalorder %s29, 0
      %p301 = por %p299, %p300
      %p302 = scmp.ne.s32.totalorder %s294, %s296
      %p303 = scmp.eq.s32.totalorder %s34, 1
      %p304 = por %p302, %p303
      %p305 = scmp.ne.s32.totalorder %s296, %s297
      %p306 = scmp.eq.s32.totalorder %s34, 0
      %p307 = por %p305, %p306
      %p308 = scmp.ne.s32.totalorder %s296, %s297
      %p309 = scmp.eq.s32.totalorder %s35, 1
      %p310 = por %p308, %p309
      %p312 = scmp.ne.s32.totalorder %s297, %s311
      %p313 = scmp.eq.s32.totalorder %s35, 0
      %p314 = por %p312, %p313
      %s315 = ssub.s32 %s29, %s36
      %p316 = scmp.eq.s32.totalorder %s315, 0
      %s318 = sadd.s32 %s317, 1
      %s319 = scalar_select %p316, %s317, %s318
      %p322 = pneg %p316
      %p323 = scmp.eq.s32.totalorder %s29, 1
      %p324 = por %p322, %p323
      %p325 = scmp.ne.s32.totalorder %s317, %s320
      %p326 = scmp.eq.s32.totalorder %s29, 0
      %p327 = por %p325, %p326
      %p328 = scmp.ne.s32.totalorder %s317, %s320
      %p329 = scmp.eq.s32.totalorder %s34, 1
      %p330 = por %p328, %p329
      %p331 = scmp.ne.s32.totalorder %s320, %s321
      %p332 = scmp.eq.s32.totalorder %s34, 0
      %p333 = por %p331, %p332
      %p334 = scmp.ne.s32.totalorder %s320, %s321
      %p335 = scmp.eq.s32.totalorder %s35, 1
      %p336 = por %p334, %p335
      %p338 = scmp.ne.s32.totalorder %s321, %s337
      %p339 = scmp.eq.s32.totalorder %s35, 0
      %p340 = por %p338, %p339
      %p341 = scmp.le.s32.totalorder 1, %s29
      %p342 = scmp.lt.s32.totalorder %s29, 3
      %p343 = pnand %p341, %p342
      %p344 = pneg %p343
      // Predicated region
      $region9: #{enhanced_hybrid_encoder_forward.1} parent=5 // pred_check
        _
      $region10: #{enhanced_hybrid_encoder_forward.1} parent=5 // pred_check_branch
        %346 = sbr.rel (%p343) target = $region12
      $region11: #{enhanced_hybrid_encoder_forward.1} parent=5 // pred_region
        %s347 = ssub.s32 %s29, 1
        // Predicated region
        $region13: #{enhanced_hybrid_encoder_forward.1} parent=11 // pred_check
          %p348 = pneg %p76
        $region14: #{enhanced_hybrid_encoder_forward.1} parent=11 // pred_check_branch
          %350 = sbr.rel (%p348) target = $region16
        $region15: #{enhanced_hybrid_encoder_forward.1} parent=11 // pred_region
          %352 = vsyncadd [#allocation9], 0
          %s353 = sshll.u32 %s1, 4
          %s354 = int_to_ptr.hbm [resolvable:$true] %s353
          %s355 = sshll.u32 [#allocation8], 4
          %s356 = int_to_ptr.vmem [resolvable:$true] %s355
          %361 = dma.hbm_to_vmem [thread:$0]  %s354, 192, %s356, [#allocation9], 64, 64, 4
        $region16: #{enhanced_hybrid_encoder_forward.1} parent=11 // pred_fallthru
          _
        // Predicated region
        $region17: #{enhanced_hybrid_encoder_forward.1} parent=11 // pred_check
          %p362 = pneg %p97
        $region18: #{enhanced_hybrid_encoder_forward.1} parent=11 // pred_check_branch
          %364 = sbr.rel (%p362) target = $region20
        $region19: #{enhanced_hybrid_encoder_forward.1} parent=11 // pred_region
          %366 = vsyncadd [#allocation12], 0
          %s367 = sshll.u32 %s2, 4
          %s368 = int_to_ptr.hbm [resolvable:$true] %s367
          %s369 = sshll.u32 [#allocation11], 4
          %s370 = int_to_ptr.vmem [resolvable:$true] %s369
          %375 = dma.hbm_to_vmem [thread:$0]  %s368, 1536, %s370, [#allocation12], 64, 64, 4
        $region20: #{enhanced_hybrid_encoder_forward.1} parent=11 // pred_fallthru
          _
        // Predicated region
        $region21: #{enhanced_hybrid_encoder_forward.1} parent=11 // pred_check
          %p376 = pneg %p118
        $region22: #{enhanced_hybrid_encoder_forward.1} parent=11 // pred_check_branch
          %378 = sbr.rel (%p376) target = $region24
        $region23: #{enhanced_hybrid_encoder_forward.1} parent=11 // pred_region
          _
        $region24: #{enhanced_hybrid_encoder_forward.1} parent=11 // pred_fallthru
          _
        // Predicated region
        $region25: #{enhanced_hybrid_encoder_forward.1} parent=11 // pred_check
          %p379 = pneg %p139
        $region26: #{enhanced_hybrid_encoder_forward.1} parent=11 // pred_check_branch
          %381 = sbr.rel (%p379) target = $region28
        $region27: #{enhanced_hybrid_encoder_forward.1} parent=11 // pred_region
          %383 = vsyncadd [#allocation12], 0
          %s384 = sshll.u32 %s4, 4
          %s385 = int_to_ptr.hbm [resolvable:$true] %s384
          %s386 = sshll.u32 [#allocation13], 4
          %s387 = int_to_ptr.vmem [resolvable:$true] %s386
          %392 = dma.hbm_to_vmem [thread:$0]  %s385, 128, %s387, [#allocation12], 64, 64, 4
        $region28: #{enhanced_hybrid_encoder_forward.1} parent=11 // pred_fallthru
          _
        // Predicated region
        $region29: #{enhanced_hybrid_encoder_forward.1} parent=11 // pred_check
          %p393 = pneg %p160
        $region30: #{enhanced_hybrid_encoder_forward.1} parent=11 // pred_check_branch
          %395 = sbr.rel (%p393) target = $region32
        $region31: #{enhanced_hybrid_encoder_forward.1} parent=11 // pred_region
          %397 = vsyncadd [#allocation15], 0
          %s399 = sshll.u32 %s5, 4
          %s400 = int_to_ptr.hbm [resolvable:$true] %s399
          %s401 = sshll.u32 [#allocation14], 4
          %s402 = int_to_ptr.vmem [resolvable:$true] %s401
          %404 = dma.hbm_to_vmem [thread:$0]  %s400, 64, %s402, [#allocation15]
        $region32: #{enhanced_hybrid_encoder_forward.1} parent=11 // pred_fallthru
          _
        // Predicated region
        $region33: #{enhanced_hybrid_encoder_forward.1} parent=11 // pred_check
          %p405 = pneg %p181
        $region34: #{enhanced_hybrid_encoder_forward.1} parent=11 // pred_check_branch
          %407 = sbr.rel (%p405) target = $region36
        $region35: #{enhanced_hybrid_encoder_forward.1} parent=11 // pred_region
          %409 = vsyncadd [#allocation15], 0
          %s411 = sshll.u32 %s6, 4
          %s412 = int_to_ptr.hbm [resolvable:$true] %s411
          %s413 = sshll.u32 [#allocation16], 4
          %s414 = int_to_ptr.vmem [resolvable:$true] %s413
          %416 = dma.hbm_to_vmem [thread:$0]  %s412, 128, %s414, [#allocation15]
        $region36: #{enhanced_hybrid_encoder_forward.1} parent=11 // pred_fallthru
          _
        // Predicated region
        $region37: #{enhanced_hybrid_encoder_forward.1} parent=11 // pred_check
          %p417 = pneg %p202
        $region38: #{enhanced_hybrid_encoder_forward.1} parent=11 // pred_check_branch
          %419 = sbr.rel (%p417) target = $region40
        $region39: #{enhanced_hybrid_encoder_forward.1} parent=11 // pred_region
          %421 = vsyncadd [#allocation18], 0
          %s422 = sshll.u32 %s7, 4
          %s423 = int_to_ptr.hbm [resolvable:$true] %s422
          %s424 = sshll.u32 [#allocation17], 4
          %s425 = int_to_ptr.vmem [resolvable:$true] %s424
          %430 = dma.hbm_to_vmem [thread:$0]  %s423, 3072, %s425, [#allocation18], 192, 192, 12
        $region40: #{enhanced_hybrid_encoder_forward.1} parent=11 // pred_fallthru
          _
        // Predicated region
        $region41: #{enhanced_hybrid_encoder_forward.1} parent=11 // pred_check
          %p431 = pneg %p223
        $region42: #{enhanced_hybrid_encoder_forward.1} parent=11 // pred_check_branch
          %433 = sbr.rel (%p431) target = $region44
        $region43: #{enhanced_hybrid_encoder_forward.1} parent=11 // pred_region
          %435 = vsyncadd [#allocation18], 0
          %s436 = sshll.u32 %s8, 4
          %s437 = int_to_ptr.hbm [resolvable:$true] %s436
          %s438 = sshll.u32 [#allocation19], 4
          %s439 = int_to_ptr.vmem [resolvable:$true] %s438
          %444 = dma.hbm_to_vmem [thread:$0]  %s437, 1024, %s439, [#allocation18], 64, 64, 4
        $region44: #{enhanced_hybrid_encoder_forward.1} parent=11 // pred_fallthru
          _
        // Predicated region
        $region45: #{enhanced_hybrid_encoder_forward.1} parent=11 // pred_check
          %p445 = pneg %p244
        $region46: #{enhanced_hybrid_encoder_forward.1} parent=11 // pred_check_branch
          %447 = sbr.rel (%p445) target = $region48
        $region47: #{enhanced_hybrid_encoder_forward.1} parent=11 // pred_region
          %449 = vsyncadd [#allocation21], 0
          %s450 = sshll.u32 %s9, 4
          %s451 = int_to_ptr.hbm [resolvable:$true] %s450
          %s452 = sshll.u32 [#allocation20], 4
          %s453 = int_to_ptr.vmem [resolvable:$true] %s452
          %458 = dma.hbm_to_vmem [thread:$0]  %s451, 4096, %s453, [#allocation21], 256, 256, 16
        $region48: #{enhanced_hybrid_encoder_forward.1} parent=11 // pred_fallthru
          _
        // Predicated region
        $region49: #{enhanced_hybrid_encoder_forward.1} parent=11 // pred_check
          %p459 = pneg %p265
        $region50: #{enhanced_hybrid_encoder_forward.1} parent=11 // pred_check_branch
          %461 = sbr.rel (%p459) target = $region52
        $region51: #{enhanced_hybrid_encoder_forward.1} parent=11 // pred_region
          %463 = vsyncadd [#allocation21], 0
          %s464 = sshll.u32 %s10, 4
          %s465 = int_to_ptr.hbm [resolvable:$true] %s464
          %s466 = sshll.u32 [#allocation22], 4
          %s467 = int_to_ptr.vmem [resolvable:$true] %s466
          %472 = dma.hbm_to_vmem [thread:$0]  %s465, 4096, %s467, [#allocation21], 64, 64, 4
        $region52: #{enhanced_hybrid_encoder_forward.1} parent=11 // pred_fallthru
          _
        // Predicated region
        $region53: #{enhanced_hybrid_encoder_forward.1} parent=11 // pred_check
          %p473 = pneg %p286
        $region54: #{enhanced_hybrid_encoder_forward.1} parent=11 // pred_check_branch
          %475 = sbr.rel (%p473) target = $region56
        $region55: #{enhanced_hybrid_encoder_forward.1} parent=11 // pred_region
          %477 = vsyncadd [#allocation24], 0
          %s478 = sshll.u32 %s11, 4
          %s479 = int_to_ptr.hbm [resolvable:$true] %s478
          %s480 = sshll.u32 [#allocation23], 4
          %s481 = int_to_ptr.vmem [resolvable:$true] %s480
          %486 = dma.hbm_to_vmem [thread:$0]  %s479, 4096, %s481, [#allocation24], 64, 64, 4
        $region56: #{enhanced_hybrid_encoder_forward.1} parent=11 // pred_fallthru
          _
        // Predicated region
        $region57: #{enhanced_hybrid_encoder_forward.1} parent=11 // pred_check
          %p487 = pneg %p307
        $region58: #{enhanced_hybrid_encoder_forward.1} parent=11 // pred_check_branch
          %489 = sbr.rel (%p487) target = $region60
        $region59: #{enhanced_hybrid_encoder_forward.1} parent=11 // pred_region
          %491 = vsyncadd [#allocation24], 0
          %s492 = sshll.u32 %s12, 4
          %s493 = int_to_ptr.hbm [resolvable:$true] %s492
          %s494 = sshll.u32 [#allocation25], 4
          %s495 = int_to_ptr.vmem [resolvable:$true] %s494
          %500 = dma.hbm_to_vmem [thread:$0]  %s493, 1280, %s495, [#allocation24], 640, 640, 40
        $region60: #{enhanced_hybrid_encoder_forward.1} parent=11 // pred_fallthru
          _
      $region12: #{enhanced_hybrid_encoder_forward.1} parent=5 // pred_fallthru
        _
      %p501 = scmp.lt.s32.totalorder %s29, 2
      // Predicated region
      $region61: #{enhanced_hybrid_encoder_forward.1} parent=5 // pred_check
        %p502 = pneg %p501
      $region62: #{enhanced_hybrid_encoder_forward.1} parent=5 // pred_check_branch
        %504 = sbr.rel (%p502) target = $region64
      $region63: #{enhanced_hybrid_encoder_forward.1} parent=5 // pred_region
        // Predicated region
        $region65: #{enhanced_hybrid_encoder_forward.1} parent=63 // pred_check
          %p505 = pneg %p49
        $region66: #{enhanced_hybrid_encoder_forward.1} parent=63 // pred_check_branch
          %507 = sbr.rel (%p505) target = $region68
        $region67: #{enhanced_hybrid_encoder_forward.1} parent=63 // pred_region
          %p508 = scmp.lt.s32.totalorder %s29, 1
          %s509 = scalar_select %p508, %s29, 1
          %s510 = smul.addr %s509, 8
          %s511 = smul.addr %s510, 8
          %s512 = scalar_lea.vmem %s0, %s511
        $region68: #{enhanced_hybrid_encoder_forward.1} parent=63 // pred_fallthru
          _
      $region64: #{enhanced_hybrid_encoder_forward.1} parent=5 // pred_fallthru
        _
      %p513 = scmp.le.s32.totalorder 1, %s29
      %p514 = scmp.lt.s32.totalorder %s29, 3
      %p515 = pnand %p513, %p514
      %p516 = pneg %p515
      // Predicated region
      $region69: #{enhanced_hybrid_encoder_forward.1} parent=5 // pred_check
        _
      $region70: #{enhanced_hybrid_encoder_forward.1} parent=5 // pred_check_branch
        %518 = sbr.rel (%p515) target = $region72
      $region71: #{enhanced_hybrid_encoder_forward.1} parent=5 // pred_region
        %s519 = ssub.s32 %s29, 1
        // Predicated region
        $region73: #{enhanced_hybrid_encoder_forward.1} parent=71 // pred_check
          %p520 = pneg %p76
        $region74: #{enhanced_hybrid_encoder_forward.1} parent=71 // pred_check_branch
          %522 = sbr.rel (%p520) target = $region76
        $region75: #{enhanced_hybrid_encoder_forward.1} parent=71 // pred_region
          %524 = dma.done [#allocation9], 192
        $region76: #{enhanced_hybrid_encoder_forward.1} parent=71 // pred_fallthru
          _
        // Predicated region
        $region77: #{enhanced_hybrid_encoder_forward.1} parent=71 // pred_check
          %p525 = pneg %p97
        $region78: #{enhanced_hybrid_encoder_forward.1} parent=71 // pred_check_branch
          %527 = sbr.rel (%p525) target = $region80
        $region79: #{enhanced_hybrid_encoder_forward.1} parent=71 // pred_region
          %529 = dma.done [#allocation12], 1536
        $region80: #{enhanced_hybrid_encoder_forward.1} parent=71 // pred_fallthru
          _
        // Predicated region
        $region81: #{enhanced_hybrid_encoder_forward.1} parent=71 // pred_check
          %p530 = pneg %p139
        $region82: #{enhanced_hybrid_encoder_forward.1} parent=71 // pred_check_branch
          %532 = sbr.rel (%p530) target = $region84
        $region83: #{enhanced_hybrid_encoder_forward.1} parent=71 // pred_region
          %534 = dma.done [#allocation12], 128
        $region84: #{enhanced_hybrid_encoder_forward.1} parent=71 // pred_fallthru
          _
        // Predicated region
        $region85: #{enhanced_hybrid_encoder_forward.1} parent=71 // pred_check
          %p535 = pneg %p160
        $region86: #{enhanced_hybrid_encoder_forward.1} parent=71 // pred_check_branch
          %537 = sbr.rel (%p535) target = $region88
        $region87: #{enhanced_hybrid_encoder_forward.1} parent=71 // pred_region
          %539 = dma.done [#allocation15], 64
        $region88: #{enhanced_hybrid_encoder_forward.1} parent=71 // pred_fallthru
          _
        // Predicated region
        $region89: #{enhanced_hybrid_encoder_forward.1} parent=71 // pred_check
          %p540 = pneg %p181
        $region90: #{enhanced_hybrid_encoder_forward.1} parent=71 // pred_check_branch
          %542 = sbr.rel (%p540) target = $region92
        $region91: #{enhanced_hybrid_encoder_forward.1} parent=71 // pred_region
          %544 = dma.done [#allocation15], 128
        $region92: #{enhanced_hybrid_encoder_forward.1} parent=71 // pred_fallthru
          _
        // Predicated region
        $region93: #{enhanced_hybrid_encoder_forward.1} parent=71 // pred_check
          %p545 = pneg %p202
        $region94: #{enhanced_hybrid_encoder_forward.1} parent=71 // pred_check_branch
          %547 = sbr.rel (%p545) target = $region96
        $region95: #{enhanced_hybrid_encoder_forward.1} parent=71 // pred_region
          %549 = dma.done [#allocation18], 3072
        $region96: #{enhanced_hybrid_encoder_forward.1} parent=71 // pred_fallthru
          _
        // Predicated region
        $region97: #{enhanced_hybrid_encoder_forward.1} parent=71 // pred_check
          %p550 = pneg %p223
        $region98: #{enhanced_hybrid_encoder_forward.1} parent=71 // pred_check_branch
          %552 = sbr.rel (%p550) target = $region100
        $region99: #{enhanced_hybrid_encoder_forward.1} parent=71 // pred_region
          %554 = dma.done [#allocation18], 1024
        $region100: #{enhanced_hybrid_encoder_forward.1} parent=71 // pred_fallthru
          _
        // Predicated region
        $region101: #{enhanced_hybrid_encoder_forward.1} parent=71 // pred_check
          %p555 = pneg %p244
        $region102: #{enhanced_hybrid_encoder_forward.1} parent=71 // pred_check_branch
          %557 = sbr.rel (%p555) target = $region104
        $region103: #{enhanced_hybrid_encoder_forward.1} parent=71 // pred_region
          %559 = dma.done [#allocation21], 4096
        $region104: #{enhanced_hybrid_encoder_forward.1} parent=71 // pred_fallthru
          _
        // Predicated region
        $region105: #{enhanced_hybrid_encoder_forward.1} parent=71 // pred_check
          %p560 = pneg %p265
        $region106: #{enhanced_hybrid_encoder_forward.1} parent=71 // pred_check_branch
          %562 = sbr.rel (%p560) target = $region108
        $region107: #{enhanced_hybrid_encoder_forward.1} parent=71 // pred_region
          %564 = dma.done [#allocation21], 4096
        $region108: #{enhanced_hybrid_encoder_forward.1} parent=71 // pred_fallthru
          _
        // Predicated region
        $region109: #{enhanced_hybrid_encoder_forward.1} parent=71 // pred_check
          %p565 = pneg %p286
        $region110: #{enhanced_hybrid_encoder_forward.1} parent=71 // pred_check_branch
          %567 = sbr.rel (%p565) target = $region112
        $region111: #{enhanced_hybrid_encoder_forward.1} parent=71 // pred_region
          %569 = dma.done [#allocation24], 4096
        $region112: #{enhanced_hybrid_encoder_forward.1} parent=71 // pred_fallthru
          _
        // Predicated region
        $region113: #{enhanced_hybrid_encoder_forward.1} parent=71 // pred_check
          %p570 = pneg %p307
        $region114: #{enhanced_hybrid_encoder_forward.1} parent=71 // pred_check_branch
          %572 = sbr.rel (%p570) target = $region116
        $region115: #{enhanced_hybrid_encoder_forward.1} parent=71 // pred_region
          %574 = dma.done [#allocation24], 1280
        $region116: #{enhanced_hybrid_encoder_forward.1} parent=71 // pred_fallthru
          _
        %p575 = scmp.lt.s32.totalorder %s34, 1
        %s576 = scalar_select %p575, %s34, 1
        %s577 = smul.addr %s576, 8
        %s578 = smul.addr %s577, 8
        %s579 = scalar_lea.vmem %s0, %s578
        %p580 = pneg %p55
        %p581 = pneg %p52
        %p582 = pneg %p76
        %p583 = pneg %p73
        %p584 = pneg %p97
        %p585 = pneg %p94
        %p586 = pneg %p118
        %p587 = pneg %p115
        %p588 = pneg %p139
        %p589 = pneg %p136
        %p590 = pneg %p160
        %p591 = pneg %p157
        %p592 = pneg %p181
        %p593 = pneg %p178
        %p594 = pneg %p202
        %p595 = pneg %p199
        %p596 = pneg %p223
        %p597 = pneg %p220
        %p598 = pneg %p244
        %p599 = pneg %p241
        %p600 = pneg %p265
        %p601 = pneg %p262
        %p602 = pneg %p286
        %p603 = pneg %p283
        %p604 = pneg %p307
        %p605 = pneg %p304
        %p606 = pneg %p333
        %p607 = pneg %p330
        %s608 = sand.u32 %s320, 1
        %s609 = scalar_lea.sflag [#allocation10], %s608
        %s610 = sand.u32 %s320, 1
        %s611 = scalar_lea.vmem [#allocation26], %s610
        %p612 = scmp.lt.s32.totalorder %s34, 1
        %s613 = scalar_select %p612, %s34, 1
        %s614 = smul.addr %s613, 8
        %s615 = smul.addr %s614, 8
        %s616 = scalar_lea.vmem %s0, %s615
        // Predicated region
        $region117: #{enhanced_hybrid_encoder_forward.1} parent=71 // pred_check
          _
        $region118: #{enhanced_hybrid_encoder_forward.1} parent=71 // pred_check_branch
          %619 = sbr.rel target = $region120
        $region119: #{enhanced_hybrid_encoder_forward.1} parent=71 // pred_region
          %620 = sst [smem:[#allocation29]] [#allocation28]
          %621 = sst [smem:[#allocation30]] [#allocation27]
        $region120: #{enhanced_hybrid_encoder_forward.1} parent=71 // pred_fallthru
          _
        %623 = shalt.err (0)
        %s625 = sshll.u32 %s13, 4
        %s626 = int_to_ptr.hbm [resolvable:$true] %s625
        %s627 = sshll.u32 [#allocation2], 4
        %s628 = int_to_ptr.vmem [resolvable:$true] %s627
        %630 = dma.hbm_to_vmem [thread:$0]  %s626, 40960, %s628, [#allocation3]
        %v631 = vld [vmem:[%s616] sm:$0xff]
        %v632 = vld [vmem:[%s616 + $0x8] sm:$0xff]
        %v633 = vld [vmem:[%s616 + $0x10] sm:$0xff]
        %v634 = vld [vmem:[%s616 + $0x18] sm:$0xff]
        %v635 = vld [vmem:[%s616 + $0x20] sm:$0xff]
        %v636 = vld [vmem:[%s616 + $0x28] sm:$0xff]
        %v637 = vld [vmem:[%s616 + $0x30] sm:$0xff]
        %v638 = vld [vmem:[%s616 + $0x38] sm:$0xff]
        %v639 = vpack.c.bf16 %v632, %v631
        %v640 = vpack.c.bf16 %v634, %v633
        %v641 = vpack.c.bf16 %v636, %v635
        %v642 = vpack.c.bf16 %v638, %v637
        %v643 = vld [vmem:[#allocation8] sm:$0xf]
        %v644 = vld [vmem:[#allocation8 + $0x4] sm:$0xf]
        %v645 = vld [vmem:[#allocation8 + $0x8] sm:$0x3]
        %v646 = vld [vmem:[#allocation25] ss:$0 sm:$0xff]
        %v650 = vunpack.c.l.b16 %v643
        %v651 = vunpack.c.l.b16 %v644
        %v652 = vunpack.c.l.b16 %v645
        %v653 = vpack.c.b16 %v651, %v650
        %v654 = vpack.c.b16 %v652, %v652
        %vm656 = vcmask 162816
        %v658 = vsel %vm656, %v639, 0
        %v661 = vsel %vm656, %v640, 0
        %v664 = vsel %vm656, %v641, 0
        %v667 = vsel %vm656, %v642, 0
        %vm669 = vcmask 1041408
        %v671 = vsel %vm669, %v654, 0
        %673 = vmatpush.bf16.msra.mxu0 0
        %674 = vmatpush.bf16.msra.mxu0 0
        %675 = vmatpush.bf16.msra.mxu0 0
        %676 = vmatpush.bf16.msra.mxu0 0
        %677 = vmatpush.bf16.msra.mxu0 0
        %678 = vmatpush.bf16.msra.mxu0 0
        %679 = vmatpush.bf16.msra.mxu0 %v671
        %680 = vmatpush.bf16.msra.mxu0 %v653
        %681 = vmatmul.bf16.gmra.mxu0 %v658
        %v682 = vpop.f32.mrf.mxu0
        %v683 = vadd.f32 %v646, %v682
        %v684 = vpop.f32.mrf.mxu0
        %v685 = vadd.f32 %v646, %v684
        %686 = vmatmul.bf16.gmra.mxu0 %v661
        %v687 = vpop.f32.mrf.mxu0
        %v688 = vadd.f32 %v646, %v687
        %v689 = vpop.f32.mrf.mxu0
        %v690 = vadd.f32 %v646, %v689
        %691 = vmatmul.bf16.gmra.mxu0 %v664
        %v692 = vpop.f32.mrf.mxu0
        %v693 = vadd.f32 %v646, %v692
        %v694 = vpop.f32.mrf.mxu0
        %v695 = vadd.f32 %v646, %v694
        %696 = vmatmul.bf16.gmra.mxu0 %v667
        %v697 = vpop.f32.mrf.mxu0
        %v698 = vadd.f32 %v646, %v697
        %v699 = vpop.f32.mrf.mxu0
        %v700 = vadd.f32 %v646, %v699
        %701 = vdwg.mxu0
        %v702 = vmul.f32 %v683, 0.5
        %v703 = vmul.f32 %v685, 0.5
        %v704 = vmul.f32 %v688, 0.5
        %v705 = vmul.f32 %v690, 0.5
        %v706 = vmul.f32 %v693, 0.5
        %v707 = vmul.f32 %v695, 0.5
        %v708 = vmul.f32 %v698, 0.5
        %v709 = vmul.f32 %v700, 0.5
        %v710 = vmul.f32 %v683, 0.044715
        %v711 = vmul.f32 %v685, 0.044715
        %v712 = vmul.f32 %v688, 0.044715
        %v713 = vmul.f32 %v690, 0.044715
        %v714 = vmul.f32 %v693, 0.044715
        %v715 = vmul.f32 %v695, 0.044715
        %v716 = vmul.f32 %v698, 0.044715
        %v717 = vmul.f32 %v700, 0.044715
        %v718 = vmul.f32 %v710, %v683
        %v719 = vmul.f32 %v711, %v685
        %v720 = vmul.f32 %v712, %v688
        %v721 = vmul.f32 %v713, %v690
        %v722 = vmul.f32 %v714, %v693
        %v723 = vmul.f32 %v715, %v695
        %v724 = vmul.f32 %v716, %v698
        %v725 = vmul.f32 %v717, %v700
        %v726 = vmul.f32 %v718, %v683
        %v727 = vmul.f32 %v719, %v685
        %v728 = vmul.f32 %v720, %v688
        %v729 = vmul.f32 %v721, %v690
        %v730 = vmul.f32 %v722, %v693
        %v731 = vmul.f32 %v723, %v695
        %v732 = vmul.f32 %v724, %v698
        %v733 = vmul.f32 %v725, %v700
        %v734 = vadd.f32 %v683, %v726
        %v735 = vadd.f32 %v685, %v727
        %v736 = vadd.f32 %v688, %v728
        %v737 = vadd.f32 %v690, %v729
        %v738 = vadd.f32 %v693, %v730
        %v739 = vadd.f32 %v695, %v731
        %v740 = vadd.f32 %v698, %v732
        %v741 = vadd.f32 %v700, %v733
        %v742 = vmul.f32 %v734, 0.7978846
        %v743 = vmul.f32 %v735, 0.7978846
        %v744 = vmul.f32 %v736, 0.7978846
        %v745 = vmul.f32 %v737, 0.7978846
        %v746 = vmul.f32 %v738, 0.7978846
        %v747 = vmul.f32 %v739, 0.7978846
        %v748 = vmul.f32 %v740, 0.7978846
        %v749 = vmul.f32 %v741, 0.7978846
        %v750 = vtanh.pop %v742
        %v751 = vtanh.pop %v743
        %v752 = vtanh.pop %v744
        %v753 = vtanh.pop %v745
        %v754 = vtanh.pop %v746
        %v755 = vtanh.pop %v747
        %v756 = vtanh.pop %v748
        %v757 = vtanh.pop %v749
        %v758 = vadd.f32 %v750, 1.0
        %v759 = vadd.f32 %v751, 1.0
        %v760 = vadd.f32 %v752, 1.0
        %v761 = vadd.f32 %v753, 1.0
        %v762 = vadd.f32 %v754, 1.0
        %v763 = vadd.f32 %v755, 1.0
        %v764 = vadd.f32 %v756, 1.0
        %v765 = vadd.f32 %v757, 1.0
        %v766 = vmul.f32 %v702, %v758
        %v767 = vmul.f32 %v703, %v759
        %v768 = vmul.f32 %v704, %v760
        %v769 = vmul.f32 %v705, %v761
        %v770 = vmul.f32 %v706, %v762
        %v771 = vmul.f32 %v707, %v763
        %v772 = vmul.f32 %v708, %v764
        %v773 = vmul.f32 %v709, %v765
        %vm774 = vcmask 523264
        %775 = vst.msk [vmem:[#allocation4] sm:$0xff] %vm774, %v766
        %776 = vst.msk [vmem:[#allocation4 + $0x8] sm:$0xff] %vm774, %v767
        %777 = vst.msk [vmem:[#allocation4 + $0x10] sm:$0xff] %vm774, %v768
        %778 = vst.msk [vmem:[#allocation4 + $0x18] sm:$0xff] %vm774, %v769
        %779 = vst.msk [vmem:[#allocation4 + $0x20] sm:$0xff] %vm774, %v770
        %780 = vst.msk [vmem:[#allocation4 + $0x28] sm:$0xff] %vm774, %v771
        %781 = vst.msk [vmem:[#allocation4 + $0x30] sm:$0xff] %vm774, %v772
        %782 = vst.msk [vmem:[#allocation4 + $0x38] sm:$0xff] %vm774, %v773
        %v783 = vld [vmem:[#allocation4] sm:$0xff]
        %v784 = vld [vmem:[#allocation4 + $0x8] sm:$0xff]
        %v785 = vld [vmem:[#allocation4 + $0x10] sm:$0xff]
        %v786 = vld [vmem:[#allocation4 + $0x18] sm:$0xff]
        %v787 = vld [vmem:[#allocation4 + $0x20] sm:$0xff]
        %v788 = vld [vmem:[#allocation4 + $0x28] sm:$0xff]
        %v789 = vld [vmem:[#allocation4 + $0x30] sm:$0xff]
        %v790 = vld [vmem:[#allocation4 + $0x38] sm:$0x7f]
        %vm799 = vcmask 1040384
        %v800 = vrot.slane %v783, 7
        %v801 = vrot.slane %v784, 7
        %v802 = vsel %vm799, %v800, %v801
        %v803 = vrot.slane %v785, 7
        %v804 = vsel %vm799, %v801, %v803
        %v805 = vrot.slane %v786, 7
        %v806 = vsel %vm799, %v803, %v805
        %v807 = vrot.slane %v787, 7
        %v808 = vsel %vm799, %v805, %v807
        %v809 = vrot.slane %v788, 7
        %v810 = vsel %vm799, %v807, %v809
        %v811 = vrot.slane %v789, 7
        %v812 = vsel %vm799, %v809, %v811
        %v813 = vrot.slane %v790, 7
        %v814 = vsel %vm799, %v811, %v813
        %vm823 = vcmask 523265
        %824 = vst.msk [vmem:[#allocation5] sm:$0xfe] %vm823, %v800
        %825 = vst.msk [vmem:[#allocation5 + $0x10] sm:$0xff] %vm774, %v802
        %826 = vst.msk [vmem:[#allocation5 + $0x20] sm:$0xff] %vm774, %v804
        %827 = vst.msk [vmem:[#allocation5 + $0x30] sm:$0xff] %vm774, %v806
        %828 = vst.msk [vmem:[#allocation5 + $0x40] sm:$0xff] %vm774, %v808
        %829 = vst.msk [vmem:[#allocation5 + $0x50] sm:$0xff] %vm774, %v810
        %830 = vst.msk [vmem:[#allocation5 + $0x60] sm:$0xff] %vm774, %v812
        %831 = vst.msk [vmem:[#allocation5 + $0x70] sm:$0xff] %vm774, %v814
        %vm832 = vcmask 516096
        %833 = vst.msk [vmem:[#allocation5] sm:$0x1] %vm832, 0.0
        %842 = vrot.lane.b32.xlu0 %v766, 64
        %v843 = vpop.permute.xlu0 %842
        %844 = vrot.lane.b32.xlu0 %v767, 64
        %v845 = vpop.permute.xlu0 %844
        %846 = vrot.lane.b32.xlu0 %v768, 64
        %v847 = vpop.permute.xlu0 %846
        %848 = vrot.lane.b32.xlu0 %v769, 64
        %v849 = vpop.permute.xlu0 %848
        %850 = vrot.lane.b32.xlu0 %v770, 64
        %v851 = vpop.permute.xlu0 %850
        %852 = vrot.lane.b32.xlu0 %v771, 64
        %v853 = vpop.permute.xlu0 %852
        %854 = vrot.lane.b32.xlu0 %v772, 64
        %v855 = vpop.permute.xlu0 %854
        %856 = vrot.lane.b32.xlu0 %v773, 64
        %v857 = vpop.permute.xlu0 %856
        %vm866 = vcmask 1048064
        %867 = vst.msk [vmem:[#allocation5] sm:$0xff] %vm866, %v843
        %868 = vst.msk [vmem:[#allocation5 + $0x10] sm:$0xff] %vm866, %v845
        %869 = vst.msk [vmem:[#allocation5 + $0x20] sm:$0xff] %vm866, %v847
        %870 = vst.msk [vmem:[#allocation5 + $0x30] sm:$0xff] %vm866, %v849
        %871 = vst.msk [vmem:[#allocation5 + $0x40] sm:$0xff] %vm866, %v851
        %872 = vst.msk [vmem:[#allocation5 + $0x50] sm:$0xff] %vm866, %v853
        %873 = vst.msk [vmem:[#allocation5 + $0x60] sm:$0xff] %vm866, %v855
        %874 = vst.msk [vmem:[#allocation5 + $0x70] sm:$0xff] %vm866, %v857
        %v875 = vld [vmem:[#allocation4 + $0x1] sm:$0xff]
        %v876 = vld [vmem:[#allocation4 + $0x9] sm:$0xff]
        %v877 = vld [vmem:[#allocation4 + $0x11] sm:$0xff]
        %v878 = vld [vmem:[#allocation4 + $0x19] sm:$0xff]
        %v879 = vld [vmem:[#allocation4 + $0x21] sm:$0xff]
        %v880 = vld [vmem:[#allocation4 + $0x29] sm:$0xff]
        %v881 = vld [vmem:[#allocation4 + $0x31] sm:$0xff]
        %v882 = vld [vmem:[#allocation4 + $0x39] sm:$0x7f]
        %883 = vst.msk [vmem:[#allocation5 + $0x8] sm:$0xff] %vm774, %v875
        %884 = vst.msk [vmem:[#allocation5 + $0x18] sm:$0xff] %vm774, %v876
        %885 = vst.msk [vmem:[#allocation5 + $0x28] sm:$0xff] %vm774, %v877
        %886 = vst.msk [vmem:[#allocation5 + $0x38] sm:$0xff] %vm774, %v878
        %887 = vst.msk [vmem:[#allocation5 + $0x48] sm:$0xff] %vm774, %v879
        %888 = vst.msk [vmem:[#allocation5 + $0x58] sm:$0xff] %vm774, %v880
        %889 = vst.msk [vmem:[#allocation5 + $0x68] sm:$0xff] %vm774, %v881
        %vm890 = vcmask 522240
        %891 = vst.msk [vmem:[#allocation5 + $0x78] sm:$0x7f] %vm890, %v882
        %892 = vst.msk [vmem:[#allocation5 + $0x7f] sm:$0x1] %vm832, 0.0
        %v893 = vld [vmem:[#allocation5] sm:$0xff]
        %v894 = vld [vmem:[#allocation5 + $0x8] sm:$0xff]
        %v895 = vld [vmem:[#allocation5 + $0x10] sm:$0xff]
        %v896 = vld [vmem:[#allocation5 + $0x18] sm:$0xff]
        %v897 = vld [vmem:[#allocation5 + $0x20] sm:$0xff]
        %v898 = vld [vmem:[#allocation5 + $0x28] sm:$0xff]
        %v899 = vld [vmem:[#allocation5 + $0x30] sm:$0xff]
        %v900 = vld [vmem:[#allocation5 + $0x38] sm:$0xff]
        %v901 = vld [vmem:[#allocation5 + $0x40] sm:$0xff]
        %v902 = vld [vmem:[#allocation5 + $0x48] sm:$0xff]
        %v903 = vld [vmem:[#allocation5 + $0x50] sm:$0xff]
        %v904 = vld [vmem:[#allocation5 + $0x58] sm:$0xff]
        %v905 = vld [vmem:[#allocation5 + $0x60] sm:$0xff]
        %v906 = vld [vmem:[#allocation5 + $0x68] sm:$0xff]
        %v907 = vld [vmem:[#allocation5 + $0x70] sm:$0xff]
        %v908 = vld [vmem:[#allocation5 + $0x78] sm:$0xff]
        %v909 = vpack.c.bf16 %v895, %v893
        %v910 = vpack.c.bf16 %v896, %v894
        %v911 = vpack.c.bf16 %v899, %v897
        %v912 = vpack.c.bf16 %v900, %v898
        %v913 = vpack.c.bf16 %v903, %v901
        %v914 = vpack.c.bf16 %v904, %v902
        %v915 = vpack.c.bf16 %v907, %v905
        %v916 = vpack.c.bf16 %v908, %v906
        %v917 = vld [vmem:[#allocation11] sm:$0xf]
        %v918 = vld [vmem:[#allocation11 + $0x4] sm:$0xf]
        %v919 = vld [vmem:[#allocation11 + $0x8] sm:$0xf]
        %v920 = vld [vmem:[#allocation11 + $0xc] sm:$0xf]
        %v921 = vld [vmem:[#allocation11 + $0x10] sm:$0xf]
        %v922 = vld [vmem:[#allocation11 + $0x14] sm:$0xf]
        %v923 = vld [vmem:[#allocation11 + $0x18] sm:$0xf]
        %v924 = vld [vmem:[#allocation11 + $0x1c] sm:$0xf]
        %v925 = vld [vmem:[#allocation11 + $0x20] sm:$0xf]
        %v926 = vld [vmem:[#allocation11 + $0x24] sm:$0xf]
        %v927 = vld [vmem:[#allocation11 + $0x28] sm:$0xf]
        %v928 = vld [vmem:[#allocation11 + $0x2c] sm:$0xf]
        %v929 = vld [vmem:[#allocation11 + $0x30] sm:$0xf]
        %v930 = vld [vmem:[#allocation11 + $0x34] sm:$0xf]
        %v931 = vld [vmem:[#allocation11 + $0x38] sm:$0xf]
        %v932 = vld [vmem:[#allocation11 + $0x3c] sm:$0xf]
        %v933 = vld [vmem:[#allocation11 + $0x40] sm:$0xf]
        %v934 = vld [vmem:[#allocation11 + $0x44] sm:$0xf]
        %v935 = vld [vmem:[#allocation11 + $0x48] sm:$0xf]
        %v936 = vld [vmem:[#allocation11 + $0x4c] sm:$0xf]
        %v937 = vld [vmem:[#allocation11 + $0x50] sm:$0xf]
        %v938 = vld [vmem:[#allocation11 + $0x54] sm:$0xf]
        %v939 = vld [vmem:[#allocation11 + $0x58] sm:$0xf]
        %v940 = vld [vmem:[#allocation11 + $0x5c] sm:$0xf]
        %v941 = vld [vmem:[#allocation25 + $0x1] ss:$0 sm:$0xff]
        %v966 = vunpack.c.l.b16 %v917
        %v967 = vunpack.c.l.b16 %v918
        %v968 = vunpack.c.l.b16 %v919
        %v969 = vunpack.c.l.b16 %v920
        %v970 = vunpack.c.l.b16 %v921
        %v971 = vunpack.c.l.b16 %v922
        %v972 = vunpack.c.l.b16 %v923
        %v973 = vunpack.c.l.b16 %v924
        %v974 = vunpack.c.l.b16 %v925
        %v975 = vunpack.c.l.b16 %v926
        %v976 = vunpack.c.l.b16 %v927
        %v977 = vunpack.c.l.b16 %v928
        %v978 = vunpack.c.l.b16 %v929
        %v979 = vunpack.c.l.b16 %v930
        %v980 = vunpack.c.l.b16 %v931
        %v981 = vunpack.c.l.b16 %v932
        %v982 = vunpack.c.l.b16 %v933
        %v983 = vunpack.c.l.b16 %v934
        %v984 = vunpack.c.l.b16 %v935
        %v985 = vunpack.c.l.b16 %v936
        %v986 = vunpack.c.l.b16 %v937
        %v987 = vunpack.c.l.b16 %v938
        %v988 = vunpack.c.l.b16 %v939
        %v989 = vunpack.c.l.b16 %v940
        %v990 = vpack.c.b16 %v967, %v966
        %v991 = vpack.c.b16 %v969, %v968
        %v992 = vpack.c.b16 %v971, %v970
        %v993 = vpack.c.b16 %v973, %v972
        %v994 = vpack.c.b16 %v975, %v974
        %v995 = vpack.c.b16 %v977, %v976
        %v996 = vpack.c.b16 %v979, %v978
        %v997 = vpack.c.b16 %v981, %v980
        %v998 = vpack.c.b16 %v983, %v982
        %v999 = vpack.c.b16 %v985, %v984
        %v1000 = vpack.c.b16 %v987, %v986
        %v1001 = vpack.c.b16 %v989, %v988
        %v1015 = vsel %vm774, %v910, 0
        %v1018 = vsel %vm774, %v912, 0
        %v1021 = vsel %vm774, %v914, 0
        %v1024 = vsel %vm774, %v916, 0
        %1026 = vmatpush.bf16.msra.mxu0 %v997
        %1027 = vmatpush.bf16.msra.mxu0 %v996
        %1028 = vmatpush.bf16.msra.mxu0 %v995
        %1029 = vmatpush.bf16.msra.mxu0 %v994
        %1030 = vmatpush.bf16.msra.mxu0 %v993
        %1031 = vmatpush.bf16.msra.mxu0 %v992
        %1032 = vmatpush.bf16.msra.mxu0 %v991
        %1033 = vmatpush.bf16.msra.mxu0 %v990
        %1034 = vmatmul.bf16.gmra.mxu0 %v909
        %v1035 = vpop.f32.mrf.mxu0
        %v1036 = vadd.f32 %v941, %v1035
        %v1037 = vpop.f32.mrf.mxu0
        %v1038 = vadd.f32 %v941, %v1037
        %1039 = vmatmul.bf16.gmra.mxu0 %v911
        %v1040 = vpop.f32.mrf.mxu0
        %v1041 = vadd.f32 %v941, %v1040
        %v1042 = vpop.f32.mrf.mxu0
        %v1043 = vadd.f32 %v941, %v1042
        %1044 = vmatmul.bf16.gmra.mxu0 %v913
        %v1045 = vpop.f32.mrf.mxu0
        %v1046 = vadd.f32 %v941, %v1045
        %v1047 = vpop.f32.mrf.mxu0
        %v1048 = vadd.f32 %v941, %v1047
        %1049 = vmatmul.bf16.gmra.mxu0 %v915
        %v1050 = vpop.f32.mrf.mxu0
        %v1051 = vadd.f32 %v941, %v1050
        %v1052 = vpop.f32.mrf.mxu0
        %v1053 = vadd.f32 %v941, %v1052
        %1054 = vdwg.mxu0
        %1055 = vmatpush.bf16.msra.mxu0 0
        %1056 = vmatpush.bf16.msra.mxu0 0
        %1057 = vmatpush.bf16.msra.mxu0 0
        %1058 = vmatpush.bf16.msra.mxu0 0
        %1059 = vmatpush.bf16.msra.mxu0 %v1001
        %1060 = vmatpush.bf16.msra.mxu0 %v1000
        %1061 = vmatpush.bf16.msra.mxu0 %v999
        %1062 = vmatpush.bf16.msra.mxu0 %v998
        %1063 = vmatmul.bf16.gmra.mxu0 %v1015
        %v1064 = vpop.f32.mrf.mxu0
        %v1065 = vadd.f32 %v1036, %v1064
        %v1066 = vpop.f32.mrf.mxu0
        %v1067 = vadd.f32 %v1038, %v1066
        %1068 = vmatmul.bf16.gmra.mxu0 %v1018
        %v1069 = vpop.f32.mrf.mxu0
        %v1070 = vadd.f32 %v1041, %v1069
        %v1071 = vpop.f32.mrf.mxu0
        %v1072 = vadd.f32 %v1043, %v1071
        %1073 = vmatmul.bf16.gmra.mxu0 %v1021
        %v1074 = vpop.f32.mrf.mxu0
        %v1075 = vadd.f32 %v1046, %v1074
        %v1076 = vpop.f32.mrf.mxu0
        %v1077 = vadd.f32 %v1048, %v1076
        %1078 = vmatmul.bf16.gmra.mxu0 %v1024
        %v1079 = vpop.f32.mrf.mxu0
        %v1080 = vadd.f32 %v1051, %v1079
        %v1081 = vpop.f32.mrf.mxu0
        %v1082 = vadd.f32 %v1053, %v1081
        %1083 = vdwg.mxu0
        %v1084 = vmul.f32 %v1065, 0.5
        %v1085 = vmul.f32 %v1067, 0.5
        %v1086 = vmul.f32 %v1070, 0.5
        %v1087 = vmul.f32 %v1072, 0.5
        %v1088 = vmul.f32 %v1075, 0.5
        %v1089 = vmul.f32 %v1077, 0.5
        %v1090 = vmul.f32 %v1080, 0.5
        %v1091 = vmul.f32 %v1082, 0.5
        %v1092 = vmul.f32 %v1065, 0.044715
        %v1093 = vmul.f32 %v1067, 0.044715
        %v1094 = vmul.f32 %v1070, 0.044715
        %v1095 = vmul.f32 %v1072, 0.044715
        %v1096 = vmul.f32 %v1075, 0.044715
        %v1097 = vmul.f32 %v1077, 0.044715
        %v1098 = vmul.f32 %v1080, 0.044715
        %v1099 = vmul.f32 %v1082, 0.044715
        %v1100 = vmul.f32 %v1092, %v1065
        %v1101 = vmul.f32 %v1093, %v1067
        %v1102 = vmul.f32 %v1094, %v1070
        %v1103 = vmul.f32 %v1095, %v1072
        %v1104 = vmul.f32 %v1096, %v1075
        %v1105 = vmul.f32 %v1097, %v1077
        %v1106 = vmul.f32 %v1098, %v1080
        %v1107 = vmul.f32 %v1099, %v1082
        %v1108 = vmul.f32 %v1100, %v1065
        %v1109 = vmul.f32 %v1101, %v1067
        %v1110 = vmul.f32 %v1102, %v1070
        %v1111 = vmul.f32 %v1103, %v1072
        %v1112 = vmul.f32 %v1104, %v1075
        %v1113 = vmul.f32 %v1105, %v1077
        %v1114 = vmul.f32 %v1106, %v1080
        %v1115 = vmul.f32 %v1107, %v1082
        %v1116 = vadd.f32 %v1065, %v1108
        %v1117 = vadd.f32 %v1067, %v1109
        %v1118 = vadd.f32 %v1070, %v1110
        %v1119 = vadd.f32 %v1072, %v1111
        %v1120 = vadd.f32 %v1075, %v1112
        %v1121 = vadd.f32 %v1077, %v1113
        %v1122 = vadd.f32 %v1080, %v1114
        %v1123 = vadd.f32 %v1082, %v1115
        %v1124 = vmul.f32 %v1116, 0.7978846
        %v1125 = vmul.f32 %v1117, 0.7978846
        %v1126 = vmul.f32 %v1118, 0.7978846
        %v1127 = vmul.f32 %v1119, 0.7978846
        %v1128 = vmul.f32 %v1120, 0.7978846
        %v1129 = vmul.f32 %v1121, 0.7978846
        %v1130 = vmul.f32 %v1122, 0.7978846
        %v1131 = vmul.f32 %v1123, 0.7978846
        %v1132 = vtanh.pop %v1124
        %v1133 = vtanh.pop %v1125
        %v1134 = vtanh.pop %v1126
        %v1135 = vtanh.pop %v1127
        %v1136 = vtanh.pop %v1128
        %v1137 = vtanh.pop %v1129
        %v1138 = vtanh.pop %v1130
        %v1139 = vtanh.pop %v1131
        %v1140 = vadd.f32 %v1132, 1.0
        %v1141 = vadd.f32 %v1133, 1.0
        %v1142 = vadd.f32 %v1134, 1.0
        %v1143 = vadd.f32 %v1135, 1.0
        %v1144 = vadd.f32 %v1136, 1.0
        %v1145 = vadd.f32 %v1137, 1.0
        %v1146 = vadd.f32 %v1138, 1.0
        %v1147 = vadd.f32 %v1139, 1.0
        %v1148 = vmul.f32 %v1084, %v1140
        %v1149 = vmul.f32 %v1085, %v1141
        %v1150 = vmul.f32 %v1086, %v1142
        %v1151 = vmul.f32 %v1087, %v1143
        %v1152 = vmul.f32 %v1088, %v1144
        %v1153 = vmul.f32 %v1089, %v1145
        %v1154 = vmul.f32 %v1090, %v1146
        %v1155 = vmul.f32 %v1091, %v1147
        %v1156 = vadd.f32 %v1148, %v1149
        %v1157 = vadd.f32 %v1156, %v1150
        %v1158 = vadd.f32 %v1157, %v1151
        %v1159 = vadd.f32 %v1158, %v1152
        %v1160 = vadd.f32 %v1159, %v1153
        %v1161 = vadd.f32 %v1160, %v1154
        %v1162 = vadd.f32 %v1161, %v1155
        %v1163 = vrot.slane %v1162, 4
        %v1164 = vadd.f32 %v1162, %v1163
        %v1165 = vrot.slane %v1164, 2
        %v1166 = vadd.f32 %v1164, %v1165
        %v1167 = vrot.slane %v1166, 1
        %v1168 = vadd.f32 %v1166, %v1167
        %v1169 = vrcp.pop 64.0
        %v1170 = vmul.f32 64.0, %v1169
        %v1171 = vsub.f32 1.0, %v1170
        %v1172 = vmul.f32 %v1169, %v1171
        %v1173 = vadd.f32 %v1169, %v1172
        %vm1174 = vweird.f32 %v1169
        %v1175 = vsel %vm1174, %v1169, %v1173
        %v1176 = vmul.f32 %v1168, %v1175
        %v1177 = vmax.f32 %v1148, %v1152
        %v1178 = vmax.f32 %v1149, %v1153
        %v1179 = vmax.f32 %v1150, %v1154
        %v1180 = vmax.f32 %v1151, %v1155
        %v1181 = vmax.f32 %v1177, %v1178
        %v1182 = vmax.f32 %v1179, %v1180
        %v1183 = vmax.f32 %v1181, %v1182
        %v1184 = vrot.slane %v1183, 4
        %v1185 = vmax.f32 %v1183, %v1184
        %v1186 = vrot.slane %v1185, 2
        %v1187 = vmax.f32 %v1185, %v1186
        %v1188 = vrot.slane %v1187, 1
        %v1189 = vmax.f32 %v1187, %v1188
        %v1190 = vlaneseq
        %v1191 = vshrl.u32 %v1190, 7
        %vm1192 = vcmp.eq.s32.totalorder %v1191, 0
        %v1193 = vsel %vm1192, %v1176, %v1189
        %v1194 = vpack.c.bf16 %v1193, %v1193
        %v1195 = vld [vmem:[%s3] sm:$0xf]
        %v1196 = vld [vmem:[%s3 + $0x4] sm:$0xf]
        %v1197 = vld [vmem:[%s3 + $0x8] sm:$0xf]
        %v1198 = vld [vmem:[%s3 + $0xc] sm:$0xf]
        %v1199 = vld [vmem:[%s3 + $0x10] sm:$0xf]
        %v1200 = vld [vmem:[%s3 + $0x14] sm:$0xf]
        %v1201 = vld [vmem:[%s3 + $0x18] sm:$0xf]
        %v1202 = vld [vmem:[%s3 + $0x1c] sm:$0xf]
        %v1203 = vld [vmem:[%s3 + $0x20] sm:$0xf]
        %v1204 = vld [vmem:[%s3 + $0x24] sm:$0xf]
        %v1205 = vld [vmem:[%s3 + $0x28] sm:$0xf]
        %v1206 = vld [vmem:[%s3 + $0x2c] sm:$0xf]
        %v1207 = vld [vmem:[%s3 + $0x30] sm:$0xf]
        %v1208 = vld [vmem:[%s3 + $0x34] sm:$0xf]
        %v1209 = vld [vmem:[%s3 + $0x38] sm:$0xf]
        %v1210 = vld [vmem:[%s3 + $0x3c] sm:$0xf]
        %v1211 = vld [vmem:[#allocation25 + $0x2] ss:$0 sm:$0xff]
        %v1228 = vunpack.c.l.b16 %v1195
        %v1229 = vunpack.c.l.b16 %v1196
        %v1230 = vunpack.c.l.b16 %v1197
        %v1231 = vunpack.c.l.b16 %v1198
        %v1232 = vunpack.c.l.b16 %v1199
        %v1233 = vunpack.c.l.b16 %v1200
        %v1234 = vunpack.c.l.b16 %v1201
        %v1235 = vunpack.c.l.b16 %v1202
        %v1236 = vunpack.c.l.b16 %v1203
        %v1237 = vunpack.c.l.b16 %v1204
        %v1238 = vunpack.c.l.b16 %v1205
        %v1239 = vunpack.c.l.b16 %v1206
        %v1240 = vunpack.c.l.b16 %v1207
        %v1241 = vunpack.c.l.b16 %v1208
        %v1242 = vunpack.c.l.b16 %v1209
        %v1243 = vunpack.c.l.b16 %v1210
        %v1244 = vpack.c.b16 %v1229, %v1228
        %v1245 = vpack.c.b16 %v1231, %v1230
        %v1246 = vpack.c.b16 %v1233, %v1232
        %v1247 = vpack.c.b16 %v1235, %v1234
        %v1248 = vpack.c.b16 %v1237, %v1236
        %v1249 = vpack.c.b16 %v1239, %v1238
        %v1250 = vpack.c.b16 %v1241, %v1240
        %v1251 = vpack.c.b16 %v1243, %v1242
        %1260 = vmatpush.bf16.msra.mxu0 %v1251
        %1261 = vmatpush.bf16.msra.mxu0 %v1250
        %1262 = vmatpush.bf16.msra.mxu0 %v1249
        %1263 = vmatpush.bf16.msra.mxu0 %v1248
        %1264 = vmatpush.bf16.msra.mxu0 %v1247
        %1265 = vmatpush.bf16.msra.mxu0 %v1246
        %1266 = vmatpush.bf16.msra.mxu0 %v1245
        %1267 = vmatpush.bf16.msra.mxu0 %v1244
        %1268 = vmatmul.bf16.gmra.mxu0 %v1194
        %v1269 = vpop.f32.mrf.mxu0
        %v1270 = vadd.f32 %v1211, %v1269
        %v1271 = vpop.f32.mrf.mxu0
        %1272 = vdwg.mxu0
        %v1273 = vmax.f32 %v1270, 0.0
        %v1274 = vpack.c.bf16 %v1273, %v1273
        %v1275 = vld [vmem:[#allocation13] sm:$0xf]
        %v1276 = vld [vmem:[#allocation13 + $0x4] sm:$0xf]
        %v1277 = vld [vmem:[#allocation25 + $0x3] ss:$0 sm:$0xff]
        %v1280 = vunpack.c.l.b16 %v1275
        %v1281 = vunpack.c.l.b16 %v1276
        %v1282 = vpack.c.b16 %v1281, %v1280
        %vm1284 = vcmask 130048
        %v1286 = vsel %vm1284, %v1274, 0
        %1288 = vmatpush.bf16.msra.mxu0 0
        %1289 = vmatpush.bf16.msra.mxu0 0
        %1290 = vmatpush.bf16.msra.mxu0 0
        %1291 = vmatpush.bf16.msra.mxu0 0
        %1292 = vmatpush.bf16.msra.mxu0 0
        %1293 = vmatpush.bf16.msra.mxu0 0
        %1294 = vmatpush.bf16.msra.mxu0 0
        %1295 = vmatpush.bf16.msra.mxu0 %v1282
        %1296 = vmatmul.bf16.gmra.mxu0 %v1286
        %v1297 = vpop.f32.mrf.mxu0
        %v1298 = vadd.f32 %v1277, %v1297
        %v1299 = vpop.f32.mrf.mxu0
        %1300 = vdwg.mxu0
        %v1301 = vxor.u32 %v1298, 2147483648
        %v1302 = vmul.f32 %v1301, 1.442695
        %v1303 = vpow.pop %v1302
        %v1304 = vadd.f32 %v1303, 1.0
        %v1305 = vrcp.pop %v1304
        %v1306 = vmul.f32 %v1304, %v1305
        %v1307 = vsub.f32 1.0, %v1306
        %v1308 = vmul.f32 %v1305, %v1307
        %v1309 = vadd.f32 %v1305, %v1308
        %vm1310 = vweird.f32 %v1304
        %vm1311 = vweird.f32 %v1305
        %vm1312 = vmor %vm1310, %vm1311
        %v1313 = vsel %vm1312, %v1305, %v1309
        %v1314 = vand.u32 2147483647, %v1304
        %vm1315 = vcmp.eq.f32.partialorder %v1314, 8.507059e+37
        %v1316 = vand.u32 %v1304, 2147483648
        %v1317 = vor.u32 1.1754944e-38, %v1316
        %v1318 = vsel %vm1315, %v1317, %v1313
        %v1319 = vmul.f32 1.0, %v1318
        %v1321 = vrot.slane %v1319, 1
        %v1323 = vadd.f32 %v1319, %v1321
        %v1324 = vxor.u32 %v1323, 2147483648
        %v1325 = vmul.f32 %v1324, 1.442695
        %v1326 = vpow.pop %v1325
        %v1327 = vadd.f32 %v1326, 1.0
        %v1328 = vrcp.pop %v1327
        %v1329 = vmul.f32 %v1327, %v1328
        %v1330 = vsub.f32 1.0, %v1329
        %v1331 = vmul.f32 %v1328, %v1330
        %v1332 = vadd.f32 %v1328, %v1331
        %vm1333 = vweird.f32 %v1327
        %vm1334 = vweird.f32 %v1328
        %vm1335 = vmor %vm1333, %vm1334
        %v1336 = vsel %vm1335, %v1328, %v1332
        %v1337 = vand.u32 2147483647, %v1327
        %vm1338 = vcmp.eq.f32.partialorder %v1337, 8.507059e+37
        %v1339 = vand.u32 %v1327, 2147483648
        %v1340 = vor.u32 1.1754944e-38, %v1339
        %v1341 = vsel %vm1338, %v1340, %v1336
        %v1342 = vmul.f32 1.0, %v1341
        %v1343 = vperm.slane %v1342, 0
        %v1344 = vmul.f32 %v1148, %v1343
        %v1345 = vmul.f32 %v1149, %v1343
        %v1346 = vmul.f32 %v1150, %v1343
        %v1347 = vmul.f32 %v1151, %v1343
        %v1348 = vmul.f32 %v1152, %v1343
        %v1349 = vmul.f32 %v1153, %v1343
        %v1350 = vmul.f32 %v1154, %v1343
        %v1351 = vmul.f32 %v1155, %v1343
        %v1352 = vld [vmem:[#allocation14] sm:$0xf]
        %v1353 = vpack.c.bf16 %v1345, %v1344
        %v1354 = vpack.c.bf16 %v1347, %v1346
        %v1355 = vpack.c.bf16 %v1349, %v1348
        %v1356 = vpack.c.bf16 %v1351, %v1350
        %v1357 = vld [vmem:[#allocation16] sm:$0xff]
        %v1359 = vsel %vm774, %v1352, 0
        %1361 = vmatpush.bf16.msra.mxu0 0
        %1362 = vmatpush.bf16.msra.mxu0 0
        %1363 = vmatpush.bf16.msra.mxu0 0
        %1364 = vmatpush.bf16.msra.mxu0 0
        %1365 = vmatpush.bf16.msra.mxu0 %v1356
        %1366 = vmatpush.bf16.msra.mxu0 %v1355
        %1367 = vmatpush.bf16.msra.mxu0 %v1354
        %1368 = vmatpush.bf16.msra.mxu0 %v1353
        %1369 = vmatmul.bf16.gmra.mxu0 %v1359
        %v1370 = vpop.f32.mrf.mxu0
        %v1371 = vadd.f32 %v1357, %v1370
        %v1372 = vpop.f32.mrf.mxu0
        %1373 = vdwg.mxu0
        %v1374 = vld [vmem:[#allocation25 + $0x4] ss:$0 sm:$0xff]
        %v1375 = vld [vmem:[#allocation25 + $0x5] ss:$0 sm:$0xff]
        %1376 = vadd.xlane.f32.xlu0 %v1371
        %v1377 = vpop.xlane.xlu0 %1376
        %v1378 = vrcp.pop 128.0
        %v1379 = vmul.f32 128.0, %v1378
        %v1380 = vsub.f32 1.0, %v1379
        %v1381 = vmul.f32 %v1378, %v1380
        %v1382 = vadd.f32 %v1378, %v1381
        %vm1383 = vweird.f32 %v1378
        %v1384 = vsel %vm1383, %v1378, %v1382
        %v1385 = vmul.f32 %v1377, %v1384
        %v1386 = vsub.f32 %v1371, %v1385
        %v1387 = vmul.f32 %v1386, %v1386
        %1388 = vadd.xlane.f32.xlu0 %v1387
        %v1389 = vpop.xlane.xlu0 %1388
        %v1390 = vmul.f32 %v1389, %v1384
        %v1391 = vadd.f32 %v1390, 1e-05
        %v1392 = vrsqrt.pop %v1391
        %v1393 = vmul.f32 %v1392, %v1391
        %v1394 = vmul.f32 %v1393, %v1392
        %v1395 = vmul.f32 0.5, %v1394
        %v1396 = vsub.f32 1.5, %v1395
        %v1397 = vmul.f32 %v1392, %v1396
        %vm1398 = vweird.f32 %v1391
        %vm1399 = vweird.f32 %v1392
        %vm1400 = vmor %vm1398, %vm1399
        %v1401 = vsel %vm1400, %v1392, %v1397
        %v1402 = vmul.f32 %v1386, %v1401
        %v1403 = vmul.f32 %v1402, %v1374
        %v1404 = vadd.f32 %v1403, %v1375
        %v1405 = vpack.c.bf16 %v1404, %v1404
        %v1406 = vld [vmem:[#allocation17] sm:$0xff]
        %v1407 = vld [vmem:[#allocation17 + $0x8] sm:$0xf]
        %v1408 = vld [vmem:[#allocation17 + $0xc] sm:$0xff]
        %v1409 = vld [vmem:[#allocation17 + $0x14] sm:$0xf]
        %v1410 = vld [vmem:[#allocation17 + $0x18] sm:$0xff]
        %v1411 = vld [vmem:[#allocation17 + $0x20] sm:$0xf]
        %v1412 = vld [vmem:[#allocation17 + $0x24] sm:$0xff]
        %v1413 = vld [vmem:[#allocation17 + $0x2c] sm:$0xf]
        %v1414 = vld [vmem:[#allocation17 + $0x30] sm:$0xff]
        %v1415 = vld [vmem:[#allocation17 + $0x38] sm:$0xf]
        %v1416 = vld [vmem:[#allocation17 + $0x3c] sm:$0xff]
        %v1417 = vld [vmem:[#allocation17 + $0x44] sm:$0xf]
        %v1418 = vld [vmem:[#allocation17 + $0x48] sm:$0xff]
        %v1419 = vld [vmem:[#allocation17 + $0x50] sm:$0xf]
        %v1420 = vld [vmem:[#allocation17 + $0x54] sm:$0xff]
        %v1421 = vld [vmem:[#allocation17 + $0x5c] sm:$0xf]
        %v1422 = vld [vmem:[#allocation17 + $0x60] sm:$0xff]
        %v1423 = vld [vmem:[#allocation17 + $0x68] sm:$0xf]
        %v1424 = vld [vmem:[#allocation17 + $0x6c] sm:$0xff]
        %v1425 = vld [vmem:[#allocation17 + $0x74] sm:$0xf]
        %v1426 = vld [vmem:[#allocation17 + $0x78] sm:$0xff]
        %v1427 = vld [vmem:[#allocation17 + $0x80] sm:$0xf]
        %v1428 = vld [vmem:[#allocation17 + $0x84] sm:$0xff]
        %v1429 = vld [vmem:[#allocation17 + $0x8c] sm:$0xf]
        %v1430 = vld [vmem:[#allocation17 + $0x90] sm:$0xff]
        %v1431 = vld [vmem:[#allocation17 + $0x98] sm:$0xf]
        %v1432 = vld [vmem:[#allocation17 + $0x9c] sm:$0xff]
        %v1433 = vld [vmem:[#allocation17 + $0xa4] sm:$0xf]
        %v1434 = vld [vmem:[#allocation17 + $0xa8] sm:$0xff]
        %v1435 = vld [vmem:[#allocation17 + $0xb0] sm:$0xf]
        %v1436 = vld [vmem:[#allocation17 + $0xb4] sm:$0xff]
        %v1437 = vld [vmem:[#allocation17 + $0xbc] sm:$0xf]
        %s1438 = scalar_lea.vmem [#allocation25], 6
        %v1439 = vld [vmem:[%s1438] ss:$8 sm:$0x7]
        %v1441 = vperm.slane %v1439, 0
        %v1442 = vperm.slane %v1439, 1
        %v1443 = vperm.slane %v1439, 2
        %v1479 = vunpack.c.l.b16 %v1406
        %v1480 = vunpack.c.h.b16 %v1406
        %v1481 = vunpack.c.l.b16 %v1407
        %v1482 = vunpack.c.l.b16 %v1408
        %v1483 = vunpack.c.h.b16 %v1408
        %v1484 = vunpack.c.l.b16 %v1409
        %v1485 = vunpack.c.l.b16 %v1410
        %v1486 = vunpack.c.h.b16 %v1410
        %v1487 = vunpack.c.l.b16 %v1411
        %v1488 = vunpack.c.l.b16 %v1412
        %v1489 = vunpack.c.h.b16 %v1412
        %v1490 = vunpack.c.l.b16 %v1413
        %v1491 = vunpack.c.l.b16 %v1414
        %v1492 = vunpack.c.h.b16 %v1414
        %v1493 = vunpack.c.l.b16 %v1415
        %v1494 = vunpack.c.l.b16 %v1416
        %v1495 = vunpack.c.h.b16 %v1416
        %v1496 = vunpack.c.l.b16 %v1417
        %v1497 = vunpack.c.l.b16 %v1418
        %v1498 = vunpack.c.h.b16 %v1418
        %v1499 = vunpack.c.l.b16 %v1419
        %v1500 = vunpack.c.l.b16 %v1420
        %v1501 = vunpack.c.h.b16 %v1420
        %v1502 = vunpack.c.l.b16 %v1421
        %v1503 = vunpack.c.l.b16 %v1422
        %v1504 = vunpack.c.h.b16 %v1422
        %v1505 = vunpack.c.l.b16 %v1423
        %v1506 = vunpack.c.l.b16 %v1424
        %v1507 = vunpack.c.h.b16 %v1424
        %v1508 = vunpack.c.l.b16 %v1425
        %v1509 = vunpack.c.l.b16 %v1426
        %v1510 = vunpack.c.h.b16 %v1426
        %v1511 = vunpack.c.l.b16 %v1427
        %v1512 = vunpack.c.l.b16 %v1428
        %v1513 = vunpack.c.h.b16 %v1428
        %v1514 = vunpack.c.l.b16 %v1429
        %v1515 = vunpack.c.l.b16 %v1430
        %v1516 = vunpack.c.h.b16 %v1430
        %v1517 = vunpack.c.l.b16 %v1431
        %v1518 = vunpack.c.l.b16 %v1432
        %v1519 = vunpack.c.h.b16 %v1432
        %v1520 = vunpack.c.l.b16 %v1433
        %v1521 = vunpack.c.l.b16 %v1434
        %v1522 = vunpack.c.h.b16 %v1434
        %v1523 = vunpack.c.l.b16 %v1435
        %v1524 = vunpack.c.l.b16 %v1436
        %v1525 = vunpack.c.h.b16 %v1436
        %v1526 = vunpack.c.l.b16 %v1437
        %v1527 = vpack.c.b16 %v1482, %v1479
        %v1528 = vpack.c.b16 %v1483, %v1480
        %v1529 = vpack.c.b16 %v1484, %v1481
        %v1530 = vpack.c.b16 %v1488, %v1485
        %v1531 = vpack.c.b16 %v1489, %v1486
        %v1532 = vpack.c.b16 %v1490, %v1487
        %v1533 = vpack.c.b16 %v1494, %v1491
        %v1534 = vpack.c.b16 %v1495, %v1492
        %v1535 = vpack.c.b16 %v1496, %v1493
        %v1536 = vpack.c.b16 %v1500, %v1497
        %v1537 = vpack.c.b16 %v1501, %v1498
        %v1538 = vpack.c.b16 %v1502, %v1499
        %v1539 = vpack.c.b16 %v1506, %v1503
        %v1540 = vpack.c.b16 %v1507, %v1504
        %v1541 = vpack.c.b16 %v1508, %v1505
        %v1542 = vpack.c.b16 %v1512, %v1509
        %v1543 = vpack.c.b16 %v1513, %v1510
        %v1544 = vpack.c.b16 %v1514, %v1511
        %v1545 = vpack.c.b16 %v1518, %v1515
        %v1546 = vpack.c.b16 %v1519, %v1516
        %v1547 = vpack.c.b16 %v1520, %v1517
        %v1548 = vpack.c.b16 %v1524, %v1521
        %v1549 = vpack.c.b16 %v1525, %v1522
        %v1550 = vpack.c.b16 %v1526, %v1523
        %1575 = vmatpush.bf16.msra.mxu0 %v1548
        %1576 = vmatpush.bf16.msra.mxu0 %v1545
        %1577 = vmatpush.bf16.msra.mxu0 %v1542
        %1578 = vmatpush.bf16.msra.mxu0 %v1539
        %1579 = vmatpush.bf16.msra.mxu0 %v1536
        %1580 = vmatpush.bf16.msra.mxu0 %v1533
        %1581 = vmatpush.bf16.msra.mxu0 %v1530
        %1582 = vmatpush.bf16.msra.mxu0 %v1527
        %1583 = vmatmul.bf16.gmra.mxu0 %v1405
        %v1584 = vpop.f32.mrf.mxu0
        %v1585 = vadd.f32 %v1441, %v1584
        %v1586 = vpop.f32.mrf.mxu0
        %1587 = vdwg.mxu0
        %1588 = vmatpush.bf16.msra.mxu0 %v1549
        %1589 = vmatpush.bf16.msra.mxu0 %v1546
        %1590 = vmatpush.bf16.msra.mxu0 %v1543
        %1591 = vmatpush.bf16.msra.mxu0 %v1540
        %1592 = vmatpush.bf16.msra.mxu0 %v1537
        %1593 = vmatpush.bf16.msra.mxu0 %v1534
        %1594 = vmatpush.bf16.msra.mxu0 %v1531
        %1595 = vmatpush.bf16.msra.mxu0 %v1528
        %1596 = vmatmul.bf16.gmra.mxu0 %v1405
        %v1597 = vpop.f32.mrf.mxu0
        %v1598 = vadd.f32 %v1442, %v1597
        %v1599 = vpop.f32.mrf.mxu0
        %1600 = vdwg.mxu0
        %1601 = vmatpush.bf16.msra.mxu0 %v1550
        %1602 = vmatpush.bf16.msra.mxu0 %v1547
        %1603 = vmatpush.bf16.msra.mxu0 %v1544
        %1604 = vmatpush.bf16.msra.mxu0 %v1541
        %1605 = vmatpush.bf16.msra.mxu0 %v1538
        %1606 = vmatpush.bf16.msra.mxu0 %v1535
        %1607 = vmatpush.bf16.msra.mxu0 %v1532
        %1608 = vmatpush.bf16.msra.mxu0 %v1529
        %1609 = vmatmul.bf16.gmra.mxu0 %v1405
        %v1610 = vpop.f32.mrf.mxu0
        %v1611 = vadd.f32 %v1443, %v1610
        %v1612 = vpop.f32.mrf.mxu0
        %1613 = vdwg.mxu0
        %1614 = vst [vmem:[#allocation7] sm:$0xff] %v1585
        %1615 = vst [vmem:[#allocation7 + $0x8] sm:$0xff] %v1598
        %1616 = vst [vmem:[#allocation7 + $0x10] sm:$0xff] %v1611
        %v1617 = vld [vmem:[#allocation7] sm:$0xff]
        %v1618 = vld [vmem:[#allocation7 + $0x8] sm:$0xff]
        %v1619 = vld [vmem:[#allocation7 + $0x10] sm:$0xff]
        %v1620 = vmul.f32 %v1617, 0.17677669
        %vm1621 = vcmask 261120
        %v1623 = vsel %vm1621, %v1620, 0
        %v1626 = vsel %vm1621, %v1618, 0
        %1628 = vmatpush.xpose.msra.mxu0 0.0
        %1629 = vmatpush.xpose.msra.mxu0 0.0
        %1630 = vmatpush.xpose.msra.mxu0 0.0
        %1631 = vmatpush.xpose.msra.mxu0 0.0
        %1632 = vmatpush.xpose.msra.mxu0 0.0
        %1633 = vmatpush.xpose.msra.mxu0 0.0
        %1634 = vmatpush.xpose.msra.mxu0 0.0
        %1635 = vmatpush.xpose.msra.mxu0 0.0
        %1636 = vmatpush.xpose.msra.mxu0 0.0
        %1637 = vmatpush.xpose.msra.mxu0 0.0
        %1638 = vmatpush.xpose.msra.mxu0 0.0
        %1639 = vmatpush.xpose.msra.mxu0 0.0
        %1640 = vmatpush.xpose.msra.mxu0 0.0
        %1641 = vmatpush.xpose.msra.mxu0 0.0
        %1642 = vmatpush.xpose.msra.mxu0 0.0
        %1643 = vmatpush.xpose.msra.mxu0 %v1626
        %1644 = vmatmul.f32.gmra.mxu0 %v1623
        %v1645 = vpop.f32.mrf.mxu0
        %v1646 = vadd.f32 0.0, %v1645
        %1647 = vdwg.mxu0
        %vm1648 = vcmask 64512
        %v1649 = vsel %vm1648, %v1646, -inf
        %1650 = vmax.xlane.f32.xlu0 %v1649
        %v1651 = vpop.xlane.xlu0 %1650
        %v1652 = vsub.f32 %v1646, %v1651
        %v1653 = vmul.f32 %v1652, 1.442695
        %v1654 = vpow.pop %v1653
        %v1655 = vsel %vm1648, %v1654, 0.0
        %1656 = vadd.xlane.f32.xlu0 %v1655
        %v1657 = vpop.xlane.xlu0 %1656
        %v1658 = vrcp.pop %v1657
        %v1659 = vmul.f32 %v1657, %v1658
        %v1660 = vsub.f32 1.0, %v1659
        %v1661 = vmul.f32 %v1658, %v1660
        %v1662 = vadd.f32 %v1658, %v1661
        %vm1663 = vweird.f32 %v1657
        %vm1664 = vweird.f32 %v1658
        %vm1665 = vmor %vm1663, %vm1664
        %v1666 = vsel %vm1665, %v1658, %v1662
        %v1667 = vand.u32 2147483647, %v1657
        %vm1668 = vcmp.eq.f32.partialorder %v1667, 8.507059e+37
        %v1669 = vand.u32 %v1657, 2147483648
        %v1670 = vor.u32 1.1754944e-38, %v1669
        %v1671 = vsel %vm1668, %v1670, %v1666
        %v1672 = vmul.f32 %v1654, %v1671
        %v1673 = vpack.c.bf16 %v1672, %v1672
        %v1674 = vpack.c.bf16 %v1619, %v1619
        %v1676 = vsel %vm1648, %v1673, 0
        %vm1678 = vcmask 1043456
        %v1680 = vsel %vm1678, %v1674, 0
        %1682 = vmatpush.bf16.msra.mxu0 0
        %1683 = vmatpush.bf16.msra.mxu0 0
        %1684 = vmatpush.bf16.msra.mxu0 0
        %1685 = vmatpush.bf16.msra.mxu0 0
        %1686 = vmatpush.bf16.msra.mxu0 0
        %1687 = vmatpush.bf16.msra.mxu0 0
        %1688 = vmatpush.bf16.msra.mxu0 0
        %1689 = vmatpush.bf16.msra.mxu0 %v1680
        %1690 = vmatmul.bf16.gmra.mxu0 %v1676
        %v1691 = vpop.f32.mrf.mxu0
        %v1692 = vadd.f32 0.0, %v1691
        %v1693 = vpop.f32.mrf.mxu0
        %1694 = vdwg.mxu0
        %1695 = vst.msk [vmem:[#allocation6] sm:$0xff] %vm1621, %v1692
        %v1696 = vld [vmem:[#allocation7] sm:$0xff]
        %v1697 = vld [vmem:[#allocation7 + $0x8] sm:$0xff]
        %v1698 = vld [vmem:[#allocation7 + $0x10] sm:$0xff]
        %v1699 = vmul.f32 %v1696, 0.17677669
        %1701 = vrot.lane.b32.xlu0 %v1699, 96
        %v1702 = vpop.permute.xlu0 %1701
        %1704 = vrot.lane.b32.xlu0 %v1697, 96
        %v1705 = vpop.permute.xlu0 %1704
        %v1706 = vsel %vm1621, %v1702, 0
        %v1708 = vsel %vm1621, %v1705, 0
        %1710 = vmatpush.xpose.msra.mxu0 0.0
        %1711 = vmatpush.xpose.msra.mxu0 0.0
        %1712 = vmatpush.xpose.msra.mxu0 0.0
        %1713 = vmatpush.xpose.msra.mxu0 0.0
        %1714 = vmatpush.xpose.msra.mxu0 0.0
        %1715 = vmatpush.xpose.msra.mxu0 0.0
        %1716 = vmatpush.xpose.msra.mxu0 0.0
        %1717 = vmatpush.xpose.msra.mxu0 0.0
        %1718 = vmatpush.xpose.msra.mxu0 0.0
        %1719 = vmatpush.xpose.msra.mxu0 0.0
        %1720 = vmatpush.xpose.msra.mxu0 0.0
        %1721 = vmatpush.xpose.msra.mxu0 0.0
        %1722 = vmatpush.xpose.msra.mxu0 0.0
        %1723 = vmatpush.xpose.msra.mxu0 0.0
        %1724 = vmatpush.xpose.msra.mxu0 0.0
        %1725 = vmatpush.xpose.msra.mxu0 %v1708
        %1726 = vmatmul.f32.gmra.mxu0 %v1706
        %v1727 = vpop.f32.mrf.mxu0
        %v1728 = vadd.f32 0.0, %v1727
        %1729 = vdwg.mxu0
        %v1730 = vsel %vm1648, %v1728, -inf
        %1731 = vmax.xlane.f32.xlu0 %v1730
        %v1732 = vpop.xlane.xlu0 %1731
        %v1733 = vsub.f32 %v1728, %v1732
        %v1734 = vmul.f32 %v1733, 1.442695
        %v1735 = vpow.pop %v1734
        %v1736 = vsel %vm1648, %v1735, 0.0
        %1737 = vadd.xlane.f32.xlu0 %v1736
        %v1738 = vpop.xlane.xlu0 %1737
        %v1739 = vrcp.pop %v1738
        %v1740 = vmul.f32 %v1738, %v1739
        %v1741 = vsub.f32 1.0, %v1740
        %v1742 = vmul.f32 %v1739, %v1741
        %v1743 = vadd.f32 %v1739, %v1742
        %vm1744 = vweird.f32 %v1738
        %vm1745 = vweird.f32 %v1739
        %vm1746 = vmor %vm1744, %vm1745
        %v1747 = vsel %vm1746, %v1739, %v1743
        %v1748 = vand.u32 2147483647, %v1738
        %vm1749 = vcmp.eq.f32.partialorder %v1748, 8.507059e+37
        %v1750 = vand.u32 %v1738, 2147483648
        %v1751 = vor.u32 1.1754944e-38, %v1750
        %v1752 = vsel %vm1749, %v1751, %v1747
        %v1753 = vmul.f32 %v1735, %v1752
        %v1754 = vpack.c.bf16 %v1753, %v1753
        %v1755 = vpack.c.bf16 %v1698, %v1698
        %1757 = vrot.lane.b32.xlu0 %v1755, 96
        %v1758 = vpop.permute.xlu0 %1757
        %v1760 = vsel %vm1648, %v1754, 0
        %v1763 = vsel %vm1678, %v1758, 0
        %1765 = vmatpush.bf16.msra.mxu0 0
        %1766 = vmatpush.bf16.msra.mxu0 0
        %1767 = vmatpush.bf16.msra.mxu0 0
        %1768 = vmatpush.bf16.msra.mxu0 0
        %1769 = vmatpush.bf16.msra.mxu0 0
        %1770 = vmatpush.bf16.msra.mxu0 0
        %1771 = vmatpush.bf16.msra.mxu0 0
        %1772 = vmatpush.bf16.msra.mxu0 %v1763
        %1773 = vmatmul.bf16.gmra.mxu0 %v1760
        %v1774 = vpop.f32.mrf.mxu0
        %v1775 = vadd.f32 0.0, %v1774
        %v1776 = vpop.f32.mrf.mxu0
        %1777 = vdwg.mxu0
        %1779 = vrot.lane.b32.xlu0 %v1775, 32
        %v1780 = vpop.permute.xlu0 %1779
        %vm1782 = vcmask 523520
        %1783 = vst.msk [vmem:[#allocation6] sm:$0xff] %vm1782, %v1780
        %v1784 = vld [vmem:[#allocation7] sm:$0xff]
        %v1785 = vld [vmem:[#allocation7 + $0x8] sm:$0xff]
        %v1786 = vld [vmem:[#allocation7 + $0x10] sm:$0xff]
        %v1787 = vmul.f32 %v1784, 0.17677669
        %1789 = vrot.lane.b32.xlu0 %v1787, 64
        %v1790 = vpop.permute.xlu0 %1789
        %1792 = vrot.lane.b32.xlu0 %v1785, 64
        %v1793 = vpop.permute.xlu0 %1792
        %v1794 = vsel %vm1621, %v1790, 0
        %v1796 = vsel %vm1621, %v1793, 0
        %1798 = vmatpush.xpose.msra.mxu0 0.0
        %1799 = vmatpush.xpose.msra.mxu0 0.0
        %1800 = vmatpush.xpose.msra.mxu0 0.0
        %1801 = vmatpush.xpose.msra.mxu0 0.0
        %1802 = vmatpush.xpose.msra.mxu0 0.0
        %1803 = vmatpush.xpose.msra.mxu0 0.0
        %1804 = vmatpush.xpose.msra.mxu0 0.0
        %1805 = vmatpush.xpose.msra.mxu0 0.0
        %1806 = vmatpush.xpose.msra.mxu0 0.0
        %1807 = vmatpush.xpose.msra.mxu0 0.0
        %1808 = vmatpush.xpose.msra.mxu0 0.0
        %1809 = vmatpush.xpose.msra.mxu0 0.0
        %1810 = vmatpush.xpose.msra.mxu0 0.0
        %1811 = vmatpush.xpose.msra.mxu0 0.0
        %1812 = vmatpush.xpose.msra.mxu0 0.0
        %1813 = vmatpush.xpose.msra.mxu0 %v1796
        %1814 = vmatmul.f32.gmra.mxu0 %v1794
        %v1815 = vpop.f32.mrf.mxu0
        %v1816 = vadd.f32 0.0, %v1815
        %1817 = vdwg.mxu0
        %v1818 = vsel %vm1648, %v1816, -inf
        %1819 = vmax.xlane.f32.xlu0 %v1818
        %v1820 = vpop.xlane.xlu0 %1819
        %v1821 = vsub.f32 %v1816, %v1820
        %v1822 = vmul.f32 %v1821, 1.442695
        %v1823 = vpow.pop %v1822
        %v1824 = vsel %vm1648, %v1823, 0.0
        %1825 = vadd.xlane.f32.xlu0 %v1824
        %v1826 = vpop.xlane.xlu0 %1825
        %v1827 = vrcp.pop %v1826
        %v1828 = vmul.f32 %v1826, %v1827
        %v1829 = vsub.f32 1.0, %v1828
        %v1830 = vmul.f32 %v1827, %v1829
        %v1831 = vadd.f32 %v1827, %v1830
        %vm1832 = vweird.f32 %v1826
        %vm1833 = vweird.f32 %v1827
        %vm1834 = vmor %vm1832, %vm1833
        %v1835 = vsel %vm1834, %v1827, %v1831
        %v1836 = vand.u32 2147483647, %v1826
        %vm1837 = vcmp.eq.f32.partialorder %v1836, 8.507059e+37
        %v1838 = vand.u32 %v1826, 2147483648
        %v1839 = vor.u32 1.1754944e-38, %v1838
        %v1840 = vsel %vm1837, %v1839, %v1835
        %v1841 = vmul.f32 %v1823, %v1840
        %v1842 = vpack.c.bf16 %v1841, %v1841
        %v1843 = vpack.c.bf16 %v1786, %v1786
        %1845 = vrot.lane.b32.xlu0 %v1843, 64
        %v1846 = vpop.permute.xlu0 %1845
        %v1848 = vsel %vm1648, %v1842, 0
        %v1851 = vsel %vm1678, %v1846, 0
        %1853 = vmatpush.bf16.msra.mxu0 0
        %1854 = vmatpush.bf16.msra.mxu0 0
        %1855 = vmatpush.bf16.msra.mxu0 0
        %1856 = vmatpush.bf16.msra.mxu0 0
        %1857 = vmatpush.bf16.msra.mxu0 0
        %1858 = vmatpush.bf16.msra.mxu0 0
        %1859 = vmatpush.bf16.msra.mxu0 0
        %1860 = vmatpush.bf16.msra.mxu0 %v1851
        %1861 = vmatmul.bf16.gmra.mxu0 %v1848
        %v1862 = vpop.f32.mrf.mxu0
        %v1863 = vadd.f32 0.0, %v1862
        %v1864 = vpop.f32.mrf.mxu0
        %1865 = vdwg.mxu0
        %1867 = vrot.lane.b32.xlu0 %v1863, 64
        %v1868 = vpop.permute.xlu0 %1867
        %vm1870 = vcmask 785920
        %1871 = vst.msk [vmem:[#allocation6] sm:$0xff] %vm1870, %v1868
        %v1872 = vld [vmem:[#allocation7] sm:$0xff]
        %v1873 = vld [vmem:[#allocation7 + $0x8] sm:$0xff]
        %v1874 = vld [vmem:[#allocation7 + $0x10] sm:$0xff]
        %v1875 = vmul.f32 %v1872, 0.17677669
        %1877 = vrot.lane.b32.xlu0 %v1875, 32
        %v1878 = vpop.permute.xlu0 %1877
        %1880 = vrot.lane.b32.xlu0 %v1873, 32
        %v1881 = vpop.permute.xlu0 %1880
        %v1882 = vsel %vm1621, %v1878, 0
        %v1884 = vsel %vm1621, %v1881, 0
        %1886 = vmatpush.xpose.msra.mxu0 0.0
        %1887 = vmatpush.xpose.msra.mxu0 0.0
        %1888 = vmatpush.xpose.msra.mxu0 0.0
        %1889 = vmatpush.xpose.msra.mxu0 0.0
        %1890 = vmatpush.xpose.msra.mxu0 0.0
        %1891 = vmatpush.xpose.msra.mxu0 0.0
        %1892 = vmatpush.xpose.msra.mxu0 0.0
        %1893 = vmatpush.xpose.msra.mxu0 0.0
        %1894 = vmatpush.xpose.msra.mxu0 0.0
        %1895 = vmatpush.xpose.msra.mxu0 0.0
        %1896 = vmatpush.xpose.msra.mxu0 0.0
        %1897 = vmatpush.xpose.msra.mxu0 0.0
        %1898 = vmatpush.xpose.msra.mxu0 0.0
        %1899 = vmatpush.xpose.msra.mxu0 0.0
        %1900 = vmatpush.xpose.msra.mxu0 0.0
        %1901 = vmatpush.xpose.msra.mxu0 %v1884
        %1902 = vmatmul.f32.gmra.mxu0 %v1882
        %v1903 = vpop.f32.mrf.mxu0
        %v1904 = vadd.f32 0.0, %v1903
        %1905 = vdwg.mxu0
        %v1906 = vsel %vm1648, %v1904, -inf
        %1907 = vmax.xlane.f32.xlu0 %v1906
        %v1908 = vpop.xlane.xlu0 %1907
        %v1909 = vsub.f32 %v1904, %v1908
        %v1910 = vmul.f32 %v1909, 1.442695
        %v1911 = vpow.pop %v1910
        %v1912 = vsel %vm1648, %v1911, 0.0
        %1913 = vadd.xlane.f32.xlu0 %v1912
        %v1914 = vpop.xlane.xlu0 %1913
        %v1915 = vrcp.pop %v1914
        %v1916 = vmul.f32 %v1914, %v1915
        %v1917 = vsub.f32 1.0, %v1916
        %v1918 = vmul.f32 %v1915, %v1917
        %v1919 = vadd.f32 %v1915, %v1918
        %vm1920 = vweird.f32 %v1914
        %vm1921 = vweird.f32 %v1915
        %vm1922 = vmor %vm1920, %vm1921
        %v1923 = vsel %vm1922, %v1915, %v1919
        %v1924 = vand.u32 2147483647, %v1914
        %vm1925 = vcmp.eq.f32.partialorder %v1924, 8.507059e+37
        %v1926 = vand.u32 %v1914, 2147483648
        %v1927 = vor.u32 1.1754944e-38, %v1926
        %v1928 = vsel %vm1925, %v1927, %v1923
        %v1929 = vmul.f32 %v1911, %v1928
        %v1930 = vpack.c.bf16 %v1929, %v1929
        %v1931 = vpack.c.bf16 %v1874, %v1874
        %1933 = vrot.lane.b32.xlu0 %v1931, 32
        %v1934 = vpop.permute.xlu0 %1933
        %v1936 = vsel %vm1648, %v1930, 0
        %v1939 = vsel %vm1678, %v1934, 0
        %1941 = vmatpush.bf16.msra.mxu0 0
        %1942 = vmatpush.bf16.msra.mxu0 0
        %1943 = vmatpush.bf16.msra.mxu0 0
        %1944 = vmatpush.bf16.msra.mxu0 0
        %1945 = vmatpush.bf16.msra.mxu0 0
        %1946 = vmatpush.bf16.msra.mxu0 0
        %1947 = vmatpush.bf16.msra.mxu0 0
        %1948 = vmatpush.bf16.msra.mxu0 %v1939
        %1949 = vmatmul.bf16.gmra.mxu0 %v1936
        %v1950 = vpop.f32.mrf.mxu0
        %v1951 = vadd.f32 0.0, %v1950
        %v1952 = vpop.f32.mrf.mxu0
        %1953 = vdwg.mxu0
        %1955 = vrot.lane.b32.xlu0 %v1951, 96
        %v1956 = vpop.permute.xlu0 %1955
        %vm1958 = vcmask 1048320
        %1959 = vst.msk [vmem:[#allocation6] sm:$0xff] %vm1958, %v1956
        %v1960 = vld [vmem:[#allocation6] sm:$0xff]
        %v1961 = vpack.c.bf16 %v1960, %v1960
        %v1962 = vld [vmem:[#allocation19] sm:$0xf]
        %v1963 = vld [vmem:[#allocation19 + $0x4] sm:$0xf]
        %v1964 = vld [vmem:[#allocation19 + $0x8] sm:$0xf]
        %v1965 = vld [vmem:[#allocation19 + $0xc] sm:$0xf]
        %v1966 = vld [vmem:[#allocation19 + $0x10] sm:$0xf]
        %v1967 = vld [vmem:[#allocation19 + $0x14] sm:$0xf]
        %v1968 = vld [vmem:[#allocation19 + $0x18] sm:$0xf]
        %v1969 = vld [vmem:[#allocation19 + $0x1c] sm:$0xf]
        %v1970 = vld [vmem:[#allocation19 + $0x20] sm:$0xf]
        %v1971 = vld [vmem:[#allocation19 + $0x24] sm:$0xf]
        %v1972 = vld [vmem:[#allocation19 + $0x28] sm:$0xf]
        %v1973 = vld [vmem:[#allocation19 + $0x2c] sm:$0xf]
        %v1974 = vld [vmem:[#allocation19 + $0x30] sm:$0xf]
        %v1975 = vld [vmem:[#allocation19 + $0x34] sm:$0xf]
        %v1976 = vld [vmem:[#allocation19 + $0x38] sm:$0xf]
        %v1977 = vld [vmem:[#allocation19 + $0x3c] sm:$0xf]
        %v1994 = vunpack.c.l.b16 %v1962
        %v1995 = vunpack.c.l.b16 %v1963
        %v1996 = vunpack.c.l.b16 %v1964
        %v1997 = vunpack.c.l.b16 %v1965
        %v1998 = vunpack.c.l.b16 %v1966
        %v1999 = vunpack.c.l.b16 %v1967
        %v2000 = vunpack.c.l.b16 %v1968
        %v2001 = vunpack.c.l.b16 %v1969
        %v2002 = vunpack.c.l.b16 %v1970
        %v2003 = vunpack.c.l.b16 %v1971
        %v2004 = vunpack.c.l.b16 %v1972
        %v2005 = vunpack.c.l.b16 %v1973
        %v2006 = vunpack.c.l.b16 %v1974
        %v2007 = vunpack.c.l.b16 %v1975
        %v2008 = vunpack.c.l.b16 %v1976
        %v2009 = vunpack.c.l.b16 %v1977
        %v2010 = vpack.c.b16 %v1995, %v1994
        %v2011 = vpack.c.b16 %v1997, %v1996
        %v2012 = vpack.c.b16 %v1999, %v1998
        %v2013 = vpack.c.b16 %v2001, %v2000
        %v2014 = vpack.c.b16 %v2003, %v2002
        %v2015 = vpack.c.b16 %v2005, %v2004
        %v2016 = vpack.c.b16 %v2007, %v2006
        %v2017 = vpack.c.b16 %v2009, %v2008
        %2026 = vmatpush.bf16.msra.mxu0 %v2017
        %2027 = vmatpush.bf16.msra.mxu0 %v2016
        %2028 = vmatpush.bf16.msra.mxu0 %v2015
        %2029 = vmatpush.bf16.msra.mxu0 %v2014
        %2030 = vmatpush.bf16.msra.mxu0 %v2013
        %2031 = vmatpush.bf16.msra.mxu0 %v2012
        %2032 = vmatpush.bf16.msra.mxu0 %v2011
        %2033 = vmatpush.bf16.msra.mxu0 %v2010
        %2034 = vmatmul.bf16.gmra.mxu0 %v1961
        %v2035 = vpop.f32.mrf.mxu0
        %v2036 = vadd.f32 0.0, %v2035
        %v2037 = vpop.f32.mrf.mxu0
        %2038 = vdwg.mxu0
        %v2039 = vadd.f32 %v1371, %v2036
        %v2040 = vld [vmem:[#allocation25 + $0x7] ss:$0 sm:$0xff]
        %v2041 = vadd.f32 %v2039, %v2040
        %v2042 = vld [vmem:[#allocation25 + $0x28] ss:$0 sm:$0xff]
        %v2043 = vld [vmem:[#allocation25 + $0x29] ss:$0 sm:$0xff]
        %2044 = vadd.xlane.f32.xlu0 %v2041
        %v2045 = vpop.xlane.xlu0 %2044
        %v2046 = vmul.f32 %v2045, %v1384
        %v2047 = vsub.f32 %v2041, %v2046
        %v2048 = vmul.f32 %v2047, %v2047
        %2049 = vadd.xlane.f32.xlu0 %v2048
        %v2050 = vpop.xlane.xlu0 %2049
        %v2051 = vmul.f32 %v2050, %v1384
        %v2052 = vadd.f32 %v2051, 1e-05
        %v2053 = vrsqrt.pop %v2052
        %v2054 = vmul.f32 %v2053, %v2052
        %v2055 = vmul.f32 %v2054, %v2053
        %v2056 = vmul.f32 0.5, %v2055
        %v2057 = vsub.f32 1.5, %v2056
        %v2058 = vmul.f32 %v2053, %v2057
        %vm2059 = vweird.f32 %v2052
        %vm2060 = vweird.f32 %v2053
        %vm2061 = vmor %vm2059, %vm2060
        %v2062 = vsel %vm2061, %v2053, %v2058
        %v2063 = vmul.f32 %v2047, %v2062
        %v2064 = vmul.f32 %v2063, %v2042
        %v2065 = vadd.f32 %v2064, %v2043
        %v2066 = vpack.c.bf16 %v2065, %v2065
        %v2067 = vld [vmem:[#allocation20] sm:$0xff]
        %v2068 = vld [vmem:[#allocation20 + $0x8] sm:$0xff]
        %v2069 = vld [vmem:[#allocation20 + $0x10] sm:$0xff]
        %v2070 = vld [vmem:[#allocation20 + $0x18] sm:$0xff]
        %v2071 = vld [vmem:[#allocation20 + $0x20] sm:$0xff]
        %v2072 = vld [vmem:[#allocation20 + $0x28] sm:$0xff]
        %v2073 = vld [vmem:[#allocation20 + $0x30] sm:$0xff]
        %v2074 = vld [vmem:[#allocation20 + $0x38] sm:$0xff]
        %v2075 = vld [vmem:[#allocation20 + $0x40] sm:$0xff]
        %v2076 = vld [vmem:[#allocation20 + $0x48] sm:$0xff]
        %v2077 = vld [vmem:[#allocation20 + $0x50] sm:$0xff]
        %v2078 = vld [vmem:[#allocation20 + $0x58] sm:$0xff]
        %v2079 = vld [vmem:[#allocation20 + $0x60] sm:$0xff]
        %v2080 = vld [vmem:[#allocation20 + $0x68] sm:$0xff]
        %v2081 = vld [vmem:[#allocation20 + $0x70] sm:$0xff]
        %v2082 = vld [vmem:[#allocation20 + $0x78] sm:$0xff]
        %v2083 = vld [vmem:[#allocation20 + $0x80] sm:$0xff]
        %v2084 = vld [vmem:[#allocation20 + $0x88] sm:$0xff]
        %v2085 = vld [vmem:[#allocation20 + $0x90] sm:$0xff]
        %v2086 = vld [vmem:[#allocation20 + $0x98] sm:$0xff]
        %v2087 = vld [vmem:[#allocation20 + $0xa0] sm:$0xff]
        %v2088 = vld [vmem:[#allocation20 + $0xa8] sm:$0xff]
        %v2089 = vld [vmem:[#allocation20 + $0xb0] sm:$0xff]
        %v2090 = vld [vmem:[#allocation20 + $0xb8] sm:$0xff]
        %v2091 = vld [vmem:[#allocation20 + $0xc0] sm:$0xff]
        %v2092 = vld [vmem:[#allocation20 + $0xc8] sm:$0xff]
        %v2093 = vld [vmem:[#allocation20 + $0xd0] sm:$0xff]
        %v2094 = vld [vmem:[#allocation20 + $0xd8] sm:$0xff]
        %v2095 = vld [vmem:[#allocation20 + $0xe0] sm:$0xff]
        %v2096 = vld [vmem:[#allocation20 + $0xe8] sm:$0xff]
        %v2097 = vld [vmem:[#allocation20 + $0xf0] sm:$0xff]
        %v2098 = vld [vmem:[#allocation20 + $0xf8] sm:$0xff]
        %s2099 = scalar_lea.vmem [#allocation25], 42
        %v2100 = vld [vmem:[%s2099] ss:$8 sm:$0xf]
        %v2102 = vperm.slane %v2100, 0
        %v2103 = vperm.slane %v2100, 1
        %v2104 = vperm.slane %v2100, 2
        %v2105 = vperm.slane %v2100, 3
        %v2142 = vunpack.c.l.b16 %v2067
        %v2143 = vunpack.c.h.b16 %v2067
        %v2144 = vunpack.c.l.b16 %v2068
        %v2145 = vunpack.c.h.b16 %v2068
        %v2146 = vunpack.c.l.b16 %v2069
        %v2147 = vunpack.c.h.b16 %v2069
        %v2148 = vunpack.c.l.b16 %v2070
        %v2149 = vunpack.c.h.b16 %v2070
        %v2150 = vunpack.c.l.b16 %v2071
        %v2151 = vunpack.c.h.b16 %v2071
        %v2152 = vunpack.c.l.b16 %v2072
        %v2153 = vunpack.c.h.b16 %v2072
        %v2154 = vunpack.c.l.b16 %v2073
        %v2155 = vunpack.c.h.b16 %v2073
        %v2156 = vunpack.c.l.b16 %v2074
        %v2157 = vunpack.c.h.b16 %v2074
        %v2158 = vunpack.c.l.b16 %v2075
        %v2159 = vunpack.c.h.b16 %v2075
        %v2160 = vunpack.c.l.b16 %v2076
        %v2161 = vunpack.c.h.b16 %v2076
        %v2162 = vunpack.c.l.b16 %v2077
        %v2163 = vunpack.c.h.b16 %v2077
        %v2164 = vunpack.c.l.b16 %v2078
        %v2165 = vunpack.c.h.b16 %v2078
        %v2166 = vunpack.c.l.b16 %v2079
        %v2167 = vunpack.c.h.b16 %v2079
        %v2168 = vunpack.c.l.b16 %v2080
        %v2169 = vunpack.c.h.b16 %v2080
        %v2170 = vunpack.c.l.b16 %v2081
        %v2171 = vunpack.c.h.b16 %v2081
        %v2172 = vunpack.c.l.b16 %v2082
        %v2173 = vunpack.c.h.b16 %v2082
        %v2174 = vunpack.c.l.b16 %v2083
        %v2175 = vunpack.c.h.b16 %v2083
        %v2176 = vunpack.c.l.b16 %v2084
        %v2177 = vunpack.c.h.b16 %v2084
        %v2178 = vunpack.c.l.b16 %v2085
        %v2179 = vunpack.c.h.b16 %v2085
        %v2180 = vunpack.c.l.b16 %v2086
        %v2181 = vunpack.c.h.b16 %v2086
        %v2182 = vunpack.c.l.b16 %v2087
        %v2183 = vunpack.c.h.b16 %v2087
        %v2184 = vunpack.c.l.b16 %v2088
        %v2185 = vunpack.c.h.b16 %v2088
        %v2186 = vunpack.c.l.b16 %v2089
        %v2187 = vunpack.c.h.b16 %v2089
        %v2188 = vunpack.c.l.b16 %v2090
        %v2189 = vunpack.c.h.b16 %v2090
        %v2190 = vunpack.c.l.b16 %v2091
        %v2191 = vunpack.c.h.b16 %v2091
        %v2192 = vunpack.c.l.b16 %v2092
        %v2193 = vunpack.c.h.b16 %v2092
        %v2194 = vunpack.c.l.b16 %v2093
        %v2195 = vunpack.c.h.b16 %v2093
        %v2196 = vunpack.c.l.b16 %v2094
        %v2197 = vunpack.c.h.b16 %v2094
        %v2198 = vunpack.c.l.b16 %v2095
        %v2199 = vunpack.c.h.b16 %v2095
        %v2200 = vunpack.c.l.b16 %v2096
        %v2201 = vunpack.c.h.b16 %v2096
        %v2202 = vunpack.c.l.b16 %v2097
        %v2203 = vunpack.c.h.b16 %v2097
        %v2204 = vunpack.c.l.b16 %v2098
        %v2205 = vunpack.c.h.b16 %v2098
        %v2206 = vpack.c.b16 %v2146, %v2142
        %v2207 = vpack.c.b16 %v2147, %v2143
        %v2208 = vpack.c.b16 %v2148, %v2144
        %v2209 = vpack.c.b16 %v2149, %v2145
        %v2210 = vpack.c.b16 %v2154, %v2150
        %v2211 = vpack.c.b16 %v2155, %v2151
        %v2212 = vpack.c.b16 %v2156, %v2152
        %v2213 = vpack.c.b16 %v2157, %v2153
        %v2214 = vpack.c.b16 %v2162, %v2158
        %v2215 = vpack.c.b16 %v2163, %v2159
        %v2216 = vpack.c.b16 %v2164, %v2160
        %v2217 = vpack.c.b16 %v2165, %v2161
        %v2218 = vpack.c.b16 %v2170, %v2166
        %v2219 = vpack.c.b16 %v2171, %v2167
        %v2220 = vpack.c.b16 %v2172, %v2168
        %v2221 = vpack.c.b16 %v2173, %v2169
        %v2222 = vpack.c.b16 %v2178, %v2174
        %v2223 = vpack.c.b16 %v2179, %v2175
        %v2224 = vpack.c.b16 %v2180, %v2176
        %v2225 = vpack.c.b16 %v2181, %v2177
        %v2226 = vpack.c.b16 %v2186, %v2182
        %v2227 = vpack.c.b16 %v2187, %v2183
        %v2228 = vpack.c.b16 %v2188, %v2184
        %v2229 = vpack.c.b16 %v2189, %v2185
        %v2230 = vpack.c.b16 %v2194, %v2190
        %v2231 = vpack.c.b16 %v2195, %v2191
        %v2232 = vpack.c.b16 %v2196, %v2192
        %v2233 = vpack.c.b16 %v2197, %v2193
        %v2234 = vpack.c.b16 %v2202, %v2198
        %v2235 = vpack.c.b16 %v2203, %v2199
        %v2236 = vpack.c.b16 %v2204, %v2200
        %v2237 = vpack.c.b16 %v2205, %v2201
        %2270 = vmatpush.bf16.msra.mxu0 %v2234
        %2271 = vmatpush.bf16.msra.mxu0 %v2230
        %2272 = vmatpush.bf16.msra.mxu0 %v2226
        %2273 = vmatpush.bf16.msra.mxu0 %v2222
        %2274 = vmatpush.bf16.msra.mxu0 %v2218
        %2275 = vmatpush.bf16.msra.mxu0 %v2214
        %2276 = vmatpush.bf16.msra.mxu0 %v2210
        %2277 = vmatpush.bf16.msra.mxu0 %v2206
        %2278 = vmatmul.bf16.gmra.mxu0 %v2066
        %v2279 = vpop.f32.mrf.mxu0
        %v2280 = vadd.f32 %v2102, %v2279
        %v2281 = vpop.f32.mrf.mxu0
        %2282 = vdwg.mxu0
        %2283 = vmatpush.bf16.msra.mxu0 %v2235
        %2284 = vmatpush.bf16.msra.mxu0 %v2231
        %2285 = vmatpush.bf16.msra.mxu0 %v2227
        %2286 = vmatpush.bf16.msra.mxu0 %v2223
        %2287 = vmatpush.bf16.msra.mxu0 %v2219
        %2288 = vmatpush.bf16.msra.mxu0 %v2215
        %2289 = vmatpush.bf16.msra.mxu0 %v2211
        %2290 = vmatpush.bf16.msra.mxu0 %v2207
        %2291 = vmatmul.bf16.gmra.mxu0 %v2066
        %v2292 = vpop.f32.mrf.mxu0
        %v2293 = vadd.f32 %v2103, %v2292
        %v2294 = vpop.f32.mrf.mxu0
        %2295 = vdwg.mxu0
        %2296 = vmatpush.bf16.msra.mxu0 %v2236
        %2297 = vmatpush.bf16.msra.mxu0 %v2232
        %2298 = vmatpush.bf16.msra.mxu0 %v2228
        %2299 = vmatpush.bf16.msra.mxu0 %v2224
        %2300 = vmatpush.bf16.msra.mxu0 %v2220
        %2301 = vmatpush.bf16.msra.mxu0 %v2216
        %2302 = vmatpush.bf16.msra.mxu0 %v2212
        %2303 = vmatpush.bf16.msra.mxu0 %v2208
        %2304 = vmatmul.bf16.gmra.mxu0 %v2066
        %v2305 = vpop.f32.mrf.mxu0
        %v2306 = vadd.f32 %v2104, %v2305
        %v2307 = vpop.f32.mrf.mxu0
        %2308 = vdwg.mxu0
        %2309 = vmatpush.bf16.msra.mxu0 %v2237
        %2310 = vmatpush.bf16.msra.mxu0 %v2233
        %2311 = vmatpush.bf16.msra.mxu0 %v2229
        %2312 = vmatpush.bf16.msra.mxu0 %v2225
        %2313 = vmatpush.bf16.msra.mxu0 %v2221
        %2314 = vmatpush.bf16.msra.mxu0 %v2217
        %2315 = vmatpush.bf16.msra.mxu0 %v2213
        %2316 = vmatpush.bf16.msra.mxu0 %v2209
        %2317 = vmatmul.bf16.gmra.mxu0 %v2066
        %v2318 = vpop.f32.mrf.mxu0
        %v2319 = vadd.f32 %v2105, %v2318
        %v2320 = vpop.f32.mrf.mxu0
        %2321 = vdwg.mxu0
        %v2322 = vmax.f32 %v2280, 0.0
        %v2323 = vmax.f32 %v2293, 0.0
        %v2324 = vmax.f32 %v2306, 0.0
        %v2325 = vmax.f32 %v2319, 0.0
        %v2326 = vpack.c.bf16 %v2322, %v2322
        %v2327 = vpack.c.bf16 %v2323, %v2323
        %v2328 = vpack.c.bf16 %v2324, %v2324
        %v2329 = vpack.c.bf16 %v2325, %v2325
        %v2330 = vld [vmem:[#allocation22] sm:$0xf]
        %v2331 = vld [vmem:[#allocation22 + $0x4] sm:$0xf]
        %v2332 = vld [vmem:[#allocation22 + $0x8] sm:$0xf]
        %v2333 = vld [vmem:[#allocation22 + $0xc] sm:$0xf]
        %v2334 = vld [vmem:[#allocation22 + $0x10] sm:$0xf]
        %v2335 = vld [vmem:[#allocation22 + $0x14] sm:$0xf]
        %v2336 = vld [vmem:[#allocation22 + $0x18] sm:$0xf]
        %v2337 = vld [vmem:[#allocation22 + $0x1c] sm:$0xf]
        %v2338 = vld [vmem:[#allocation22 + $0x20] sm:$0xf]
        %v2339 = vld [vmem:[#allocation22 + $0x24] sm:$0xf]
        %v2340 = vld [vmem:[#allocation22 + $0x28] sm:$0xf]
        %v2341 = vld [vmem:[#allocation22 + $0x2c] sm:$0xf]
        %v2342 = vld [vmem:[#allocation22 + $0x30] sm:$0xf]
        %v2343 = vld [vmem:[#allocation22 + $0x34] sm:$0xf]
        %v2344 = vld [vmem:[#allocation22 + $0x38] sm:$0xf]
        %v2345 = vld [vmem:[#allocation22 + $0x3c] sm:$0xf]
        %v2346 = vld [vmem:[#allocation22 + $0x40] sm:$0xf]
        %v2347 = vld [vmem:[#allocation22 + $0x44] sm:$0xf]
        %v2348 = vld [vmem:[#allocation22 + $0x48] sm:$0xf]
        %v2349 = vld [vmem:[#allocation22 + $0x4c] sm:$0xf]
        %v2350 = vld [vmem:[#allocation22 + $0x50] sm:$0xf]
        %v2351 = vld [vmem:[#allocation22 + $0x54] sm:$0xf]
        %v2352 = vld [vmem:[#allocation22 + $0x58] sm:$0xf]
        %v2353 = vld [vmem:[#allocation22 + $0x5c] sm:$0xf]
        %v2354 = vld [vmem:[#allocation22 + $0x60] sm:$0xf]
        %v2355 = vld [vmem:[#allocation22 + $0x64] sm:$0xf]
        %v2356 = vld [vmem:[#allocation22 + $0x68] sm:$0xf]
        %v2357 = vld [vmem:[#allocation22 + $0x6c] sm:$0xf]
        %v2358 = vld [vmem:[#allocation22 + $0x70] sm:$0xf]
        %v2359 = vld [vmem:[#allocation22 + $0x74] sm:$0xf]
        %v2360 = vld [vmem:[#allocation22 + $0x78] sm:$0xf]
        %v2361 = vld [vmem:[#allocation22 + $0x7c] sm:$0xf]
        %v2362 = vld [vmem:[#allocation22 + $0x80] sm:$0xf]
        %v2363 = vld [vmem:[#allocation22 + $0x84] sm:$0xf]
        %v2364 = vld [vmem:[#allocation22 + $0x88] sm:$0xf]
        %v2365 = vld [vmem:[#allocation22 + $0x8c] sm:$0xf]
        %v2366 = vld [vmem:[#allocation22 + $0x90] sm:$0xf]
        %v2367 = vld [vmem:[#allocation22 + $0x94] sm:$0xf]
        %v2368 = vld [vmem:[#allocation22 + $0x98] sm:$0xf]
        %v2369 = vld [vmem:[#allocation22 + $0x9c] sm:$0xf]
        %v2370 = vld [vmem:[#allocation22 + $0xa0] sm:$0xf]
        %v2371 = vld [vmem:[#allocation22 + $0xa4] sm:$0xf]
        %v2372 = vld [vmem:[#allocation22 + $0xa8] sm:$0xf]
        %v2373 = vld [vmem:[#allocation22 + $0xac] sm:$0xf]
        %v2374 = vld [vmem:[#allocation22 + $0xb0] sm:$0xf]
        %v2375 = vld [vmem:[#allocation22 + $0xb4] sm:$0xf]
        %v2376 = vld [vmem:[#allocation22 + $0xb8] sm:$0xf]
        %v2377 = vld [vmem:[#allocation22 + $0xbc] sm:$0xf]
        %v2378 = vld [vmem:[#allocation22 + $0xc0] sm:$0xf]
        %v2379 = vld [vmem:[#allocation22 + $0xc4] sm:$0xf]
        %v2380 = vld [vmem:[#allocation22 + $0xc8] sm:$0xf]
        %v2381 = vld [vmem:[#allocation22 + $0xcc] sm:$0xf]
        %v2382 = vld [vmem:[#allocation22 + $0xd0] sm:$0xf]
        %v2383 = vld [vmem:[#allocation22 + $0xd4] sm:$0xf]
        %v2384 = vld [vmem:[#allocation22 + $0xd8] sm:$0xf]
        %v2385 = vld [vmem:[#allocation22 + $0xdc] sm:$0xf]
        %v2386 = vld [vmem:[#allocation22 + $0xe0] sm:$0xf]
        %v2387 = vld [vmem:[#allocation22 + $0xe4] sm:$0xf]
        %v2388 = vld [vmem:[#allocation22 + $0xe8] sm:$0xf]
        %v2389 = vld [vmem:[#allocation22 + $0xec] sm:$0xf]
        %v2390 = vld [vmem:[#allocation22 + $0xf0] sm:$0xf]
        %v2391 = vld [vmem:[#allocation22 + $0xf4] sm:$0xf]
        %v2392 = vld [vmem:[#allocation22 + $0xf8] sm:$0xf]
        %v2393 = vld [vmem:[#allocation22 + $0xfc] sm:$0xf]
        %v2394 = vld [vmem:[#allocation25 + $0x2b] ss:$0 sm:$0xff]
        %v2459 = vunpack.c.l.b16 %v2330
        %v2460 = vunpack.c.l.b16 %v2331
        %v2461 = vunpack.c.l.b16 %v2332
        %v2462 = vunpack.c.l.b16 %v2333
        %v2463 = vunpack.c.l.b16 %v2334
        %v2464 = vunpack.c.l.b16 %v2335
        %v2465 = vunpack.c.l.b16 %v2336
        %v2466 = vunpack.c.l.b16 %v2337
        %v2467 = vunpack.c.l.b16 %v2338
        %v2468 = vunpack.c.l.b16 %v2339
        %v2469 = vunpack.c.l.b16 %v2340
        %v2470 = vunpack.c.l.b16 %v2341
        %v2471 = vunpack.c.l.b16 %v2342
        %v2472 = vunpack.c.l.b16 %v2343
        %v2473 = vunpack.c.l.b16 %v2344
        %v2474 = vunpack.c.l.b16 %v2345
        %v2475 = vunpack.c.l.b16 %v2346
        %v2476 = vunpack.c.l.b16 %v2347
        %v2477 = vunpack.c.l.b16 %v2348
        %v2478 = vunpack.c.l.b16 %v2349
        %v2479 = vunpack.c.l.b16 %v2350
        %v2480 = vunpack.c.l.b16 %v2351
        %v2481 = vunpack.c.l.b16 %v2352
        %v2482 = vunpack.c.l.b16 %v2353
        %v2483 = vunpack.c.l.b16 %v2354
        %v2484 = vunpack.c.l.b16 %v2355
        %v2485 = vunpack.c.l.b16 %v2356
        %v2486 = vunpack.c.l.b16 %v2357
        %v2487 = vunpack.c.l.b16 %v2358
        %v2488 = vunpack.c.l.b16 %v2359
        %v2489 = vunpack.c.l.b16 %v2360
        %v2490 = vunpack.c.l.b16 %v2361
        %v2491 = vunpack.c.l.b16 %v2362
        %v2492 = vunpack.c.l.b16 %v2363
        %v2493 = vunpack.c.l.b16 %v2364
        %v2494 = vunpack.c.l.b16 %v2365
        %v2495 = vunpack.c.l.b16 %v2366
        %v2496 = vunpack.c.l.b16 %v2367
        %v2497 = vunpack.c.l.b16 %v2368
        %v2498 = vunpack.c.l.b16 %v2369
        %v2499 = vunpack.c.l.b16 %v2370
        %v2500 = vunpack.c.l.b16 %v2371
        %v2501 = vunpack.c.l.b16 %v2372
        %v2502 = vunpack.c.l.b16 %v2373
        %v2503 = vunpack.c.l.b16 %v2374
        %v2504 = vunpack.c.l.b16 %v2375
        %v2505 = vunpack.c.l.b16 %v2376
        %v2506 = vunpack.c.l.b16 %v2377
        %v2507 = vunpack.c.l.b16 %v2378
        %v2508 = vunpack.c.l.b16 %v2379
        %v2509 = vunpack.c.l.b16 %v2380
        %v2510 = vunpack.c.l.b16 %v2381
        %v2511 = vunpack.c.l.b16 %v2382
        %v2512 = vunpack.c.l.b16 %v2383
        %v2513 = vunpack.c.l.b16 %v2384
        %v2514 = vunpack.c.l.b16 %v2385
        %v2515 = vunpack.c.l.b16 %v2386
        %v2516 = vunpack.c.l.b16 %v2387
        %v2517 = vunpack.c.l.b16 %v2388
        %v2518 = vunpack.c.l.b16 %v2389
        %v2519 = vunpack.c.l.b16 %v2390
        %v2520 = vunpack.c.l.b16 %v2391
        %v2521 = vunpack.c.l.b16 %v2392
        %v2522 = vunpack.c.l.b16 %v2393
        %v2523 = vpack.c.b16 %v2460, %v2459
        %v2524 = vpack.c.b16 %v2462, %v2461
        %v2525 = vpack.c.b16 %v2464, %v2463
        %v2526 = vpack.c.b16 %v2466, %v2465
        %v2527 = vpack.c.b16 %v2468, %v2467
        %v2528 = vpack.c.b16 %v2470, %v2469
        %v2529 = vpack.c.b16 %v2472, %v2471
        %v2530 = vpack.c.b16 %v2474, %v2473
        %v2531 = vpack.c.b16 %v2476, %v2475
        %v2532 = vpack.c.b16 %v2478, %v2477
        %v2533 = vpack.c.b16 %v2480, %v2479
        %v2534 = vpack.c.b16 %v2482, %v2481
        %v2535 = vpack.c.b16 %v2484, %v2483
        %v2536 = vpack.c.b16 %v2486, %v2485
        %v2537 = vpack.c.b16 %v2488, %v2487
        %v2538 = vpack.c.b16 %v2490, %v2489
        %v2539 = vpack.c.b16 %v2492, %v2491
        %v2540 = vpack.c.b16 %v2494, %v2493
        %v2541 = vpack.c.b16 %v2496, %v2495
        %v2542 = vpack.c.b16 %v2498, %v2497
        %v2543 = vpack.c.b16 %v2500, %v2499
        %v2544 = vpack.c.b16 %v2502, %v2501
        %v2545 = vpack.c.b16 %v2504, %v2503
        %v2546 = vpack.c.b16 %v2506, %v2505
        %v2547 = vpack.c.b16 %v2508, %v2507
        %v2548 = vpack.c.b16 %v2510, %v2509
        %v2549 = vpack.c.b16 %v2512, %v2511
        %v2550 = vpack.c.b16 %v2514, %v2513
        %v2551 = vpack.c.b16 %v2516, %v2515
        %v2552 = vpack.c.b16 %v2518, %v2517
        %v2553 = vpack.c.b16 %v2520, %v2519
        %v2554 = vpack.c.b16 %v2522, %v2521
        %2587 = vmatpush.bf16.msra.mxu0 %v2530
        %2588 = vmatpush.bf16.msra.mxu0 %v2529
        %2589 = vmatpush.bf16.msra.mxu0 %v2528
        %2590 = vmatpush.bf16.msra.mxu0 %v2527
        %2591 = vmatpush.bf16.msra.mxu0 %v2526
        %2592 = vmatpush.bf16.msra.mxu0 %v2525
        %2593 = vmatpush.bf16.msra.mxu0 %v2524
        %2594 = vmatpush.bf16.msra.mxu0 %v2523
        %2595 = vmatmul.bf16.gmra.mxu0 %v2326
        %v2596 = vpop.f32.mrf.mxu0
        %v2597 = vadd.f32 %v2394, %v2596
        %v2598 = vpop.f32.mrf.mxu0
        %2599 = vdwg.mxu0
        %2600 = vmatpush.bf16.msra.mxu0 %v2538
        %2601 = vmatpush.bf16.msra.mxu0 %v2537
        %2602 = vmatpush.bf16.msra.mxu0 %v2536
        %2603 = vmatpush.bf16.msra.mxu0 %v2535
        %2604 = vmatpush.bf16.msra.mxu0 %v2534
        %2605 = vmatpush.bf16.msra.mxu0 %v2533
        %2606 = vmatpush.bf16.msra.mxu0 %v2532
        %2607 = vmatpush.bf16.msra.mxu0 %v2531
        %2608 = vmatmul.bf16.gmra.mxu0 %v2327
        %v2609 = vpop.f32.mrf.mxu0
        %v2610 = vadd.f32 %v2597, %v2609
        %v2611 = vpop.f32.mrf.mxu0
        %2612 = vdwg.mxu0
        %2613 = vmatpush.bf16.msra.mxu0 %v2546
        %2614 = vmatpush.bf16.msra.mxu0 %v2545
        %2615 = vmatpush.bf16.msra.mxu0 %v2544
        %2616 = vmatpush.bf16.msra.mxu0 %v2543
        %2617 = vmatpush.bf16.msra.mxu0 %v2542
        %2618 = vmatpush.bf16.msra.mxu0 %v2541
        %2619 = vmatpush.bf16.msra.mxu0 %v2540
        %2620 = vmatpush.bf16.msra.mxu0 %v2539
        %2621 = vmatmul.bf16.gmra.mxu0 %v2328
        %v2622 = vpop.f32.mrf.mxu0
        %v2623 = vadd.f32 %v2610, %v2622
        %v2624 = vpop.f32.mrf.mxu0
        %2625 = vdwg.mxu0
        %2626 = vmatpush.bf16.msra.mxu0 %v2554
        %2627 = vmatpush.bf16.msra.mxu0 %v2553
        %2628 = vmatpush.bf16.msra.mxu0 %v2552
        %2629 = vmatpush.bf16.msra.mxu0 %v2551
        %2630 = vmatpush.bf16.msra.mxu0 %v2550
        %2631 = vmatpush.bf16.msra.mxu0 %v2549
        %2632 = vmatpush.bf16.msra.mxu0 %v2548
        %2633 = vmatpush.bf16.msra.mxu0 %v2547
        %2634 = vmatmul.bf16.gmra.mxu0 %v2329
        %v2635 = vpop.f32.mrf.mxu0
        %v2636 = vadd.f32 %v2623, %v2635
        %v2637 = vpop.f32.mrf.mxu0
        %2638 = vdwg.mxu0
        %v2639 = vadd.f32 %v2041, %v2636
        %s2640 = smul.u32 4, 128
        %s2641 = smul.u32 %s2640, 5
        %s2642 = sshll.u32 %s2641, 4
        %2643 = dma.done [#allocation3], %s2642
        %v2645 = vrot.slane %v2639, 1
        %v2647 = vrot.slane %v2639, 2
        %v2649 = vrot.slane %v2639, 3
        %v2651 = vrot.slane %v2639, 4
        %v2653 = vrot.slane %v2639, 5
        %v2655 = vrot.slane %v2639, 6
        %v2657 = vrot.slane %v2639, 7
        %v2659 = vpack.c.bf16 %v2639, %v2639
        %v2660 = vpack.c.bf16 %v2645, %v2645
        %v2661 = vpack.c.bf16 %v2647, %v2647
        %v2662 = vpack.c.bf16 %v2649, %v2649
        %v2663 = vpack.c.bf16 %v2651, %v2651
        %v2664 = vpack.c.bf16 %v2653, %v2653
        %v2665 = vpack.c.bf16 %v2655, %v2655
        %v2666 = vpack.c.bf16 %v2657, %v2657
        %v2667 = vld [vmem:[#allocation2] sm:$0xff]
        %v2668 = vld [vmem:[#allocation2 + $0x8] sm:$0xff]
        %v2669 = vld [vmem:[#allocation2 + $0x10] sm:$0xf]
        %v2670 = vld [vmem:[#allocation2 + $0x14] sm:$0xff]
        %v2671 = vld [vmem:[#allocation2 + $0x1c] sm:$0xff]
        %v2672 = vld [vmem:[#allocation2 + $0x24] sm:$0xf]
        %v2673 = vld [vmem:[#allocation2 + $0x28] sm:$0xff]
        %v2674 = vld [vmem:[#allocation2 + $0x30] sm:$0xff]
        %v2675 = vld [vmem:[#allocation2 + $0x38] sm:$0xf]
        %v2676 = vld [vmem:[#allocation2 + $0x3c] sm:$0xff]
        %v2677 = vld [vmem:[#allocation2 + $0x44] sm:$0xff]
        %v2678 = vld [vmem:[#allocation2 + $0x4c] sm:$0xf]
        %v2679 = vld [vmem:[#allocation2 + $0x50] sm:$0xff]
        %v2680 = vld [vmem:[#allocation2 + $0x58] sm:$0xff]
        %v2681 = vld [vmem:[#allocation2 + $0x60] sm:$0xf]
        %v2682 = vld [vmem:[#allocation2 + $0x64] sm:$0xff]
        %v2683 = vld [vmem:[#allocation2 + $0x6c] sm:$0xff]
        %v2684 = vld [vmem:[#allocation2 + $0x74] sm:$0xf]
        %v2685 = vld [vmem:[#allocation2 + $0x78] sm:$0xff]
        %v2686 = vld [vmem:[#allocation2 + $0x80] sm:$0xff]
        %v2687 = vld [vmem:[#allocation2 + $0x88] sm:$0xf]
        %v2688 = vld [vmem:[#allocation2 + $0x8c] sm:$0xff]
        %v2689 = vld [vmem:[#allocation2 + $0x94] sm:$0xff]
        %v2690 = vld [vmem:[#allocation2 + $0x9c] sm:$0xf]
        %v2691 = vld [vmem:[#allocation2 + $0xa0] sm:$0xff]
        %v2692 = vld [vmem:[#allocation2 + $0xa8] sm:$0xff]
        %v2693 = vld [vmem:[#allocation2 + $0xb0] sm:$0xf]
        %v2694 = vld [vmem:[#allocation2 + $0xb4] sm:$0xff]
        %v2695 = vld [vmem:[#allocation2 + $0xbc] sm:$0xff]
        %v2696 = vld [vmem:[#allocation2 + $0xc4] sm:$0xf]
        %v2697 = vld [vmem:[#allocation2 + $0xc8] sm:$0xff]
        %v2698 = vld [vmem:[#allocation2 + $0xd0] sm:$0xff]
        %v2699 = vld [vmem:[#allocation2 + $0xd8] sm:$0xf]
        %v2700 = vld [vmem:[#allocation2 + $0xdc] sm:$0xff]
        %v2701 = vld [vmem:[#allocation2 + $0xe4] sm:$0xff]
        %v2702 = vld [vmem:[#allocation2 + $0xec] sm:$0xf]
        %v2703 = vld [vmem:[#allocation2 + $0xf0] sm:$0xff]
        %v2704 = vld [vmem:[#allocation2 + $0xf8] sm:$0xff]
        %v2705 = vld [vmem:[#allocation2 + $0x100] sm:$0xf]
        %v2706 = vld [vmem:[#allocation2 + $0x104] sm:$0xff]
        %v2707 = vld [vmem:[#allocation2 + $0x10c] sm:$0xff]
        %v2708 = vld [vmem:[#allocation2 + $0x114] sm:$0xf]
        %v2709 = vld [vmem:[#allocation2 + $0x118] sm:$0xff]
        %v2710 = vld [vmem:[#allocation2 + $0x120] sm:$0xff]
        %v2711 = vld [vmem:[#allocation2 + $0x128] sm:$0xf]
        %v2712 = vld [vmem:[#allocation2 + $0x12c] sm:$0xff]
        %v2713 = vld [vmem:[#allocation2 + $0x134] sm:$0xff]
        %v2714 = vld [vmem:[#allocation2 + $0x13c] sm:$0xf]
        %v2715 = vld [vmem:[#allocation2 + $0x140] sm:$0xff]
        %v2716 = vld [vmem:[#allocation2 + $0x148] sm:$0xff]
        %v2717 = vld [vmem:[#allocation2 + $0x150] sm:$0xf]
        %v2718 = vld [vmem:[#allocation2 + $0x154] sm:$0xff]
        %v2719 = vld [vmem:[#allocation2 + $0x15c] sm:$0xff]
        %v2720 = vld [vmem:[#allocation2 + $0x164] sm:$0xf]
        %v2721 = vld [vmem:[#allocation2 + $0x168] sm:$0xff]
        %v2722 = vld [vmem:[#allocation2 + $0x170] sm:$0xff]
        %v2723 = vld [vmem:[#allocation2 + $0x178] sm:$0xf]
        %v2724 = vld [vmem:[#allocation2 + $0x17c] sm:$0xff]
        %v2725 = vld [vmem:[#allocation2 + $0x184] sm:$0xff]
        %v2726 = vld [vmem:[#allocation2 + $0x18c] sm:$0xf]
        %v2727 = vld [vmem:[#allocation2 + $0x190] sm:$0xff]
        %v2728 = vld [vmem:[#allocation2 + $0x198] sm:$0xff]
        %v2729 = vld [vmem:[#allocation2 + $0x1a0] sm:$0xf]
        %v2730 = vld [vmem:[#allocation2 + $0x1a4] sm:$0xff]
        %v2731 = vld [vmem:[#allocation2 + $0x1ac] sm:$0xff]
        %v2732 = vld [vmem:[#allocation2 + $0x1b4] sm:$0xf]
        %v2733 = vld [vmem:[#allocation2 + $0x1b8] sm:$0xff]
        %v2734 = vld [vmem:[#allocation2 + $0x1c0] sm:$0xff]
        %v2735 = vld [vmem:[#allocation2 + $0x1c8] sm:$0xf]
        %v2736 = vld [vmem:[#allocation2 + $0x1cc] sm:$0xff]
        %v2737 = vld [vmem:[#allocation2 + $0x1d4] sm:$0xff]
        %v2738 = vld [vmem:[#allocation2 + $0x1dc] sm:$0xf]
        %v2739 = vld [vmem:[#allocation2 + $0x1e0] sm:$0xff]
        %v2740 = vld [vmem:[#allocation2 + $0x1e8] sm:$0xff]
        %v2741 = vld [vmem:[#allocation2 + $0x1f0] sm:$0xf]
        %v2742 = vld [vmem:[#allocation2 + $0x1f4] sm:$0xff]
        %v2743 = vld [vmem:[#allocation2 + $0x1fc] sm:$0xff]
        %v2744 = vld [vmem:[#allocation2 + $0x204] sm:$0xf]
        %v2745 = vld [vmem:[#allocation2 + $0x208] sm:$0xff]
        %v2746 = vld [vmem:[#allocation2 + $0x210] sm:$0xff]
        %v2747 = vld [vmem:[#allocation2 + $0x218] sm:$0xf]
        %v2748 = vld [vmem:[#allocation2 + $0x21c] sm:$0xff]
        %v2749 = vld [vmem:[#allocation2 + $0x224] sm:$0xff]
        %v2750 = vld [vmem:[#allocation2 + $0x22c] sm:$0xf]
        %v2751 = vld [vmem:[#allocation2 + $0x230] sm:$0xff]
        %v2752 = vld [vmem:[#allocation2 + $0x238] sm:$0xff]
        %v2753 = vld [vmem:[#allocation2 + $0x240] sm:$0xf]
        %v2754 = vld [vmem:[#allocation2 + $0x244] sm:$0xff]
        %v2755 = vld [vmem:[#allocation2 + $0x24c] sm:$0xff]
        %v2756 = vld [vmem:[#allocation2 + $0x254] sm:$0xf]
        %v2757 = vld [vmem:[#allocation2 + $0x258] sm:$0xff]
        %v2758 = vld [vmem:[#allocation2 + $0x260] sm:$0xff]
        %v2759 = vld [vmem:[#allocation2 + $0x268] sm:$0xf]
        %v2760 = vld [vmem:[#allocation2 + $0x26c] sm:$0xff]
        %v2761 = vld [vmem:[#allocation2 + $0x274] sm:$0xff]
        %v2762 = vld [vmem:[#allocation2 + $0x27c] sm:$0xf]
        %v2763 = vld [vmem:[#allocation2 + $0x280] sm:$0xff]
        %v2764 = vld [vmem:[#allocation2 + $0x288] sm:$0xff]
        %v2765 = vld [vmem:[#allocation2 + $0x290] sm:$0xf]
        %v2766 = vld [vmem:[#allocation2 + $0x294] sm:$0xff]
        %v2767 = vld [vmem:[#allocation2 + $0x29c] sm:$0xff]
        %v2768 = vld [vmem:[#allocation2 + $0x2a4] sm:$0xf]
        %v2769 = vld [vmem:[#allocation2 + $0x2a8] sm:$0xff]
        %v2770 = vld [vmem:[#allocation2 + $0x2b0] sm:$0xff]
        %v2771 = vld [vmem:[#allocation2 + $0x2b8] sm:$0xf]
        %v2772 = vld [vmem:[#allocation2 + $0x2bc] sm:$0xff]
        %v2773 = vld [vmem:[#allocation2 + $0x2c4] sm:$0xff]
        %v2774 = vld [vmem:[#allocation2 + $0x2cc] sm:$0xf]
        %v2775 = vld [vmem:[#allocation2 + $0x2d0] sm:$0xff]
        %v2776 = vld [vmem:[#allocation2 + $0x2d8] sm:$0xff]
        %v2777 = vld [vmem:[#allocation2 + $0x2e0] sm:$0xf]
        %v2778 = vld [vmem:[#allocation2 + $0x2e4] sm:$0xff]
        %v2779 = vld [vmem:[#allocation2 + $0x2ec] sm:$0xff]
        %v2780 = vld [vmem:[#allocation2 + $0x2f4] sm:$0xf]
        %v2781 = vld [vmem:[#allocation2 + $0x2f8] sm:$0xff]
        %v2782 = vld [vmem:[#allocation2 + $0x300] sm:$0xff]
        %v2783 = vld [vmem:[#allocation2 + $0x308] sm:$0xf]
        %v2784 = vld [vmem:[#allocation2 + $0x30c] sm:$0xff]
        %v2785 = vld [vmem:[#allocation2 + $0x314] sm:$0xff]
        %v2786 = vld [vmem:[#allocation2 + $0x31c] sm:$0xf]
        %v2787 = vld [vmem:[#allocation2 + $0x320] sm:$0xff]
        %v2788 = vld [vmem:[#allocation2 + $0x328] sm:$0xff]
        %v2789 = vld [vmem:[#allocation2 + $0x330] sm:$0xf]
        %v2790 = vld [vmem:[#allocation2 + $0x334] sm:$0xff]
        %v2791 = vld [vmem:[#allocation2 + $0x33c] sm:$0xff]
        %v2792 = vld [vmem:[#allocation2 + $0x344] sm:$0xf]
        %v2793 = vld [vmem:[#allocation2 + $0x348] sm:$0xff]
        %v2794 = vld [vmem:[#allocation2 + $0x350] sm:$0xff]
        %v2795 = vld [vmem:[#allocation2 + $0x358] sm:$0xf]
        %v2796 = vld [vmem:[#allocation2 + $0x35c] sm:$0xff]
        %v2797 = vld [vmem:[#allocation2 + $0x364] sm:$0xff]
        %v2798 = vld [vmem:[#allocation2 + $0x36c] sm:$0xf]
        %v2799 = vld [vmem:[#allocation2 + $0x370] sm:$0xff]
        %v2800 = vld [vmem:[#allocation2 + $0x378] sm:$0xff]
        %v2801 = vld [vmem:[#allocation2 + $0x380] sm:$0xf]
        %v2802 = vld [vmem:[#allocation2 + $0x384] sm:$0xff]
        %v2803 = vld [vmem:[#allocation2 + $0x38c] sm:$0xff]
        %v2804 = vld [vmem:[#allocation2 + $0x394] sm:$0xf]
        %v2805 = vld [vmem:[#allocation2 + $0x398] sm:$0xff]
        %v2806 = vld [vmem:[#allocation2 + $0x3a0] sm:$0xff]
        %v2807 = vld [vmem:[#allocation2 + $0x3a8] sm:$0xf]
        %v2808 = vld [vmem:[#allocation2 + $0x3ac] sm:$0xff]
        %v2809 = vld [vmem:[#allocation2 + $0x3b4] sm:$0xff]
        %v2810 = vld [vmem:[#allocation2 + $0x3bc] sm:$0xf]
        %v2811 = vld [vmem:[#allocation2 + $0x3c0] sm:$0xff]
        %v2812 = vld [vmem:[#allocation2 + $0x3c8] sm:$0xff]
        %v2813 = vld [vmem:[#allocation2 + $0x3d0] sm:$0xf]
        %v2814 = vld [vmem:[#allocation2 + $0x3d4] sm:$0xff]
        %v2815 = vld [vmem:[#allocation2 + $0x3dc] sm:$0xff]
        %v2816 = vld [vmem:[#allocation2 + $0x3e4] sm:$0xf]
        %v2817 = vld [vmem:[#allocation2 + $0x3e8] sm:$0xff]
        %v2818 = vld [vmem:[#allocation2 + $0x3f0] sm:$0xff]
        %v2819 = vld [vmem:[#allocation2 + $0x3f8] sm:$0xf]
        %v2820 = vld [vmem:[#allocation2 + $0x3fc] sm:$0xff]
        %v2821 = vld [vmem:[#allocation2 + $0x404] sm:$0xff]
        %v2822 = vld [vmem:[#allocation2 + $0x40c] sm:$0xf]
        %v2823 = vld [vmem:[#allocation2 + $0x410] sm:$0xff]
        %v2824 = vld [vmem:[#allocation2 + $0x418] sm:$0xff]
        %v2825 = vld [vmem:[#allocation2 + $0x420] sm:$0xf]
        %v2826 = vld [vmem:[#allocation2 + $0x424] sm:$0xff]
        %v2827 = vld [vmem:[#allocation2 + $0x42c] sm:$0xff]
        %v2828 = vld [vmem:[#allocation2 + $0x434] sm:$0xf]
        %v2829 = vld [vmem:[#allocation2 + $0x438] sm:$0xff]
        %v2830 = vld [vmem:[#allocation2 + $0x440] sm:$0xff]
        %v2831 = vld [vmem:[#allocation2 + $0x448] sm:$0xf]
        %v2832 = vld [vmem:[#allocation2 + $0x44c] sm:$0xff]
        %v2833 = vld [vmem:[#allocation2 + $0x454] sm:$0xff]
        %v2834 = vld [vmem:[#allocation2 + $0x45c] sm:$0xf]
        %v2835 = vld [vmem:[#allocation2 + $0x460] sm:$0xff]
        %v2836 = vld [vmem:[#allocation2 + $0x468] sm:$0xff]
        %v2837 = vld [vmem:[#allocation2 + $0x470] sm:$0xf]
        %v2838 = vld [vmem:[#allocation2 + $0x474] sm:$0xff]
        %v2839 = vld [vmem:[#allocation2 + $0x47c] sm:$0xff]
        %v2840 = vld [vmem:[#allocation2 + $0x484] sm:$0xf]
        %v2841 = vld [vmem:[#allocation2 + $0x488] sm:$0xff]
        %v2842 = vld [vmem:[#allocation2 + $0x490] sm:$0xff]
        %v2843 = vld [vmem:[#allocation2 + $0x498] sm:$0xf]
        %v2844 = vld [vmem:[#allocation2 + $0x49c] sm:$0xff]
        %v2845 = vld [vmem:[#allocation2 + $0x4a4] sm:$0xff]
        %v2846 = vld [vmem:[#allocation2 + $0x4ac] sm:$0xf]
        %v2847 = vld [vmem:[#allocation2 + $0x4b0] sm:$0xff]
        %v2848 = vld [vmem:[#allocation2 + $0x4b8] sm:$0xff]
        %v2849 = vld [vmem:[#allocation2 + $0x4c0] sm:$0xf]
        %v2850 = vld [vmem:[#allocation2 + $0x4c4] sm:$0xff]
        %v2851 = vld [vmem:[#allocation2 + $0x4cc] sm:$0xff]
        %v2852 = vld [vmem:[#allocation2 + $0x4d4] sm:$0xf]
        %v2853 = vld [vmem:[#allocation2 + $0x4d8] sm:$0xff]
        %v2854 = vld [vmem:[#allocation2 + $0x4e0] sm:$0xff]
        %v2855 = vld [vmem:[#allocation2 + $0x4e8] sm:$0xf]
        %v2856 = vld [vmem:[#allocation2 + $0x4ec] sm:$0xff]
        %v2857 = vld [vmem:[#allocation2 + $0x4f4] sm:$0xff]
        %v2858 = vld [vmem:[#allocation2 + $0x4fc] sm:$0xf]
        %v2859 = vld [vmem:[#allocation2 + $0x500] sm:$0xff]
        %v2860 = vld [vmem:[#allocation2 + $0x508] sm:$0xff]
        %v2861 = vld [vmem:[#allocation2 + $0x510] sm:$0xf]
        %v2862 = vld [vmem:[#allocation2 + $0x514] sm:$0xff]
        %v2863 = vld [vmem:[#allocation2 + $0x51c] sm:$0xff]
        %v2864 = vld [vmem:[#allocation2 + $0x524] sm:$0xf]
        %v2865 = vld [vmem:[#allocation2 + $0x528] sm:$0xff]
        %v2866 = vld [vmem:[#allocation2 + $0x530] sm:$0xff]
        %v2867 = vld [vmem:[#allocation2 + $0x538] sm:$0xf]
        %v2868 = vld [vmem:[#allocation2 + $0x53c] sm:$0xff]
        %v2869 = vld [vmem:[#allocation2 + $0x544] sm:$0xff]
        %v2870 = vld [vmem:[#allocation2 + $0x54c] sm:$0xf]
        %v2871 = vld [vmem:[#allocation2 + $0x550] sm:$0xff]
        %v2872 = vld [vmem:[#allocation2 + $0x558] sm:$0xff]
        %v2873 = vld [vmem:[#allocation2 + $0x560] sm:$0xf]
        %v2874 = vld [vmem:[#allocation2 + $0x564] sm:$0xff]
        %v2875 = vld [vmem:[#allocation2 + $0x56c] sm:$0xff]
        %v2876 = vld [vmem:[#allocation2 + $0x574] sm:$0xf]
        %v2877 = vld [vmem:[#allocation2 + $0x578] sm:$0xff]
        %v2878 = vld [vmem:[#allocation2 + $0x580] sm:$0xff]
        %v2879 = vld [vmem:[#allocation2 + $0x588] sm:$0xf]
        %v2880 = vld [vmem:[#allocation2 + $0x58c] sm:$0xff]
        %v2881 = vld [vmem:[#allocation2 + $0x594] sm:$0xff]
        %v2882 = vld [vmem:[#allocation2 + $0x59c] sm:$0xf]
        %v2883 = vld [vmem:[#allocation2 + $0x5a0] sm:$0xff]
        %v2884 = vld [vmem:[#allocation2 + $0x5a8] sm:$0xff]
        %v2885 = vld [vmem:[#allocation2 + $0x5b0] sm:$0xf]
        %v2886 = vld [vmem:[#allocation2 + $0x5b4] sm:$0xff]
        %v2887 = vld [vmem:[#allocation2 + $0x5bc] sm:$0xff]
        %v2888 = vld [vmem:[#allocation2 + $0x5c4] sm:$0xf]
        %v2889 = vld [vmem:[#allocation2 + $0x5c8] sm:$0xff]
        %v2890 = vld [vmem:[#allocation2 + $0x5d0] sm:$0xff]
        %v2891 = vld [vmem:[#allocation2 + $0x5d8] sm:$0xf]
        %v2892 = vld [vmem:[#allocation2 + $0x5dc] sm:$0xff]
        %v2893 = vld [vmem:[#allocation2 + $0x5e4] sm:$0xff]
        %v2894 = vld [vmem:[#allocation2 + $0x5ec] sm:$0xf]
        %v2895 = vld [vmem:[#allocation2 + $0x5f0] sm:$0xff]
        %v2896 = vld [vmem:[#allocation2 + $0x5f8] sm:$0xff]
        %v2897 = vld [vmem:[#allocation2 + $0x600] sm:$0xf]
        %v2898 = vld [vmem:[#allocation2 + $0x604] sm:$0xff]
        %v2899 = vld [vmem:[#allocation2 + $0x60c] sm:$0xff]
        %v2900 = vld [vmem:[#allocation2 + $0x614] sm:$0xf]
        %v2901 = vld [vmem:[#allocation2 + $0x618] sm:$0xff]
        %v2902 = vld [vmem:[#allocation2 + $0x620] sm:$0xff]
        %v2903 = vld [vmem:[#allocation2 + $0x628] sm:$0xf]
        %v2904 = vld [vmem:[#allocation2 + $0x62c] sm:$0xff]
        %v2905 = vld [vmem:[#allocation2 + $0x634] sm:$0xff]
        %v2906 = vld [vmem:[#allocation2 + $0x63c] sm:$0xf]
        %v2907 = vld [vmem:[#allocation2 + $0x640] sm:$0xff]
        %v2908 = vld [vmem:[#allocation2 + $0x648] sm:$0xff]
        %v2909 = vld [vmem:[#allocation2 + $0x650] sm:$0xf]
        %v2910 = vld [vmem:[#allocation2 + $0x654] sm:$0xff]
        %v2911 = vld [vmem:[#allocation2 + $0x65c] sm:$0xff]
        %v2912 = vld [vmem:[#allocation2 + $0x664] sm:$0xf]
        %v2913 = vld [vmem:[#allocation2 + $0x668] sm:$0xff]
        %v2914 = vld [vmem:[#allocation2 + $0x670] sm:$0xff]
        %v2915 = vld [vmem:[#allocation2 + $0x678] sm:$0xf]
        %v2916 = vld [vmem:[#allocation2 + $0x67c] sm:$0xff]
        %v2917 = vld [vmem:[#allocation2 + $0x684] sm:$0xff]
        %v2918 = vld [vmem:[#allocation2 + $0x68c] sm:$0xf]
        %v2919 = vld [vmem:[#allocation2 + $0x690] sm:$0xff]
        %v2920 = vld [vmem:[#allocation2 + $0x698] sm:$0xff]
        %v2921 = vld [vmem:[#allocation2 + $0x6a0] sm:$0xf]
        %v2922 = vld [vmem:[#allocation2 + $0x6a4] sm:$0xff]
        %v2923 = vld [vmem:[#allocation2 + $0x6ac] sm:$0xff]
        %v2924 = vld [vmem:[#allocation2 + $0x6b4] sm:$0xf]
        %v2925 = vld [vmem:[#allocation2 + $0x6b8] sm:$0xff]
        %v2926 = vld [vmem:[#allocation2 + $0x6c0] sm:$0xff]
        %v2927 = vld [vmem:[#allocation2 + $0x6c8] sm:$0xf]
        %v2928 = vld [vmem:[#allocation2 + $0x6cc] sm:$0xff]
        %v2929 = vld [vmem:[#allocation2 + $0x6d4] sm:$0xff]
        %v2930 = vld [vmem:[#allocation2 + $0x6dc] sm:$0xf]
        %v2931 = vld [vmem:[#allocation2 + $0x6e0] sm:$0xff]
        %v2932 = vld [vmem:[#allocation2 + $0x6e8] sm:$0xff]
        %v2933 = vld [vmem:[#allocation2 + $0x6f0] sm:$0xf]
        %v2934 = vld [vmem:[#allocation2 + $0x6f4] sm:$0xff]
        %v2935 = vld [vmem:[#allocation2 + $0x6fc] sm:$0xff]
        %v2936 = vld [vmem:[#allocation2 + $0x704] sm:$0xf]
        %v2937 = vld [vmem:[#allocation2 + $0x708] sm:$0xff]
        %v2938 = vld [vmem:[#allocation2 + $0x710] sm:$0xff]
        %v2939 = vld [vmem:[#allocation2 + $0x718] sm:$0xf]
        %v2940 = vld [vmem:[#allocation2 + $0x71c] sm:$0xff]
        %v2941 = vld [vmem:[#allocation2 + $0x724] sm:$0xff]
        %v2942 = vld [vmem:[#allocation2 + $0x72c] sm:$0xf]
        %v2943 = vld [vmem:[#allocation2 + $0x730] sm:$0xff]
        %v2944 = vld [vmem:[#allocation2 + $0x738] sm:$0xff]
        %v2945 = vld [vmem:[#allocation2 + $0x740] sm:$0xf]
        %v2946 = vld [vmem:[#allocation2 + $0x744] sm:$0xff]
        %v2947 = vld [vmem:[#allocation2 + $0x74c] sm:$0xff]
        %v2948 = vld [vmem:[#allocation2 + $0x754] sm:$0xf]
        %v2949 = vld [vmem:[#allocation2 + $0x758] sm:$0xff]
        %v2950 = vld [vmem:[#allocation2 + $0x760] sm:$0xff]
        %v2951 = vld [vmem:[#allocation2 + $0x768] sm:$0xf]
        %v2952 = vld [vmem:[#allocation2 + $0x76c] sm:$0xff]
        %v2953 = vld [vmem:[#allocation2 + $0x774] sm:$0xff]
        %v2954 = vld [vmem:[#allocation2 + $0x77c] sm:$0xf]
        %v2955 = vld [vmem:[#allocation2 + $0x780] sm:$0xff]
        %v2956 = vld [vmem:[#allocation2 + $0x788] sm:$0xff]
        %v2957 = vld [vmem:[#allocation2 + $0x790] sm:$0xf]
        %v2958 = vld [vmem:[#allocation2 + $0x794] sm:$0xff]
        %v2959 = vld [vmem:[#allocation2 + $0x79c] sm:$0xff]
        %v2960 = vld [vmem:[#allocation2 + $0x7a4] sm:$0xf]
        %v2961 = vld [vmem:[#allocation2 + $0x7a8] sm:$0xff]
        %v2962 = vld [vmem:[#allocation2 + $0x7b0] sm:$0xff]
        %v2963 = vld [vmem:[#allocation2 + $0x7b8] sm:$0xf]
        %v2964 = vld [vmem:[#allocation2 + $0x7bc] sm:$0xff]
        %v2965 = vld [vmem:[#allocation2 + $0x7c4] sm:$0xff]
        %v2966 = vld [vmem:[#allocation2 + $0x7cc] sm:$0xf]
        %v2967 = vld [vmem:[#allocation2 + $0x7d0] sm:$0xff]
        %v2968 = vld [vmem:[#allocation2 + $0x7d8] sm:$0xff]
        %v2969 = vld [vmem:[#allocation2 + $0x7e0] sm:$0xf]
        %v2970 = vld [vmem:[#allocation2 + $0x7e4] sm:$0xff]
        %v2971 = vld [vmem:[#allocation2 + $0x7ec] sm:$0xff]
        %v2972 = vld [vmem:[#allocation2 + $0x7f4] sm:$0xf]
        %v2973 = vld [vmem:[#allocation2 + $0x7f8] sm:$0xff]
        %v2974 = vld [vmem:[#allocation2 + $0x800] sm:$0xff]
        %v2975 = vld [vmem:[#allocation2 + $0x808] sm:$0xf]
        %v2976 = vld [vmem:[#allocation2 + $0x80c] sm:$0xff]
        %v2977 = vld [vmem:[#allocation2 + $0x814] sm:$0xff]
        %v2978 = vld [vmem:[#allocation2 + $0x81c] sm:$0xf]
        %v2979 = vld [vmem:[#allocation2 + $0x820] sm:$0xff]
        %v2980 = vld [vmem:[#allocation2 + $0x828] sm:$0xff]
        %v2981 = vld [vmem:[#allocation2 + $0x830] sm:$0xf]
        %v2982 = vld [vmem:[#allocation2 + $0x834] sm:$0xff]
        %v2983 = vld [vmem:[#allocation2 + $0x83c] sm:$0xff]
        %v2984 = vld [vmem:[#allocation2 + $0x844] sm:$0xf]
        %v2985 = vld [vmem:[#allocation2 + $0x848] sm:$0xff]
        %v2986 = vld [vmem:[#allocation2 + $0x850] sm:$0xff]
        %v2987 = vld [vmem:[#allocation2 + $0x858] sm:$0xf]
        %v2988 = vld [vmem:[#allocation2 + $0x85c] sm:$0xff]
        %v2989 = vld [vmem:[#allocation2 + $0x864] sm:$0xff]
        %v2990 = vld [vmem:[#allocation2 + $0x86c] sm:$0xf]
        %v2991 = vld [vmem:[#allocation2 + $0x870] sm:$0xff]
        %v2992 = vld [vmem:[#allocation2 + $0x878] sm:$0xff]
        %v2993 = vld [vmem:[#allocation2 + $0x880] sm:$0xf]
        %v2994 = vld [vmem:[#allocation2 + $0x884] sm:$0xff]
        %v2995 = vld [vmem:[#allocation2 + $0x88c] sm:$0xff]
        %v2996 = vld [vmem:[#allocation2 + $0x894] sm:$0xf]
        %v2997 = vld [vmem:[#allocation2 + $0x898] sm:$0xff]
        %v2998 = vld [vmem:[#allocation2 + $0x8a0] sm:$0xff]
        %v2999 = vld [vmem:[#allocation2 + $0x8a8] sm:$0xf]
        %v3000 = vld [vmem:[#allocation2 + $0x8ac] sm:$0xff]
        %v3001 = vld [vmem:[#allocation2 + $0x8b4] sm:$0xff]
        %v3002 = vld [vmem:[#allocation2 + $0x8bc] sm:$0xf]
        %v3003 = vld [vmem:[#allocation2 + $0x8c0] sm:$0xff]
        %v3004 = vld [vmem:[#allocation2 + $0x8c8] sm:$0xff]
        %v3005 = vld [vmem:[#allocation2 + $0x8d0] sm:$0xf]
        %v3006 = vld [vmem:[#allocation2 + $0x8d4] sm:$0xff]
        %v3007 = vld [vmem:[#allocation2 + $0x8dc] sm:$0xff]
        %v3008 = vld [vmem:[#allocation2 + $0x8e4] sm:$0xf]
        %v3009 = vld [vmem:[#allocation2 + $0x8e8] sm:$0xff]
        %v3010 = vld [vmem:[#allocation2 + $0x8f0] sm:$0xff]
        %v3011 = vld [vmem:[#allocation2 + $0x8f8] sm:$0xf]
        %v3012 = vld [vmem:[#allocation2 + $0x8fc] sm:$0xff]
        %v3013 = vld [vmem:[#allocation2 + $0x904] sm:$0xff]
        %v3014 = vld [vmem:[#allocation2 + $0x90c] sm:$0xf]
        %v3015 = vld [vmem:[#allocation2 + $0x910] sm:$0xff]
        %v3016 = vld [vmem:[#allocation2 + $0x918] sm:$0xff]
        %v3017 = vld [vmem:[#allocation2 + $0x920] sm:$0xf]
        %v3018 = vld [vmem:[#allocation2 + $0x924] sm:$0xff]
        %v3019 = vld [vmem:[#allocation2 + $0x92c] sm:$0xff]
        %v3020 = vld [vmem:[#allocation2 + $0x934] sm:$0xf]
        %v3021 = vld [vmem:[#allocation2 + $0x938] sm:$0xff]
        %v3022 = vld [vmem:[#allocation2 + $0x940] sm:$0xff]
        %v3023 = vld [vmem:[#allocation2 + $0x948] sm:$0xf]
        %v3024 = vld [vmem:[#allocation2 + $0x94c] sm:$0xff]
        %v3025 = vld [vmem:[#allocation2 + $0x954] sm:$0xff]
        %v3026 = vld [vmem:[#allocation2 + $0x95c] sm:$0xf]
        %v3027 = vld [vmem:[#allocation2 + $0x960] sm:$0xff]
        %v3028 = vld [vmem:[#allocation2 + $0x968] sm:$0xff]
        %v3029 = vld [vmem:[#allocation2 + $0x970] sm:$0xf]
        %v3030 = vld [vmem:[#allocation2 + $0x974] sm:$0xff]
        %v3031 = vld [vmem:[#allocation2 + $0x97c] sm:$0xff]
        %v3032 = vld [vmem:[#allocation2 + $0x984] sm:$0xf]
        %v3033 = vld [vmem:[#allocation2 + $0x988] sm:$0xff]
        %v3034 = vld [vmem:[#allocation2 + $0x990] sm:$0xff]
        %v3035 = vld [vmem:[#allocation2 + $0x998] sm:$0xf]
        %v3036 = vld [vmem:[#allocation2 + $0x99c] sm:$0xff]
        %v3037 = vld [vmem:[#allocation2 + $0x9a4] sm:$0xff]
        %v3038 = vld [vmem:[#allocation2 + $0x9ac] sm:$0xf]
        %v3039 = vld [vmem:[#allocation2 + $0x9b0] sm:$0xff]
        %v3040 = vld [vmem:[#allocation2 + $0x9b8] sm:$0xff]
        %v3041 = vld [vmem:[#allocation2 + $0x9c0] sm:$0xf]
        %v3042 = vld [vmem:[#allocation2 + $0x9c4] sm:$0xff]
        %v3043 = vld [vmem:[#allocation2 + $0x9cc] sm:$0xff]
        %v3044 = vld [vmem:[#allocation2 + $0x9d4] sm:$0xf]
        %v3045 = vld [vmem:[#allocation2 + $0x9d8] sm:$0xff]
        %v3046 = vld [vmem:[#allocation2 + $0x9e0] sm:$0xff]
        %v3047 = vld [vmem:[#allocation2 + $0x9e8] sm:$0xf]
        %v3048 = vld [vmem:[#allocation2 + $0x9ec] sm:$0xff]
        %v3049 = vld [vmem:[#allocation2 + $0x9f4] sm:$0xff]
        %v3050 = vld [vmem:[#allocation2 + $0x9fc] sm:$0xf]
        %s3051 = scalar_lea.vmem [#allocation25], 44
        %v3052 = vld [vmem:[%s3051] ss:$8 sm:$0xf]
        %v3053 = vld [vmem:[%s3051] ss:$8 sm:$0x10]
        %v3054 = vor.u32 %v3052, %v3053
        %v3439 = vunpack.c.l.b16 %v2667
        %v3440 = vunpack.c.h.b16 %v2667
        %v3441 = vunpack.c.l.b16 %v2668
        %v3442 = vunpack.c.h.b16 %v2668
        %v3443 = vunpack.c.l.b16 %v2669
        %v3444 = vunpack.c.l.b16 %v2670
        %v3445 = vunpack.c.h.b16 %v2670
        %v3446 = vunpack.c.l.b16 %v2671
        %v3447 = vunpack.c.h.b16 %v2671
        %v3448 = vunpack.c.l.b16 %v2672
        %v3449 = vunpack.c.l.b16 %v2673
        %v3450 = vunpack.c.h.b16 %v2673
        %v3451 = vunpack.c.l.b16 %v2674
        %v3452 = vunpack.c.h.b16 %v2674
        %v3453 = vunpack.c.l.b16 %v2675
        %v3454 = vunpack.c.l.b16 %v2676
        %v3455 = vunpack.c.h.b16 %v2676
        %v3456 = vunpack.c.l.b16 %v2677
        %v3457 = vunpack.c.h.b16 %v2677
        %v3458 = vunpack.c.l.b16 %v2678
        %v3459 = vunpack.c.l.b16 %v2679
        %v3460 = vunpack.c.h.b16 %v2679
        %v3461 = vunpack.c.l.b16 %v2680
        %v3462 = vunpack.c.h.b16 %v2680
        %v3463 = vunpack.c.l.b16 %v2681
        %v3464 = vunpack.c.l.b16 %v2682
        %v3465 = vunpack.c.h.b16 %v2682
        %v3466 = vunpack.c.l.b16 %v2683
        %v3467 = vunpack.c.h.b16 %v2683
        %v3468 = vunpack.c.l.b16 %v2684
        %v3469 = vunpack.c.l.b16 %v2685
        %v3470 = vunpack.c.h.b16 %v2685
        %v3471 = vunpack.c.l.b16 %v2686
        %v3472 = vunpack.c.h.b16 %v2686
        %v3473 = vunpack.c.l.b16 %v2687
        %v3474 = vunpack.c.l.b16 %v2688
        %v3475 = vunpack.c.h.b16 %v2688
        %v3476 = vunpack.c.l.b16 %v2689
        %v3477 = vunpack.c.h.b16 %v2689
        %v3478 = vunpack.c.l.b16 %v2690
        %v3479 = vunpack.c.l.b16 %v2691
        %v3480 = vunpack.c.h.b16 %v2691
        %v3481 = vunpack.c.l.b16 %v2692
        %v3482 = vunpack.c.h.b16 %v2692
        %v3483 = vunpack.c.l.b16 %v2693
        %v3484 = vunpack.c.l.b16 %v2694
        %v3485 = vunpack.c.h.b16 %v2694
        %v3486 = vunpack.c.l.b16 %v2695
        %v3487 = vunpack.c.h.b16 %v2695
        %v3488 = vunpack.c.l.b16 %v2696
        %v3489 = vunpack.c.l.b16 %v2697
        %v3490 = vunpack.c.h.b16 %v2697
        %v3491 = vunpack.c.l.b16 %v2698
        %v3492 = vunpack.c.h.b16 %v2698
        %v3493 = vunpack.c.l.b16 %v2699
        %v3494 = vunpack.c.l.b16 %v2700
        %v3495 = vunpack.c.h.b16 %v2700
        %v3496 = vunpack.c.l.b16 %v2701
        %v3497 = vunpack.c.h.b16 %v2701
        %v3498 = vunpack.c.l.b16 %v2702
        %v3499 = vunpack.c.l.b16 %v2703
        %v3500 = vunpack.c.h.b16 %v2703
        %v3501 = vunpack.c.l.b16 %v2704
        %v3502 = vunpack.c.h.b16 %v2704
        %v3503 = vunpack.c.l.b16 %v2705
        %v3504 = vunpack.c.l.b16 %v2706
        %v3505 = vunpack.c.h.b16 %v2706
        %v3506 = vunpack.c.l.b16 %v2707
        %v3507 = vunpack.c.h.b16 %v2707
        %v3508 = vunpack.c.l.b16 %v2708
        %v3509 = vunpack.c.l.b16 %v2709
        %v3510 = vunpack.c.h.b16 %v2709
        %v3511 = vunpack.c.l.b16 %v2710
        %v3512 = vunpack.c.h.b16 %v2710
        %v3513 = vunpack.c.l.b16 %v2711
        %v3514 = vunpack.c.l.b16 %v2712
        %v3515 = vunpack.c.h.b16 %v2712
        %v3516 = vunpack.c.l.b16 %v2713
        %v3517 = vunpack.c.h.b16 %v2713
        %v3518 = vunpack.c.l.b16 %v2714
        %v3519 = vunpack.c.l.b16 %v2715
        %v3520 = vunpack.c.h.b16 %v2715
        %v3521 = vunpack.c.l.b16 %v2716
        %v3522 = vunpack.c.h.b16 %v2716
        %v3523 = vunpack.c.l.b16 %v2717
        %v3524 = vunpack.c.l.b16 %v2718
        %v3525 = vunpack.c.h.b16 %v2718
        %v3526 = vunpack.c.l.b16 %v2719
        %v3527 = vunpack.c.h.b16 %v2719
        %v3528 = vunpack.c.l.b16 %v2720
        %v3529 = vunpack.c.l.b16 %v2721
        %v3530 = vunpack.c.h.b16 %v2721
        %v3531 = vunpack.c.l.b16 %v2722
        %v3532 = vunpack.c.h.b16 %v2722
        %v3533 = vunpack.c.l.b16 %v2723
        %v3534 = vunpack.c.l.b16 %v2724
        %v3535 = vunpack.c.h.b16 %v2724
        %v3536 = vunpack.c.l.b16 %v2725
        %v3537 = vunpack.c.h.b16 %v2725
        %v3538 = vunpack.c.l.b16 %v2726
        %v3539 = vunpack.c.l.b16 %v2727
        %v3540 = vunpack.c.h.b16 %v2727
        %v3541 = vunpack.c.l.b16 %v2728
        %v3542 = vunpack.c.h.b16 %v2728
        %v3543 = vunpack.c.l.b16 %v2729
        %v3544 = vunpack.c.l.b16 %v2730
        %v3545 = vunpack.c.h.b16 %v2730
        %v3546 = vunpack.c.l.b16 %v2731
        %v3547 = vunpack.c.h.b16 %v2731
        %v3548 = vunpack.c.l.b16 %v2732
        %v3549 = vunpack.c.l.b16 %v2733
        %v3550 = vunpack.c.h.b16 %v2733
        %v3551 = vunpack.c.l.b16 %v2734
        %v3552 = vunpack.c.h.b16 %v2734
        %v3553 = vunpack.c.l.b16 %v2735
        %v3554 = vunpack.c.l.b16 %v2736
        %v3555 = vunpack.c.h.b16 %v2736
        %v3556 = vunpack.c.l.b16 %v2737
        %v3557 = vunpack.c.h.b16 %v2737
        %v3558 = vunpack.c.l.b16 %v2738
        %v3559 = vunpack.c.l.b16 %v2739
        %v3560 = vunpack.c.h.b16 %v2739
        %v3561 = vunpack.c.l.b16 %v2740
        %v3562 = vunpack.c.h.b16 %v2740
        %v3563 = vunpack.c.l.b16 %v2741
        %v3564 = vunpack.c.l.b16 %v2742
        %v3565 = vunpack.c.h.b16 %v2742
        %v3566 = vunpack.c.l.b16 %v2743
        %v3567 = vunpack.c.h.b16 %v2743
        %v3568 = vunpack.c.l.b16 %v2744
        %v3569 = vunpack.c.l.b16 %v2745
        %v3570 = vunpack.c.h.b16 %v2745
        %v3571 = vunpack.c.l.b16 %v2746
        %v3572 = vunpack.c.h.b16 %v2746
        %v3573 = vunpack.c.l.b16 %v2747
        %v3574 = vunpack.c.l.b16 %v2748
        %v3575 = vunpack.c.h.b16 %v2748
        %v3576 = vunpack.c.l.b16 %v2749
        %v3577 = vunpack.c.h.b16 %v2749
        %v3578 = vunpack.c.l.b16 %v2750
        %v3579 = vunpack.c.l.b16 %v2751
        %v3580 = vunpack.c.h.b16 %v2751
        %v3581 = vunpack.c.l.b16 %v2752
        %v3582 = vunpack.c.h.b16 %v2752
        %v3583 = vunpack.c.l.b16 %v2753
        %v3584 = vunpack.c.l.b16 %v2754
        %v3585 = vunpack.c.h.b16 %v2754
        %v3586 = vunpack.c.l.b16 %v2755
        %v3587 = vunpack.c.h.b16 %v2755
        %v3588 = vunpack.c.l.b16 %v2756
        %v3589 = vunpack.c.l.b16 %v2757
        %v3590 = vunpack.c.h.b16 %v2757
        %v3591 = vunpack.c.l.b16 %v2758
        %v3592 = vunpack.c.h.b16 %v2758
        %v3593 = vunpack.c.l.b16 %v2759
        %v3594 = vunpack.c.l.b16 %v2760
        %v3595 = vunpack.c.h.b16 %v2760
        %v3596 = vunpack.c.l.b16 %v2761
        %v3597 = vunpack.c.h.b16 %v2761
        %v3598 = vunpack.c.l.b16 %v2762
        %v3599 = vunpack.c.l.b16 %v2763
        %v3600 = vunpack.c.h.b16 %v2763
        %v3601 = vunpack.c.l.b16 %v2764
        %v3602 = vunpack.c.h.b16 %v2764
        %v3603 = vunpack.c.l.b16 %v2765
        %v3604 = vunpack.c.l.b16 %v2766
        %v3605 = vunpack.c.h.b16 %v2766
        %v3606 = vunpack.c.l.b16 %v2767
        %v3607 = vunpack.c.h.b16 %v2767
        %v3608 = vunpack.c.l.b16 %v2768
        %v3609 = vunpack.c.l.b16 %v2769
        %v3610 = vunpack.c.h.b16 %v2769
        %v3611 = vunpack.c.l.b16 %v2770
        %v3612 = vunpack.c.h.b16 %v2770
        %v3613 = vunpack.c.l.b16 %v2771
        %v3614 = vunpack.c.l.b16 %v2772
        %v3615 = vunpack.c.h.b16 %v2772
        %v3616 = vunpack.c.l.b16 %v2773
        %v3617 = vunpack.c.h.b16 %v2773
        %v3618 = vunpack.c.l.b16 %v2774
        %v3619 = vunpack.c.l.b16 %v2775
        %v3620 = vunpack.c.h.b16 %v2775
        %v3621 = vunpack.c.l.b16 %v2776
        %v3622 = vunpack.c.h.b16 %v2776
        %v3623 = vunpack.c.l.b16 %v2777
        %v3624 = vunpack.c.l.b16 %v2778
        %v3625 = vunpack.c.h.b16 %v2778
        %v3626 = vunpack.c.l.b16 %v2779
        %v3627 = vunpack.c.h.b16 %v2779
        %v3628 = vunpack.c.l.b16 %v2780
        %v3629 = vunpack.c.l.b16 %v2781
        %v3630 = vunpack.c.h.b16 %v2781
        %v3631 = vunpack.c.l.b16 %v2782
        %v3632 = vunpack.c.h.b16 %v2782
        %v3633 = vunpack.c.l.b16 %v2783
        %v3634 = vunpack.c.l.b16 %v2784
        %v3635 = vunpack.c.h.b16 %v2784
        %v3636 = vunpack.c.l.b16 %v2785
        %v3637 = vunpack.c.h.b16 %v2785
        %v3638 = vunpack.c.l.b16 %v2786
        %v3639 = vunpack.c.l.b16 %v2787
        %v3640 = vunpack.c.h.b16 %v2787
        %v3641 = vunpack.c.l.b16 %v2788
        %v3642 = vunpack.c.h.b16 %v2788
        %v3643 = vunpack.c.l.b16 %v2789
        %v3644 = vunpack.c.l.b16 %v2790
        %v3645 = vunpack.c.h.b16 %v2790
        %v3646 = vunpack.c.l.b16 %v2791
        %v3647 = vunpack.c.h.b16 %v2791
        %v3648 = vunpack.c.l.b16 %v2792
        %v3649 = vunpack.c.l.b16 %v2793
        %v3650 = vunpack.c.h.b16 %v2793
        %v3651 = vunpack.c.l.b16 %v2794
        %v3652 = vunpack.c.h.b16 %v2794
        %v3653 = vunpack.c.l.b16 %v2795
        %v3654 = vunpack.c.l.b16 %v2796
        %v3655 = vunpack.c.h.b16 %v2796
        %v3656 = vunpack.c.l.b16 %v2797
        %v3657 = vunpack.c.h.b16 %v2797
        %v3658 = vunpack.c.l.b16 %v2798
        %v3659 = vunpack.c.l.b16 %v2799
        %v3660 = vunpack.c.h.b16 %v2799
        %v3661 = vunpack.c.l.b16 %v2800
        %v3662 = vunpack.c.h.b16 %v2800
        %v3663 = vunpack.c.l.b16 %v2801
        %v3664 = vunpack.c.l.b16 %v2802
        %v3665 = vunpack.c.h.b16 %v2802
        %v3666 = vunpack.c.l.b16 %v2803
        %v3667 = vunpack.c.h.b16 %v2803
        %v3668 = vunpack.c.l.b16 %v2804
        %v3669 = vunpack.c.l.b16 %v2805
        %v3670 = vunpack.c.h.b16 %v2805
        %v3671 = vunpack.c.l.b16 %v2806
        %v3672 = vunpack.c.h.b16 %v2806
        %v3673 = vunpack.c.l.b16 %v2807
        %v3674 = vunpack.c.l.b16 %v2808
        %v3675 = vunpack.c.h.b16 %v2808
        %v3676 = vunpack.c.l.b16 %v2809
        %v3677 = vunpack.c.h.b16 %v2809
        %v3678 = vunpack.c.l.b16 %v2810
        %v3679 = vunpack.c.l.b16 %v2811
        %v3680 = vunpack.c.h.b16 %v2811
        %v3681 = vunpack.c.l.b16 %v2812
        %v3682 = vunpack.c.h.b16 %v2812
        %v3683 = vunpack.c.l.b16 %v2813
        %v3684 = vunpack.c.l.b16 %v2814
        %v3685 = vunpack.c.h.b16 %v2814
        %v3686 = vunpack.c.l.b16 %v2815
        %v3687 = vunpack.c.h.b16 %v2815
        %v3688 = vunpack.c.l.b16 %v2816
        %v3689 = vunpack.c.l.b16 %v2817
        %v3690 = vunpack.c.h.b16 %v2817
        %v3691 = vunpack.c.l.b16 %v2818
        %v3692 = vunpack.c.h.b16 %v2818
        %v3693 = vunpack.c.l.b16 %v2819
        %v3694 = vunpack.c.l.b16 %v2820
        %v3695 = vunpack.c.h.b16 %v2820
        %v3696 = vunpack.c.l.b16 %v2821
        %v3697 = vunpack.c.h.b16 %v2821
        %v3698 = vunpack.c.l.b16 %v2822
        %v3699 = vunpack.c.l.b16 %v2823
        %v3700 = vunpack.c.h.b16 %v2823
        %v3701 = vunpack.c.l.b16 %v2824
        %v3702 = vunpack.c.h.b16 %v2824
        %v3703 = vunpack.c.l.b16 %v2825
        %v3704 = vunpack.c.l.b16 %v2826
        %v3705 = vunpack.c.h.b16 %v2826
        %v3706 = vunpack.c.l.b16 %v2827
        %v3707 = vunpack.c.h.b16 %v2827
        %v3708 = vunpack.c.l.b16 %v2828
        %v3709 = vunpack.c.l.b16 %v2829
        %v3710 = vunpack.c.h.b16 %v2829
        %v3711 = vunpack.c.l.b16 %v2830
        %v3712 = vunpack.c.h.b16 %v2830
        %v3713 = vunpack.c.l.b16 %v2831
        %v3714 = vunpack.c.l.b16 %v2832
        %v3715 = vunpack.c.h.b16 %v2832
        %v3716 = vunpack.c.l.b16 %v2833
        %v3717 = vunpack.c.h.b16 %v2833
        %v3718 = vunpack.c.l.b16 %v2834
        %v3719 = vunpack.c.l.b16 %v2835
        %v3720 = vunpack.c.h.b16 %v2835
        %v3721 = vunpack.c.l.b16 %v2836
        %v3722 = vunpack.c.h.b16 %v2836
        %v3723 = vunpack.c.l.b16 %v2837
        %v3724 = vunpack.c.l.b16 %v2838
        %v3725 = vunpack.c.h.b16 %v2838
        %v3726 = vunpack.c.l.b16 %v2839
        %v3727 = vunpack.c.h.b16 %v2839
        %v3728 = vunpack.c.l.b16 %v2840
        %v3729 = vunpack.c.l.b16 %v2841
        %v3730 = vunpack.c.h.b16 %v2841
        %v3731 = vunpack.c.l.b16 %v2842
        %v3732 = vunpack.c.h.b16 %v2842
        %v3733 = vunpack.c.l.b16 %v2843
        %v3734 = vunpack.c.l.b16 %v2844
        %v3735 = vunpack.c.h.b16 %v2844
        %v3736 = vunpack.c.l.b16 %v2845
        %v3737 = vunpack.c.h.b16 %v2845
        %v3738 = vunpack.c.l.b16 %v2846
        %v3739 = vunpack.c.l.b16 %v2847
        %v3740 = vunpack.c.h.b16 %v2847
        %v3741 = vunpack.c.l.b16 %v2848
        %v3742 = vunpack.c.h.b16 %v2848
        %v3743 = vunpack.c.l.b16 %v2849
        %v3744 = vunpack.c.l.b16 %v2850
        %v3745 = vunpack.c.h.b16 %v2850
        %v3746 = vunpack.c.l.b16 %v2851
        %v3747 = vunpack.c.h.b16 %v2851
        %v3748 = vunpack.c.l.b16 %v2852
        %v3749 = vunpack.c.l.b16 %v2853
        %v3750 = vunpack.c.h.b16 %v2853
        %v3751 = vunpack.c.l.b16 %v2854
        %v3752 = vunpack.c.h.b16 %v2854
        %v3753 = vunpack.c.l.b16 %v2855
        %v3754 = vunpack.c.l.b16 %v2856
        %v3755 = vunpack.c.h.b16 %v2856
        %v3756 = vunpack.c.l.b16 %v2857
        %v3757 = vunpack.c.h.b16 %v2857
        %v3758 = vunpack.c.l.b16 %v2858
        %v3759 = vunpack.c.l.b16 %v2859
        %v3760 = vunpack.c.h.b16 %v2859
        %v3761 = vunpack.c.l.b16 %v2860
        %v3762 = vunpack.c.h.b16 %v2860
        %v3763 = vunpack.c.l.b16 %v2861
        %v3764 = vunpack.c.l.b16 %v2862
        %v3765 = vunpack.c.h.b16 %v2862
        %v3766 = vunpack.c.l.b16 %v2863
        %v3767 = vunpack.c.h.b16 %v2863
        %v3768 = vunpack.c.l.b16 %v2864
        %v3769 = vunpack.c.l.b16 %v2865
        %v3770 = vunpack.c.h.b16 %v2865
        %v3771 = vunpack.c.l.b16 %v2866
        %v3772 = vunpack.c.h.b16 %v2866
        %v3773 = vunpack.c.l.b16 %v2867
        %v3774 = vunpack.c.l.b16 %v2868
        %v3775 = vunpack.c.h.b16 %v2868
        %v3776 = vunpack.c.l.b16 %v2869
        %v3777 = vunpack.c.h.b16 %v2869
        %v3778 = vunpack.c.l.b16 %v2870
        %v3779 = vunpack.c.l.b16 %v2871
        %v3780 = vunpack.c.h.b16 %v2871
        %v3781 = vunpack.c.l.b16 %v2872
        %v3782 = vunpack.c.h.b16 %v2872
        %v3783 = vunpack.c.l.b16 %v2873
        %v3784 = vunpack.c.l.b16 %v2874
        %v3785 = vunpack.c.h.b16 %v2874
        %v3786 = vunpack.c.l.b16 %v2875
        %v3787 = vunpack.c.h.b16 %v2875
        %v3788 = vunpack.c.l.b16 %v2876
        %v3789 = vunpack.c.l.b16 %v2877
        %v3790 = vunpack.c.h.b16 %v2877
        %v3791 = vunpack.c.l.b16 %v2878
        %v3792 = vunpack.c.h.b16 %v2878
        %v3793 = vunpack.c.l.b16 %v2879
        %v3794 = vunpack.c.l.b16 %v2880
        %v3795 = vunpack.c.h.b16 %v2880
        %v3796 = vunpack.c.l.b16 %v2881
        %v3797 = vunpack.c.h.b16 %v2881
        %v3798 = vunpack.c.l.b16 %v2882
        %v3799 = vunpack.c.l.b16 %v2883
        %v3800 = vunpack.c.h.b16 %v2883
        %v3801 = vunpack.c.l.b16 %v2884
        %v3802 = vunpack.c.h.b16 %v2884
        %v3803 = vunpack.c.l.b16 %v2885
        %v3804 = vunpack.c.l.b16 %v2886
        %v3805 = vunpack.c.h.b16 %v2886
        %v3806 = vunpack.c.l.b16 %v2887
        %v3807 = vunpack.c.h.b16 %v2887
        %v3808 = vunpack.c.l.b16 %v2888
        %v3809 = vunpack.c.l.b16 %v2889
        %v3810 = vunpack.c.h.b16 %v2889
        %v3811 = vunpack.c.l.b16 %v2890
        %v3812 = vunpack.c.h.b16 %v2890
        %v3813 = vunpack.c.l.b16 %v2891
        %v3814 = vunpack.c.l.b16 %v2892
        %v3815 = vunpack.c.h.b16 %v2892
        %v3816 = vunpack.c.l.b16 %v2893
        %v3817 = vunpack.c.h.b16 %v2893
        %v3818 = vunpack.c.l.b16 %v2894
        %v3819 = vunpack.c.l.b16 %v2895
        %v3820 = vunpack.c.h.b16 %v2895
        %v3821 = vunpack.c.l.b16 %v2896
        %v3822 = vunpack.c.h.b16 %v2896
        %v3823 = vunpack.c.l.b16 %v2897
        %v3824 = vunpack.c.l.b16 %v2898
        %v3825 = vunpack.c.h.b16 %v2898
        %v3826 = vunpack.c.l.b16 %v2899
        %v3827 = vunpack.c.h.b16 %v2899
        %v3828 = vunpack.c.l.b16 %v2900
        %v3829 = vunpack.c.l.b16 %v2901
        %v3830 = vunpack.c.h.b16 %v2901
        %v3831 = vunpack.c.l.b16 %v2902
        %v3832 = vunpack.c.h.b16 %v2902
        %v3833 = vunpack.c.l.b16 %v2903
        %v3834 = vunpack.c.l.b16 %v2904
        %v3835 = vunpack.c.h.b16 %v2904
        %v3836 = vunpack.c.l.b16 %v2905
        %v3837 = vunpack.c.h.b16 %v2905
        %v3838 = vunpack.c.l.b16 %v2906
        %v3839 = vunpack.c.l.b16 %v2907
        %v3840 = vunpack.c.h.b16 %v2907
        %v3841 = vunpack.c.l.b16 %v2908
        %v3842 = vunpack.c.h.b16 %v2908
        %v3843 = vunpack.c.l.b16 %v2909
        %v3844 = vunpack.c.l.b16 %v2910
        %v3845 = vunpack.c.h.b16 %v2910
        %v3846 = vunpack.c.l.b16 %v2911
        %v3847 = vunpack.c.h.b16 %v2911
        %v3848 = vunpack.c.l.b16 %v2912
        %v3849 = vunpack.c.l.b16 %v2913
        %v3850 = vunpack.c.h.b16 %v2913
        %v3851 = vunpack.c.l.b16 %v2914
        %v3852 = vunpack.c.h.b16 %v2914
        %v3853 = vunpack.c.l.b16 %v2915
        %v3854 = vunpack.c.l.b16 %v2916
        %v3855 = vunpack.c.h.b16 %v2916
        %v3856 = vunpack.c.l.b16 %v2917
        %v3857 = vunpack.c.h.b16 %v2917
        %v3858 = vunpack.c.l.b16 %v2918
        %v3859 = vunpack.c.l.b16 %v2919
        %v3860 = vunpack.c.h.b16 %v2919
        %v3861 = vunpack.c.l.b16 %v2920
        %v3862 = vunpack.c.h.b16 %v2920
        %v3863 = vunpack.c.l.b16 %v2921
        %v3864 = vunpack.c.l.b16 %v2922
        %v3865 = vunpack.c.h.b16 %v2922
        %v3866 = vunpack.c.l.b16 %v2923
        %v3867 = vunpack.c.h.b16 %v2923
        %v3868 = vunpack.c.l.b16 %v2924
        %v3869 = vunpack.c.l.b16 %v2925
        %v3870 = vunpack.c.h.b16 %v2925
        %v3871 = vunpack.c.l.b16 %v2926
        %v3872 = vunpack.c.h.b16 %v2926
        %v3873 = vunpack.c.l.b16 %v2927
        %v3874 = vunpack.c.l.b16 %v2928
        %v3875 = vunpack.c.h.b16 %v2928
        %v3876 = vunpack.c.l.b16 %v2929
        %v3877 = vunpack.c.h.b16 %v2929
        %v3878 = vunpack.c.l.b16 %v2930
        %v3879 = vunpack.c.l.b16 %v2931
        %v3880 = vunpack.c.h.b16 %v2931
        %v3881 = vunpack.c.l.b16 %v2932
        %v3882 = vunpack.c.h.b16 %v2932
        %v3883 = vunpack.c.l.b16 %v2933
        %v3884 = vunpack.c.l.b16 %v2934
        %v3885 = vunpack.c.h.b16 %v2934
        %v3886 = vunpack.c.l.b16 %v2935
        %v3887 = vunpack.c.h.b16 %v2935
        %v3888 = vunpack.c.l.b16 %v2936
        %v3889 = vunpack.c.l.b16 %v2937
        %v3890 = vunpack.c.h.b16 %v2937
        %v3891 = vunpack.c.l.b16 %v2938
        %v3892 = vunpack.c.h.b16 %v2938
        %v3893 = vunpack.c.l.b16 %v2939
        %v3894 = vunpack.c.l.b16 %v2940
        %v3895 = vunpack.c.h.b16 %v2940
        %v3896 = vunpack.c.l.b16 %v2941
        %v3897 = vunpack.c.h.b16 %v2941
        %v3898 = vunpack.c.l.b16 %v2942
        %v3899 = vunpack.c.l.b16 %v2943
        %v3900 = vunpack.c.h.b16 %v2943
        %v3901 = vunpack.c.l.b16 %v2944
        %v3902 = vunpack.c.h.b16 %v2944
        %v3903 = vunpack.c.l.b16 %v2945
        %v3904 = vunpack.c.l.b16 %v2946
        %v3905 = vunpack.c.h.b16 %v2946
        %v3906 = vunpack.c.l.b16 %v2947
        %v3907 = vunpack.c.h.b16 %v2947
        %v3908 = vunpack.c.l.b16 %v2948
        %v3909 = vunpack.c.l.b16 %v2949
        %v3910 = vunpack.c.h.b16 %v2949
        %v3911 = vunpack.c.l.b16 %v2950
        %v3912 = vunpack.c.h.b16 %v2950
        %v3913 = vunpack.c.l.b16 %v2951
        %v3914 = vunpack.c.l.b16 %v2952
        %v3915 = vunpack.c.h.b16 %v2952
        %v3916 = vunpack.c.l.b16 %v2953
        %v3917 = vunpack.c.h.b16 %v2953
        %v3918 = vunpack.c.l.b16 %v2954
        %v3919 = vunpack.c.l.b16 %v2955
        %v3920 = vunpack.c.h.b16 %v2955
        %v3921 = vunpack.c.l.b16 %v2956
        %v3922 = vunpack.c.h.b16 %v2956
        %v3923 = vunpack.c.l.b16 %v2957
        %v3924 = vunpack.c.l.b16 %v2958
        %v3925 = vunpack.c.h.b16 %v2958
        %v3926 = vunpack.c.l.b16 %v2959
        %v3927 = vunpack.c.h.b16 %v2959
        %v3928 = vunpack.c.l.b16 %v2960
        %v3929 = vunpack.c.l.b16 %v2961
        %v3930 = vunpack.c.h.b16 %v2961
        %v3931 = vunpack.c.l.b16 %v2962
        %v3932 = vunpack.c.h.b16 %v2962
        %v3933 = vunpack.c.l.b16 %v2963
        %v3934 = vunpack.c.l.b16 %v2964
        %v3935 = vunpack.c.h.b16 %v2964
        %v3936 = vunpack.c.l.b16 %v2965
        %v3937 = vunpack.c.h.b16 %v2965
        %v3938 = vunpack.c.l.b16 %v2966
        %v3939 = vunpack.c.l.b16 %v2967
        %v3940 = vunpack.c.h.b16 %v2967
        %v3941 = vunpack.c.l.b16 %v2968
        %v3942 = vunpack.c.h.b16 %v2968
        %v3943 = vunpack.c.l.b16 %v2969
        %v3944 = vunpack.c.l.b16 %v2970
        %v3945 = vunpack.c.h.b16 %v2970
        %v3946 = vunpack.c.l.b16 %v2971
        %v3947 = vunpack.c.h.b16 %v2971
        %v3948 = vunpack.c.l.b16 %v2972
        %v3949 = vunpack.c.l.b16 %v2973
        %v3950 = vunpack.c.h.b16 %v2973
        %v3951 = vunpack.c.l.b16 %v2974
        %v3952 = vunpack.c.h.b16 %v2974
        %v3953 = vunpack.c.l.b16 %v2975
        %v3954 = vunpack.c.l.b16 %v2976
        %v3955 = vunpack.c.h.b16 %v2976
        %v3956 = vunpack.c.l.b16 %v2977
        %v3957 = vunpack.c.h.b16 %v2977
        %v3958 = vunpack.c.l.b16 %v2978
        %v3959 = vunpack.c.l.b16 %v2979
        %v3960 = vunpack.c.h.b16 %v2979
        %v3961 = vunpack.c.l.b16 %v2980
        %v3962 = vunpack.c.h.b16 %v2980
        %v3963 = vunpack.c.l.b16 %v2981
        %v3964 = vunpack.c.l.b16 %v2982
        %v3965 = vunpack.c.h.b16 %v2982
        %v3966 = vunpack.c.l.b16 %v2983
        %v3967 = vunpack.c.h.b16 %v2983
        %v3968 = vunpack.c.l.b16 %v2984
        %v3969 = vunpack.c.l.b16 %v2985
        %v3970 = vunpack.c.h.b16 %v2985
        %v3971 = vunpack.c.l.b16 %v2986
        %v3972 = vunpack.c.h.b16 %v2986
        %v3973 = vunpack.c.l.b16 %v2987
        %v3974 = vunpack.c.l.b16 %v2988
        %v3975 = vunpack.c.h.b16 %v2988
        %v3976 = vunpack.c.l.b16 %v2989
        %v3977 = vunpack.c.h.b16 %v2989
        %v3978 = vunpack.c.l.b16 %v2990
        %v3979 = vunpack.c.l.b16 %v2991
        %v3980 = vunpack.c.h.b16 %v2991
        %v3981 = vunpack.c.l.b16 %v2992
        %v3982 = vunpack.c.h.b16 %v2992
        %v3983 = vunpack.c.l.b16 %v2993
        %v3984 = vunpack.c.l.b16 %v2994
        %v3985 = vunpack.c.h.b16 %v2994
        %v3986 = vunpack.c.l.b16 %v2995
        %v3987 = vunpack.c.h.b16 %v2995
        %v3988 = vunpack.c.l.b16 %v2996
        %v3989 = vunpack.c.l.b16 %v2997
        %v3990 = vunpack.c.h.b16 %v2997
        %v3991 = vunpack.c.l.b16 %v2998
        %v3992 = vunpack.c.h.b16 %v2998
        %v3993 = vunpack.c.l.b16 %v2999
        %v3994 = vunpack.c.l.b16 %v3000
        %v3995 = vunpack.c.h.b16 %v3000
        %v3996 = vunpack.c.l.b16 %v3001
        %v3997 = vunpack.c.h.b16 %v3001
        %v3998 = vunpack.c.l.b16 %v3002
        %v3999 = vunpack.c.l.b16 %v3003
        %v4000 = vunpack.c.h.b16 %v3003
        %v4001 = vunpack.c.l.b16 %v3004
        %v4002 = vunpack.c.h.b16 %v3004
        %v4003 = vunpack.c.l.b16 %v3005
        %v4004 = vunpack.c.l.b16 %v3006
        %v4005 = vunpack.c.h.b16 %v3006
        %v4006 = vunpack.c.l.b16 %v3007
        %v4007 = vunpack.c.h.b16 %v3007
        %v4008 = vunpack.c.l.b16 %v3008
        %v4009 = vunpack.c.l.b16 %v3009
        %v4010 = vunpack.c.h.b16 %v3009
        %v4011 = vunpack.c.l.b16 %v3010
        %v4012 = vunpack.c.h.b16 %v3010
        %v4013 = vunpack.c.l.b16 %v3011
        %v4014 = vunpack.c.l.b16 %v3012
        %v4015 = vunpack.c.h.b16 %v3012
        %v4016 = vunpack.c.l.b16 %v3013
        %v4017 = vunpack.c.h.b16 %v3013
        %v4018 = vunpack.c.l.b16 %v3014
        %v4019 = vunpack.c.l.b16 %v3015
        %v4020 = vunpack.c.h.b16 %v3015
        %v4021 = vunpack.c.l.b16 %v3016
        %v4022 = vunpack.c.h.b16 %v3016
        %v4023 = vunpack.c.l.b16 %v3017
        %v4024 = vunpack.c.l.b16 %v3018
        %v4025 = vunpack.c.h.b16 %v3018
        %v4026 = vunpack.c.l.b16 %v3019
        %v4027 = vunpack.c.h.b16 %v3019
        %v4028 = vunpack.c.l.b16 %v3020
        %v4029 = vunpack.c.l.b16 %v3021
        %v4030 = vunpack.c.h.b16 %v3021
        %v4031 = vunpack.c.l.b16 %v3022
        %v4032 = vunpack.c.h.b16 %v3022
        %v4033 = vunpack.c.l.b16 %v3023
        %v4034 = vunpack.c.l.b16 %v3024
        %v4035 = vunpack.c.h.b16 %v3024
        %v4036 = vunpack.c.l.b16 %v3025
        %v4037 = vunpack.c.h.b16 %v3025
        %v4038 = vunpack.c.l.b16 %v3026
        %v4039 = vunpack.c.l.b16 %v3027
        %v4040 = vunpack.c.h.b16 %v3027
        %v4041 = vunpack.c.l.b16 %v3028
        %v4042 = vunpack.c.h.b16 %v3028
        %v4043 = vunpack.c.l.b16 %v3029
        %v4044 = vunpack.c.l.b16 %v3030
        %v4045 = vunpack.c.h.b16 %v3030
        %v4046 = vunpack.c.l.b16 %v3031
        %v4047 = vunpack.c.h.b16 %v3031
        %v4048 = vunpack.c.l.b16 %v3032
        %v4049 = vunpack.c.l.b16 %v3033
        %v4050 = vunpack.c.h.b16 %v3033
        %v4051 = vunpack.c.l.b16 %v3034
        %v4052 = vunpack.c.h.b16 %v3034
        %v4053 = vunpack.c.l.b16 %v3035
        %v4054 = vunpack.c.l.b16 %v3036
        %v4055 = vunpack.c.h.b16 %v3036
        %v4056 = vunpack.c.l.b16 %v3037
        %v4057 = vunpack.c.h.b16 %v3037
        %v4058 = vunpack.c.l.b16 %v3038
        %v4059 = vunpack.c.l.b16 %v3039
        %v4060 = vunpack.c.h.b16 %v3039
        %v4061 = vunpack.c.l.b16 %v3040
        %v4062 = vunpack.c.h.b16 %v3040
        %v4063 = vunpack.c.l.b16 %v3041
        %v4064 = vunpack.c.l.b16 %v3042
        %v4065 = vunpack.c.h.b16 %v3042
        %v4066 = vunpack.c.l.b16 %v3043
        %v4067 = vunpack.c.h.b16 %v3043
        %v4068 = vunpack.c.l.b16 %v3044
        %v4069 = vunpack.c.l.b16 %v3045
        %v4070 = vunpack.c.h.b16 %v3045
        %v4071 = vunpack.c.l.b16 %v3046
        %v4072 = vunpack.c.h.b16 %v3046
        %v4073 = vunpack.c.l.b16 %v3047
        %v4074 = vunpack.c.l.b16 %v3048
        %v4075 = vunpack.c.h.b16 %v3048
        %v4076 = vunpack.c.l.b16 %v3049
        %v4077 = vunpack.c.h.b16 %v3049
        %v4078 = vunpack.c.l.b16 %v3050
        %v4079 = vpack.c.b16 %v3444, %v3439
        %v4080 = vpack.c.b16 %v3445, %v3440
        %v4081 = vpack.c.b16 %v3446, %v3441
        %v4082 = vpack.c.b16 %v3447, %v3442
        %v4083 = vpack.c.b16 %v3448, %v3443
        %v4084 = vpack.c.b16 %v3454, %v3449
        %v4085 = vpack.c.b16 %v3455, %v3450
        %v4086 = vpack.c.b16 %v3456, %v3451
        %v4087 = vpack.c.b16 %v3457, %v3452
        %v4088 = vpack.c.b16 %v3458, %v3453
        %v4089 = vpack.c.b16 %v3464, %v3459
        %v4090 = vpack.c.b16 %v3465, %v3460
        %v4091 = vpack.c.b16 %v3466, %v3461
        %v4092 = vpack.c.b16 %v3467, %v3462
        %v4093 = vpack.c.b16 %v3468, %v3463
        %v4094 = vpack.c.b16 %v3474, %v3469
        %v4095 = vpack.c.b16 %v3475, %v3470
        %v4096 = vpack.c.b16 %v3476, %v3471
        %v4097 = vpack.c.b16 %v3477, %v3472
        %v4098 = vpack.c.b16 %v3478, %v3473
        %v4099 = vpack.c.b16 %v3484, %v3479
        %v4100 = vpack.c.b16 %v3485, %v3480
        %v4101 = vpack.c.b16 %v3486, %v3481
        %v4102 = vpack.c.b16 %v3487, %v3482
        %v4103 = vpack.c.b16 %v3488, %v3483
        %v4104 = vpack.c.b16 %v3494, %v3489
        %v4105 = vpack.c.b16 %v3495, %v3490
        %v4106 = vpack.c.b16 %v3496, %v3491
        %v4107 = vpack.c.b16 %v3497, %v3492
        %v4108 = vpack.c.b16 %v3498, %v3493
        %v4109 = vpack.c.b16 %v3504, %v3499
        %v4110 = vpack.c.b16 %v3505, %v3500
        %v4111 = vpack.c.b16 %v3506, %v3501
        %v4112 = vpack.c.b16 %v3507, %v3502
        %v4113 = vpack.c.b16 %v3508, %v3503
        %v4114 = vpack.c.b16 %v3514, %v3509
        %v4115 = vpack.c.b16 %v3515, %v3510
        %v4116 = vpack.c.b16 %v3516, %v3511
        %v4117 = vpack.c.b16 %v3517, %v3512
        %v4118 = vpack.c.b16 %v3518, %v3513
        %v4119 = vpack.c.b16 %v3524, %v3519
        %v4120 = vpack.c.b16 %v3525, %v3520
        %v4121 = vpack.c.b16 %v3526, %v3521
        %v4122 = vpack.c.b16 %v3527, %v3522
        %v4123 = vpack.c.b16 %v3528, %v3523
        %v4124 = vpack.c.b16 %v3534, %v3529
        %v4125 = vpack.c.b16 %v3535, %v3530
        %v4126 = vpack.c.b16 %v3536, %v3531
        %v4127 = vpack.c.b16 %v3537, %v3532
        %v4128 = vpack.c.b16 %v3538, %v3533
        %v4129 = vpack.c.b16 %v3544, %v3539
        %v4130 = vpack.c.b16 %v3545, %v3540
        %v4131 = vpack.c.b16 %v3546, %v3541
        %v4132 = vpack.c.b16 %v3547, %v3542
        %v4133 = vpack.c.b16 %v3548, %v3543
        %v4134 = vpack.c.b16 %v3554, %v3549
        %v4135 = vpack.c.b16 %v3555, %v3550
        %v4136 = vpack.c.b16 %v3556, %v3551
        %v4137 = vpack.c.b16 %v3557, %v3552
        %v4138 = vpack.c.b16 %v3558, %v3553
        %v4139 = vpack.c.b16 %v3564, %v3559
        %v4140 = vpack.c.b16 %v3565, %v3560
        %v4141 = vpack.c.b16 %v3566, %v3561
        %v4142 = vpack.c.b16 %v3567, %v3562
        %v4143 = vpack.c.b16 %v3568, %v3563
        %v4144 = vpack.c.b16 %v3574, %v3569
        %v4145 = vpack.c.b16 %v3575, %v3570
        %v4146 = vpack.c.b16 %v3576, %v3571
        %v4147 = vpack.c.b16 %v3577, %v3572
        %v4148 = vpack.c.b16 %v3578, %v3573
        %v4149 = vpack.c.b16 %v3584, %v3579
        %v4150 = vpack.c.b16 %v3585, %v3580
        %v4151 = vpack.c.b16 %v3586, %v3581
        %v4152 = vpack.c.b16 %v3587, %v3582
        %v4153 = vpack.c.b16 %v3588, %v3583
        %v4154 = vpack.c.b16 %v3594, %v3589
        %v4155 = vpack.c.b16 %v3595, %v3590
        %v4156 = vpack.c.b16 %v3596, %v3591
        %v4157 = vpack.c.b16 %v3597, %v3592
        %v4158 = vpack.c.b16 %v3598, %v3593
        %v4159 = vpack.c.b16 %v3604, %v3599
        %v4160 = vpack.c.b16 %v3605, %v3600
        %v4161 = vpack.c.b16 %v3606, %v3601
        %v4162 = vpack.c.b16 %v3607, %v3602
        %v4163 = vpack.c.b16 %v3608, %v3603
        %v4164 = vpack.c.b16 %v3614, %v3609
        %v4165 = vpack.c.b16 %v3615, %v3610
        %v4166 = vpack.c.b16 %v3616, %v3611
        %v4167 = vpack.c.b16 %v3617, %v3612
        %v4168 = vpack.c.b16 %v3618, %v3613
        %v4169 = vpack.c.b16 %v3624, %v3619
        %v4170 = vpack.c.b16 %v3625, %v3620
        %v4171 = vpack.c.b16 %v3626, %v3621
        %v4172 = vpack.c.b16 %v3627, %v3622
        %v4173 = vpack.c.b16 %v3628, %v3623
        %v4174 = vpack.c.b16 %v3634, %v3629
        %v4175 = vpack.c.b16 %v3635, %v3630
        %v4176 = vpack.c.b16 %v3636, %v3631
        %v4177 = vpack.c.b16 %v3637, %v3632
        %v4178 = vpack.c.b16 %v3638, %v3633
        %v4179 = vpack.c.b16 %v3644, %v3639
        %v4180 = vpack.c.b16 %v3645, %v3640
        %v4181 = vpack.c.b16 %v3646, %v3641
        %v4182 = vpack.c.b16 %v3647, %v3642
        %v4183 = vpack.c.b16 %v3648, %v3643
        %v4184 = vpack.c.b16 %v3654, %v3649
        %v4185 = vpack.c.b16 %v3655, %v3650
        %v4186 = vpack.c.b16 %v3656, %v3651
        %v4187 = vpack.c.b16 %v3657, %v3652
        %v4188 = vpack.c.b16 %v3658, %v3653
        %v4189 = vpack.c.b16 %v3664, %v3659
        %v4190 = vpack.c.b16 %v3665, %v3660
        %v4191 = vpack.c.b16 %v3666, %v3661
        %v4192 = vpack.c.b16 %v3667, %v3662
        %v4193 = vpack.c.b16 %v3668, %v3663
        %v4194 = vpack.c.b16 %v3674, %v3669
        %v4195 = vpack.c.b16 %v3675, %v3670
        %v4196 = vpack.c.b16 %v3676, %v3671
        %v4197 = vpack.c.b16 %v3677, %v3672
        %v4198 = vpack.c.b16 %v3678, %v3673
        %v4199 = vpack.c.b16 %v3684, %v3679
        %v4200 = vpack.c.b16 %v3685, %v3680
        %v4201 = vpack.c.b16 %v3686, %v3681
        %v4202 = vpack.c.b16 %v3687, %v3682
        %v4203 = vpack.c.b16 %v3688, %v3683
        %v4204 = vpack.c.b16 %v3694, %v3689
        %v4205 = vpack.c.b16 %v3695, %v3690
        %v4206 = vpack.c.b16 %v3696, %v3691
        %v4207 = vpack.c.b16 %v3697, %v3692
        %v4208 = vpack.c.b16 %v3698, %v3693
        %v4209 = vpack.c.b16 %v3704, %v3699
        %v4210 = vpack.c.b16 %v3705, %v3700
        %v4211 = vpack.c.b16 %v3706, %v3701
        %v4212 = vpack.c.b16 %v3707, %v3702
        %v4213 = vpack.c.b16 %v3708, %v3703
        %v4214 = vpack.c.b16 %v3714, %v3709
        %v4215 = vpack.c.b16 %v3715, %v3710
        %v4216 = vpack.c.b16 %v3716, %v3711
        %v4217 = vpack.c.b16 %v3717, %v3712
        %v4218 = vpack.c.b16 %v3718, %v3713
        %v4219 = vpack.c.b16 %v3724, %v3719
        %v4220 = vpack.c.b16 %v3725, %v3720
        %v4221 = vpack.c.b16 %v3726, %v3721
        %v4222 = vpack.c.b16 %v3727, %v3722
        %v4223 = vpack.c.b16 %v3728, %v3723
        %v4224 = vpack.c.b16 %v3734, %v3729
        %v4225 = vpack.c.b16 %v3735, %v3730
        %v4226 = vpack.c.b16 %v3736, %v3731
        %v4227 = vpack.c.b16 %v3737, %v3732
        %v4228 = vpack.c.b16 %v3738, %v3733
        %v4229 = vpack.c.b16 %v3744, %v3739
        %v4230 = vpack.c.b16 %v3745, %v3740
        %v4231 = vpack.c.b16 %v3746, %v3741
        %v4232 = vpack.c.b16 %v3747, %v3742
        %v4233 = vpack.c.b16 %v3748, %v3743
        %v4234 = vpack.c.b16 %v3754, %v3749
        %v4235 = vpack.c.b16 %v3755, %v3750
        %v4236 = vpack.c.b16 %v3756, %v3751
        %v4237 = vpack.c.b16 %v3757, %v3752
        %v4238 = vpack.c.b16 %v3758, %v3753
        %v4239 = vpack.c.b16 %v3764, %v3759
        %v4240 = vpack.c.b16 %v3765, %v3760
        %v4241 = vpack.c.b16 %v3766, %v3761
        %v4242 = vpack.c.b16 %v3767, %v3762
        %v4243 = vpack.c.b16 %v3768, %v3763
        %v4244 = vpack.c.b16 %v3774, %v3769
        %v4245 = vpack.c.b16 %v3775, %v3770
        %v4246 = vpack.c.b16 %v3776, %v3771
        %v4247 = vpack.c.b16 %v3777, %v3772
        %v4248 = vpack.c.b16 %v3778, %v3773
        %v4249 = vpack.c.b16 %v3784, %v3779
        %v4250 = vpack.c.b16 %v3785, %v3780
        %v4251 = vpack.c.b16 %v3786, %v3781
        %v4252 = vpack.c.b16 %v3787, %v3782
        %v4253 = vpack.c.b16 %v3788, %v3783
        %v4254 = vpack.c.b16 %v3794, %v3789
        %v4255 = vpack.c.b16 %v3795, %v3790
        %v4256 = vpack.c.b16 %v3796, %v3791
        %v4257 = vpack.c.b16 %v3797, %v3792
        %v4258 = vpack.c.b16 %v3798, %v3793
        %v4259 = vpack.c.b16 %v3804, %v3799
        %v4260 = vpack.c.b16 %v3805, %v3800
        %v4261 = vpack.c.b16 %v3806, %v3801
        %v4262 = vpack.c.b16 %v3807, %v3802
        %v4263 = vpack.c.b16 %v3808, %v3803
        %v4264 = vpack.c.b16 %v3814, %v3809
        %v4265 = vpack.c.b16 %v3815, %v3810
        %v4266 = vpack.c.b16 %v3816, %v3811
        %v4267 = vpack.c.b16 %v3817, %v3812
        %v4268 = vpack.c.b16 %v3818, %v3813
        %v4269 = vpack.c.b16 %v3824, %v3819
        %v4270 = vpack.c.b16 %v3825, %v3820
        %v4271 = vpack.c.b16 %v3826, %v3821
        %v4272 = vpack.c.b16 %v3827, %v3822
        %v4273 = vpack.c.b16 %v3828, %v3823
        %v4274 = vpack.c.b16 %v3834, %v3829
        %v4275 = vpack.c.b16 %v3835, %v3830
        %v4276 = vpack.c.b16 %v3836, %v3831
        %v4277 = vpack.c.b16 %v3837, %v3832
        %v4278 = vpack.c.b16 %v3838, %v3833
        %v4279 = vpack.c.b16 %v3844, %v3839
        %v4280 = vpack.c.b16 %v3845, %v3840
        %v4281 = vpack.c.b16 %v3846, %v3841
        %v4282 = vpack.c.b16 %v3847, %v3842
        %v4283 = vpack.c.b16 %v3848, %v3843
        %v4284 = vpack.c.b16 %v3854, %v3849
        %v4285 = vpack.c.b16 %v3855, %v3850
        %v4286 = vpack.c.b16 %v3856, %v3851
        %v4287 = vpack.c.b16 %v3857, %v3852
        %v4288 = vpack.c.b16 %v3858, %v3853
        %v4289 = vpack.c.b16 %v3864, %v3859
        %v4290 = vpack.c.b16 %v3865, %v3860
        %v4291 = vpack.c.b16 %v3866, %v3861
        %v4292 = vpack.c.b16 %v3867, %v3862
        %v4293 = vpack.c.b16 %v3868, %v3863
        %v4294 = vpack.c.b16 %v3874, %v3869
        %v4295 = vpack.c.b16 %v3875, %v3870
        %v4296 = vpack.c.b16 %v3876, %v3871
        %v4297 = vpack.c.b16 %v3877, %v3872
        %v4298 = vpack.c.b16 %v3878, %v3873
        %v4299 = vpack.c.b16 %v3884, %v3879
        %v4300 = vpack.c.b16 %v3885, %v3880
        %v4301 = vpack.c.b16 %v3886, %v3881
        %v4302 = vpack.c.b16 %v3887, %v3882
        %v4303 = vpack.c.b16 %v3888, %v3883
        %v4304 = vpack.c.b16 %v3894, %v3889
        %v4305 = vpack.c.b16 %v3895, %v3890
        %v4306 = vpack.c.b16 %v3896, %v3891
        %v4307 = vpack.c.b16 %v3897, %v3892
        %v4308 = vpack.c.b16 %v3898, %v3893
        %v4309 = vpack.c.b16 %v3904, %v3899
        %v4310 = vpack.c.b16 %v3905, %v3900
        %v4311 = vpack.c.b16 %v3906, %v3901
        %v4312 = vpack.c.b16 %v3907, %v3902
        %v4313 = vpack.c.b16 %v3908, %v3903
        %v4314 = vpack.c.b16 %v3914, %v3909
        %v4315 = vpack.c.b16 %v3915, %v3910
        %v4316 = vpack.c.b16 %v3916, %v3911
        %v4317 = vpack.c.b16 %v3917, %v3912
        %v4318 = vpack.c.b16 %v3918, %v3913
        %v4319 = vpack.c.b16 %v3924, %v3919
        %v4320 = vpack.c.b16 %v3925, %v3920
        %v4321 = vpack.c.b16 %v3926, %v3921
        %v4322 = vpack.c.b16 %v3927, %v3922
        %v4323 = vpack.c.b16 %v3928, %v3923
        %v4324 = vpack.c.b16 %v3934, %v3929
        %v4325 = vpack.c.b16 %v3935, %v3930
        %v4326 = vpack.c.b16 %v3936, %v3931
        %v4327 = vpack.c.b16 %v3937, %v3932
        %v4328 = vpack.c.b16 %v3938, %v3933
        %v4329 = vpack.c.b16 %v3944, %v3939
        %v4330 = vpack.c.b16 %v3945, %v3940
        %v4331 = vpack.c.b16 %v3946, %v3941
        %v4332 = vpack.c.b16 %v3947, %v3942
        %v4333 = vpack.c.b16 %v3948, %v3943
        %v4334 = vpack.c.b16 %v3954, %v3949
        %v4335 = vpack.c.b16 %v3955, %v3950
        %v4336 = vpack.c.b16 %v3956, %v3951
        %v4337 = vpack.c.b16 %v3957, %v3952
        %v4338 = vpack.c.b16 %v3958, %v3953
        %v4339 = vpack.c.b16 %v3964, %v3959
        %v4340 = vpack.c.b16 %v3965, %v3960
        %v4341 = vpack.c.b16 %v3966, %v3961
        %v4342 = vpack.c.b16 %v3967, %v3962
        %v4343 = vpack.c.b16 %v3968, %v3963
        %v4344 = vpack.c.b16 %v3974, %v3969
        %v4345 = vpack.c.b16 %v3975, %v3970
        %v4346 = vpack.c.b16 %v3976, %v3971
        %v4347 = vpack.c.b16 %v3977, %v3972
        %v4348 = vpack.c.b16 %v3978, %v3973
        %v4349 = vpack.c.b16 %v3984, %v3979
        %v4350 = vpack.c.b16 %v3985, %v3980
        %v4351 = vpack.c.b16 %v3986, %v3981
        %v4352 = vpack.c.b16 %v3987, %v3982
        %v4353 = vpack.c.b16 %v3988, %v3983
        %v4354 = vpack.c.b16 %v3994, %v3989
        %v4355 = vpack.c.b16 %v3995, %v3990
        %v4356 = vpack.c.b16 %v3996, %v3991
        %v4357 = vpack.c.b16 %v3997, %v3992
        %v4358 = vpack.c.b16 %v3998, %v3993
        %v4359 = vpack.c.b16 %v4004, %v3999
        %v4360 = vpack.c.b16 %v4005, %v4000
        %v4361 = vpack.c.b16 %v4006, %v4001
        %v4362 = vpack.c.b16 %v4007, %v4002
        %v4363 = vpack.c.b16 %v4008, %v4003
        %v4364 = vpack.c.b16 %v4014, %v4009
        %v4365 = vpack.c.b16 %v4015, %v4010
        %v4366 = vpack.c.b16 %v4016, %v4011
        %v4367 = vpack.c.b16 %v4017, %v4012
        %v4368 = vpack.c.b16 %v4018, %v4013
        %v4369 = vpack.c.b16 %v4024, %v4019
        %v4370 = vpack.c.b16 %v4025, %v4020
        %v4371 = vpack.c.b16 %v4026, %v4021
        %v4372 = vpack.c.b16 %v4027, %v4022
        %v4373 = vpack.c.b16 %v4028, %v4023
        %v4374 = vpack.c.b16 %v4034, %v4029
        %v4375 = vpack.c.b16 %v4035, %v4030
        %v4376 = vpack.c.b16 %v4036, %v4031
        %v4377 = vpack.c.b16 %v4037, %v4032
        %v4378 = vpack.c.b16 %v4038, %v4033
        %v4379 = vpack.c.b16 %v4044, %v4039
        %v4380 = vpack.c.b16 %v4045, %v4040
        %v4381 = vpack.c.b16 %v4046, %v4041
        %v4382 = vpack.c.b16 %v4047, %v4042
        %v4383 = vpack.c.b16 %v4048, %v4043
        %v4384 = vpack.c.b16 %v4054, %v4049
        %v4385 = vpack.c.b16 %v4055, %v4050
        %v4386 = vpack.c.b16 %v4056, %v4051
        %v4387 = vpack.c.b16 %v4057, %v4052
        %v4388 = vpack.c.b16 %v4058, %v4053
        %v4389 = vpack.c.b16 %v4064, %v4059
        %v4390 = vpack.c.b16 %v4065, %v4060
        %v4391 = vpack.c.b16 %v4066, %v4061
        %v4392 = vpack.c.b16 %v4067, %v4062
        %v4393 = vpack.c.b16 %v4068, %v4063
        %v4394 = vpack.c.b16 %v4074, %v4069
        %v4395 = vpack.c.b16 %v4075, %v4070
        %v4396 = vpack.c.b16 %v4076, %v4071
        %v4397 = vpack.c.b16 %v4077, %v4072
        %v4398 = vpack.c.b16 %v4078, %v4073
        %v4720 = vperm.slane %v3054, 0
        %v4721 = vperm.slane %v3054, 1
        %v4722 = vperm.slane %v3054, 2
        %v4723 = vperm.slane %v3054, 3
        %v4724 = vperm.slane %v3054, 4
        %4730 = vmatpush.bf16.msra.mxu0 %v4114
        %4731 = vmatpush.bf16.msra.mxu0 %v4109
        %4732 = vmatpush.bf16.msra.mxu0 %v4104
        %4733 = vmatpush.bf16.msra.mxu0 %v4099
        %4734 = vmatpush.bf16.msra.mxu0 %v4094
        %4735 = vmatpush.bf16.msra.mxu0 %v4089
        %4736 = vmatpush.bf16.msra.mxu0 %v4084
        %4737 = vmatpush.bf16.msra.mxu0 %v4079
        %4738 = vmatmul.bf16.gmra.mxu0 %v2659
        %v4739 = vpop.f32.mrf.mxu0
        %v4740 = vadd.f32 %v4720, %v4739
        %v4741 = vpop.f32.mrf.mxu0
        %4742 = vdwg.mxu0
        %4743 = vmatpush.bf16.msra.mxu0 %v4154
        %4744 = vmatpush.bf16.msra.mxu0 %v4149
        %4745 = vmatpush.bf16.msra.mxu0 %v4144
        %4746 = vmatpush.bf16.msra.mxu0 %v4139
        %4747 = vmatpush.bf16.msra.mxu0 %v4134
        %4748 = vmatpush.bf16.msra.mxu0 %v4129
        %4749 = vmatpush.bf16.msra.mxu0 %v4124
        %4750 = vmatpush.bf16.msra.mxu0 %v4119
        %4751 = vmatmul.bf16.gmra.mxu0 %v2660
        %v4752 = vpop.f32.mrf.mxu0
        %v4753 = vadd.f32 %v4740, %v4752
        %v4754 = vpop.f32.mrf.mxu0
        %4755 = vdwg.mxu0
        %4756 = vmatpush.bf16.msra.mxu0 %v4194
        %4757 = vmatpush.bf16.msra.mxu0 %v4189
        %4758 = vmatpush.bf16.msra.mxu0 %v4184
        %4759 = vmatpush.bf16.msra.mxu0 %v4179
        %4760 = vmatpush.bf16.msra.mxu0 %v4174
        %4761 = vmatpush.bf16.msra.mxu0 %v4169
        %4762 = vmatpush.bf16.msra.mxu0 %v4164
        %4763 = vmatpush.bf16.msra.mxu0 %v4159
        %4764 = vmatmul.bf16.gmra.mxu0 %v2661
        %v4765 = vpop.f32.mrf.mxu0
        %v4766 = vadd.f32 %v4753, %v4765
        %v4767 = vpop.f32.mrf.mxu0
        %4768 = vdwg.mxu0
        %4769 = vmatpush.bf16.msra.mxu0 %v4234
        %4770 = vmatpush.bf16.msra.mxu0 %v4229
        %4771 = vmatpush.bf16.msra.mxu0 %v4224
        %4772 = vmatpush.bf16.msra.mxu0 %v4219
        %4773 = vmatpush.bf16.msra.mxu0 %v4214
        %4774 = vmatpush.bf16.msra.mxu0 %v4209
        %4775 = vmatpush.bf16.msra.mxu0 %v4204
        %4776 = vmatpush.bf16.msra.mxu0 %v4199
        %4777 = vmatmul.bf16.gmra.mxu0 %v2662
        %v4778 = vpop.f32.mrf.mxu0
        %v4779 = vadd.f32 %v4766, %v4778
        %v4780 = vpop.f32.mrf.mxu0
        %4781 = vdwg.mxu0
        %4782 = vmatpush.bf16.msra.mxu0 %v4274
        %4783 = vmatpush.bf16.msra.mxu0 %v4269
        %4784 = vmatpush.bf16.msra.mxu0 %v4264
        %4785 = vmatpush.bf16.msra.mxu0 %v4259
        %4786 = vmatpush.bf16.msra.mxu0 %v4254
        %4787 = vmatpush.bf16.msra.mxu0 %v4249
        %4788 = vmatpush.bf16.msra.mxu0 %v4244
        %4789 = vmatpush.bf16.msra.mxu0 %v4239
        %4790 = vmatmul.bf16.gmra.mxu0 %v2663
        %v4791 = vpop.f32.mrf.mxu0
        %v4792 = vadd.f32 %v4779, %v4791
        %v4793 = vpop.f32.mrf.mxu0
        %4794 = vdwg.mxu0
        %4795 = vmatpush.bf16.msra.mxu0 %v4314
        %4796 = vmatpush.bf16.msra.mxu0 %v4309
        %4797 = vmatpush.bf16.msra.mxu0 %v4304
        %4798 = vmatpush.bf16.msra.mxu0 %v4299
        %4799 = vmatpush.bf16.msra.mxu0 %v4294
        %4800 = vmatpush.bf16.msra.mxu0 %v4289
        %4801 = vmatpush.bf16.msra.mxu0 %v4284
        %4802 = vmatpush.bf16.msra.mxu0 %v4279
        %4803 = vmatmul.bf16.gmra.mxu0 %v2664
        %v4804 = vpop.f32.mrf.mxu0
        %v4805 = vadd.f32 %v4792, %v4804
        %v4806 = vpop.f32.mrf.mxu0
        %4807 = vdwg.mxu0
        %4808 = vmatpush.bf16.msra.mxu0 %v4354
        %4809 = vmatpush.bf16.msra.mxu0 %v4349
        %4810 = vmatpush.bf16.msra.mxu0 %v4344
        %4811 = vmatpush.bf16.msra.mxu0 %v4339
        %4812 = vmatpush.bf16.msra.mxu0 %v4334
        %4813 = vmatpush.bf16.msra.mxu0 %v4329
        %4814 = vmatpush.bf16.msra.mxu0 %v4324
        %4815 = vmatpush.bf16.msra.mxu0 %v4319
        %4816 = vmatmul.bf16.gmra.mxu0 %v2665
        %v4817 = vpop.f32.mrf.mxu0
        %v4818 = vadd.f32 %v4805, %v4817
        %v4819 = vpop.f32.mrf.mxu0
        %4820 = vdwg.mxu0
        %4821 = vmatpush.bf16.msra.mxu0 %v4394
        %4822 = vmatpush.bf16.msra.mxu0 %v4389
        %4823 = vmatpush.bf16.msra.mxu0 %v4384
        %4824 = vmatpush.bf16.msra.mxu0 %v4379
        %4825 = vmatpush.bf16.msra.mxu0 %v4374
        %4826 = vmatpush.bf16.msra.mxu0 %v4369
        %4827 = vmatpush.bf16.msra.mxu0 %v4364
        %4828 = vmatpush.bf16.msra.mxu0 %v4359
        %4829 = vmatmul.bf16.gmra.mxu0 %v2666
        %v4830 = vpop.f32.mrf.mxu0
        %v4831 = vadd.f32 %v4818, %v4830
        %v4832 = vpop.f32.mrf.mxu0
        %4833 = vdwg.mxu0
        %4834 = vmatpush.bf16.msra.mxu0 %v4115
        %4835 = vmatpush.bf16.msra.mxu0 %v4110
        %4836 = vmatpush.bf16.msra.mxu0 %v4105
        %4837 = vmatpush.bf16.msra.mxu0 %v4100
        %4838 = vmatpush.bf16.msra.mxu0 %v4095
        %4839 = vmatpush.bf16.msra.mxu0 %v4090
        %4840 = vmatpush.bf16.msra.mxu0 %v4085
        %4841 = vmatpush.bf16.msra.mxu0 %v4080
        %4842 = vmatmul.bf16.gmra.mxu0 %v2659
        %v4843 = vpop.f32.mrf.mxu0
        %v4844 = vadd.f32 %v4721, %v4843
        %v4845 = vpop.f32.mrf.mxu0
        %4846 = vdwg.mxu0
        %4847 = vmatpush.bf16.msra.mxu0 %v4155
        %4848 = vmatpush.bf16.msra.mxu0 %v4150
        %4849 = vmatpush.bf16.msra.mxu0 %v4145
        %4850 = vmatpush.bf16.msra.mxu0 %v4140
        %4851 = vmatpush.bf16.msra.mxu0 %v4135
        %4852 = vmatpush.bf16.msra.mxu0 %v4130
        %4853 = vmatpush.bf16.msra.mxu0 %v4125
        %4854 = vmatpush.bf16.msra.mxu0 %v4120
        %4855 = vmatmul.bf16.gmra.mxu0 %v2660
        %v4856 = vpop.f32.mrf.mxu0
        %v4857 = vadd.f32 %v4844, %v4856
        %v4858 = vpop.f32.mrf.mxu0
        %4859 = vdwg.mxu0
        %4860 = vmatpush.bf16.msra.mxu0 %v4195
        %4861 = vmatpush.bf16.msra.mxu0 %v4190
        %4862 = vmatpush.bf16.msra.mxu0 %v4185
        %4863 = vmatpush.bf16.msra.mxu0 %v4180
        %4864 = vmatpush.bf16.msra.mxu0 %v4175
        %4865 = vmatpush.bf16.msra.mxu0 %v4170
        %4866 = vmatpush.bf16.msra.mxu0 %v4165
        %4867 = vmatpush.bf16.msra.mxu0 %v4160
        %4868 = vmatmul.bf16.gmra.mxu0 %v2661
        %v4869 = vpop.f32.mrf.mxu0
        %v4870 = vadd.f32 %v4857, %v4869
        %v4871 = vpop.f32.mrf.mxu0
        %4872 = vdwg.mxu0
        %4873 = vmatpush.bf16.msra.mxu0 %v4235
        %4874 = vmatpush.bf16.msra.mxu0 %v4230
        %4875 = vmatpush.bf16.msra.mxu0 %v4225
        %4876 = vmatpush.bf16.msra.mxu0 %v4220
        %4877 = vmatpush.bf16.msra.mxu0 %v4215
        %4878 = vmatpush.bf16.msra.mxu0 %v4210
        %4879 = vmatpush.bf16.msra.mxu0 %v4205
        %4880 = vmatpush.bf16.msra.mxu0 %v4200
        %4881 = vmatmul.bf16.gmra.mxu0 %v2662
        %v4882 = vpop.f32.mrf.mxu0
        %v4883 = vadd.f32 %v4870, %v4882
        %v4884 = vpop.f32.mrf.mxu0
        %4885 = vdwg.mxu0
        %4886 = vmatpush.bf16.msra.mxu0 %v4275
        %4887 = vmatpush.bf16.msra.mxu0 %v4270
        %4888 = vmatpush.bf16.msra.mxu0 %v4265
        %4889 = vmatpush.bf16.msra.mxu0 %v4260
        %4890 = vmatpush.bf16.msra.mxu0 %v4255
        %4891 = vmatpush.bf16.msra.mxu0 %v4250
        %4892 = vmatpush.bf16.msra.mxu0 %v4245
        %4893 = vmatpush.bf16.msra.mxu0 %v4240
        %4894 = vmatmul.bf16.gmra.mxu0 %v2663
        %v4895 = vpop.f32.mrf.mxu0
        %v4896 = vadd.f32 %v4883, %v4895
        %v4897 = vpop.f32.mrf.mxu0
        %4898 = vdwg.mxu0
        %4899 = vmatpush.bf16.msra.mxu0 %v4315
        %4900 = vmatpush.bf16.msra.mxu0 %v4310
        %4901 = vmatpush.bf16.msra.mxu0 %v4305
        %4902 = vmatpush.bf16.msra.mxu0 %v4300
        %4903 = vmatpush.bf16.msra.mxu0 %v4295
        %4904 = vmatpush.bf16.msra.mxu0 %v4290
        %4905 = vmatpush.bf16.msra.mxu0 %v4285
        %4906 = vmatpush.bf16.msra.mxu0 %v4280
        %4907 = vmatmul.bf16.gmra.mxu0 %v2664
        %v4908 = vpop.f32.mrf.mxu0
        %v4909 = vadd.f32 %v4896, %v4908
        %v4910 = vpop.f32.mrf.mxu0
        %4911 = vdwg.mxu0
        %4912 = vmatpush.bf16.msra.mxu0 %v4355
        %4913 = vmatpush.bf16.msra.mxu0 %v4350
        %4914 = vmatpush.bf16.msra.mxu0 %v4345
        %4915 = vmatpush.bf16.msra.mxu0 %v4340
        %4916 = vmatpush.bf16.msra.mxu0 %v4335
        %4917 = vmatpush.bf16.msra.mxu0 %v4330
        %4918 = vmatpush.bf16.msra.mxu0 %v4325
        %4919 = vmatpush.bf16.msra.mxu0 %v4320
        %4920 = vmatmul.bf16.gmra.mxu0 %v2665
        %v4921 = vpop.f32.mrf.mxu0
        %v4922 = vadd.f32 %v4909, %v4921
        %v4923 = vpop.f32.mrf.mxu0
        %4924 = vdwg.mxu0
        %4925 = vmatpush.bf16.msra.mxu0 %v4395
        %4926 = vmatpush.bf16.msra.mxu0 %v4390
        %4927 = vmatpush.bf16.msra.mxu0 %v4385
        %4928 = vmatpush.bf16.msra.mxu0 %v4380
        %4929 = vmatpush.bf16.msra.mxu0 %v4375
        %4930 = vmatpush.bf16.msra.mxu0 %v4370
        %4931 = vmatpush.bf16.msra.mxu0 %v4365
        %4932 = vmatpush.bf16.msra.mxu0 %v4360
        %4933 = vmatmul.bf16.gmra.mxu0 %v2666
        %v4934 = vpop.f32.mrf.mxu0
        %v4935 = vadd.f32 %v4922, %v4934
        %v4936 = vpop.f32.mrf.mxu0
        %4937 = vdwg.mxu0
        %4938 = vmatpush.bf16.msra.mxu0 %v4116
        %4939 = vmatpush.bf16.msra.mxu0 %v4111
        %4940 = vmatpush.bf16.msra.mxu0 %v4106
        %4941 = vmatpush.bf16.msra.mxu0 %v4101
        %4942 = vmatpush.bf16.msra.mxu0 %v4096
        %4943 = vmatpush.bf16.msra.mxu0 %v4091
        %4944 = vmatpush.bf16.msra.mxu0 %v4086
        %4945 = vmatpush.bf16.msra.mxu0 %v4081
        %4946 = vmatmul.bf16.gmra.mxu0 %v2659
        %v4947 = vpop.f32.mrf.mxu0
        %v4948 = vadd.f32 %v4722, %v4947
        %v4949 = vpop.f32.mrf.mxu0
        %4950 = vdwg.mxu0
        %4951 = vmatpush.bf16.msra.mxu0 %v4156
        %4952 = vmatpush.bf16.msra.mxu0 %v4151
        %4953 = vmatpush.bf16.msra.mxu0 %v4146
        %4954 = vmatpush.bf16.msra.mxu0 %v4141
        %4955 = vmatpush.bf16.msra.mxu0 %v4136
        %4956 = vmatpush.bf16.msra.mxu0 %v4131
        %4957 = vmatpush.bf16.msra.mxu0 %v4126
        %4958 = vmatpush.bf16.msra.mxu0 %v4121
        %4959 = vmatmul.bf16.gmra.mxu0 %v2660
        %v4960 = vpop.f32.mrf.mxu0
        %v4961 = vadd.f32 %v4948, %v4960
        %v4962 = vpop.f32.mrf.mxu0
        %4963 = vdwg.mxu0
        %4964 = vmatpush.bf16.msra.mxu0 %v4196
        %4965 = vmatpush.bf16.msra.mxu0 %v4191
        %4966 = vmatpush.bf16.msra.mxu0 %v4186
        %4967 = vmatpush.bf16.msra.mxu0 %v4181
        %4968 = vmatpush.bf16.msra.mxu0 %v4176
        %4969 = vmatpush.bf16.msra.mxu0 %v4171
        %4970 = vmatpush.bf16.msra.mxu0 %v4166
        %4971 = vmatpush.bf16.msra.mxu0 %v4161
        %4972 = vmatmul.bf16.gmra.mxu0 %v2661
        %v4973 = vpop.f32.mrf.mxu0
        %v4974 = vadd.f32 %v4961, %v4973
        %v4975 = vpop.f32.mrf.mxu0
        %4976 = vdwg.mxu0
        %4977 = vmatpush.bf16.msra.mxu0 %v4236
        %4978 = vmatpush.bf16.msra.mxu0 %v4231
        %4979 = vmatpush.bf16.msra.mxu0 %v4226
        %4980 = vmatpush.bf16.msra.mxu0 %v4221
        %4981 = vmatpush.bf16.msra.mxu0 %v4216
        %4982 = vmatpush.bf16.msra.mxu0 %v4211
        %4983 = vmatpush.bf16.msra.mxu0 %v4206
        %4984 = vmatpush.bf16.msra.mxu0 %v4201
        %4985 = vmatmul.bf16.gmra.mxu0 %v2662
        %v4986 = vpop.f32.mrf.mxu0
        %v4987 = vadd.f32 %v4974, %v4986
        %v4988 = vpop.f32.mrf.mxu0
        %4989 = vdwg.mxu0
        %4990 = vmatpush.bf16.msra.mxu0 %v4276
        %4991 = vmatpush.bf16.msra.mxu0 %v4271
        %4992 = vmatpush.bf16.msra.mxu0 %v4266
        %4993 = vmatpush.bf16.msra.mxu0 %v4261
        %4994 = vmatpush.bf16.msra.mxu0 %v4256
        %4995 = vmatpush.bf16.msra.mxu0 %v4251
        %4996 = vmatpush.bf16.msra.mxu0 %v4246
        %4997 = vmatpush.bf16.msra.mxu0 %v4241
        %4998 = vmatmul.bf16.gmra.mxu0 %v2663
        %v4999 = vpop.f32.mrf.mxu0
        %v5000 = vadd.f32 %v4987, %v4999
        %v5001 = vpop.f32.mrf.mxu0
        %5002 = vdwg.mxu0
        %5003 = vmatpush.bf16.msra.mxu0 %v4316
        %5004 = vmatpush.bf16.msra.mxu0 %v4311
        %5005 = vmatpush.bf16.msra.mxu0 %v4306
        %5006 = vmatpush.bf16.msra.mxu0 %v4301
        %5007 = vmatpush.bf16.msra.mxu0 %v4296
        %5008 = vmatpush.bf16.msra.mxu0 %v4291
        %5009 = vmatpush.bf16.msra.mxu0 %v4286
        %5010 = vmatpush.bf16.msra.mxu0 %v4281
        %5011 = vmatmul.bf16.gmra.mxu0 %v2664
        %v5012 = vpop.f32.mrf.mxu0
        %v5013 = vadd.f32 %v5000, %v5012
        %v5014 = vpop.f32.mrf.mxu0
        %5015 = vdwg.mxu0
        %5016 = vmatpush.bf16.msra.mxu0 %v4356
        %5017 = vmatpush.bf16.msra.mxu0 %v4351
        %5018 = vmatpush.bf16.msra.mxu0 %v4346
        %5019 = vmatpush.bf16.msra.mxu0 %v4341
        %5020 = vmatpush.bf16.msra.mxu0 %v4336
        %5021 = vmatpush.bf16.msra.mxu0 %v4331
        %5022 = vmatpush.bf16.msra.mxu0 %v4326
        %5023 = vmatpush.bf16.msra.mxu0 %v4321
        %5024 = vmatmul.bf16.gmra.mxu0 %v2665
        %v5025 = vpop.f32.mrf.mxu0
        %v5026 = vadd.f32 %v5013, %v5025
        %v5027 = vpop.f32.mrf.mxu0
        %5028 = vdwg.mxu0
        %5029 = vmatpush.bf16.msra.mxu0 %v4396
        %5030 = vmatpush.bf16.msra.mxu0 %v4391
        %5031 = vmatpush.bf16.msra.mxu0 %v4386
        %5032 = vmatpush.bf16.msra.mxu0 %v4381
        %5033 = vmatpush.bf16.msra.mxu0 %v4376
        %5034 = vmatpush.bf16.msra.mxu0 %v4371
        %5035 = vmatpush.bf16.msra.mxu0 %v4366
        %5036 = vmatpush.bf16.msra.mxu0 %v4361
        %5037 = vmatmul.bf16.gmra.mxu0 %v2666
        %v5038 = vpop.f32.mrf.mxu0
        %v5039 = vadd.f32 %v5026, %v5038
        %v5040 = vpop.f32.mrf.mxu0
        %5041 = vdwg.mxu0
        %5042 = vmatpush.bf16.msra.mxu0 %v4117
        %5043 = vmatpush.bf16.msra.mxu0 %v4112
        %5044 = vmatpush.bf16.msra.mxu0 %v4107
        %5045 = vmatpush.bf16.msra.mxu0 %v4102
        %5046 = vmatpush.bf16.msra.mxu0 %v4097
        %5047 = vmatpush.bf16.msra.mxu0 %v4092
        %5048 = vmatpush.bf16.msra.mxu0 %v4087
        %5049 = vmatpush.bf16.msra.mxu0 %v4082
        %5050 = vmatmul.bf16.gmra.mxu0 %v2659
        %v5051 = vpop.f32.mrf.mxu0
        %v5052 = vadd.f32 %v4723, %v5051
        %v5053 = vpop.f32.mrf.mxu0
        %5054 = vdwg.mxu0
        %5055 = vmatpush.bf16.msra.mxu0 %v4157
        %5056 = vmatpush.bf16.msra.mxu0 %v4152
        %5057 = vmatpush.bf16.msra.mxu0 %v4147
        %5058 = vmatpush.bf16.msra.mxu0 %v4142
        %5059 = vmatpush.bf16.msra.mxu0 %v4137
        %5060 = vmatpush.bf16.msra.mxu0 %v4132
        %5061 = vmatpush.bf16.msra.mxu0 %v4127
        %5062 = vmatpush.bf16.msra.mxu0 %v4122
        %5063 = vmatmul.bf16.gmra.mxu0 %v2660
        %v5064 = vpop.f32.mrf.mxu0
        %v5065 = vadd.f32 %v5052, %v5064
        %v5066 = vpop.f32.mrf.mxu0
        %5067 = vdwg.mxu0
        %5068 = vmatpush.bf16.msra.mxu0 %v4197
        %5069 = vmatpush.bf16.msra.mxu0 %v4192
        %5070 = vmatpush.bf16.msra.mxu0 %v4187
        %5071 = vmatpush.bf16.msra.mxu0 %v4182
        %5072 = vmatpush.bf16.msra.mxu0 %v4177
        %5073 = vmatpush.bf16.msra.mxu0 %v4172
        %5074 = vmatpush.bf16.msra.mxu0 %v4167
        %5075 = vmatpush.bf16.msra.mxu0 %v4162
        %5076 = vmatmul.bf16.gmra.mxu0 %v2661
        %v5077 = vpop.f32.mrf.mxu0
        %v5078 = vadd.f32 %v5065, %v5077
        %v5079 = vpop.f32.mrf.mxu0
        %5080 = vdwg.mxu0
        %5081 = vmatpush.bf16.msra.mxu0 %v4237
        %5082 = vmatpush.bf16.msra.mxu0 %v4232
        %5083 = vmatpush.bf16.msra.mxu0 %v4227
        %5084 = vmatpush.bf16.msra.mxu0 %v4222
        %5085 = vmatpush.bf16.msra.mxu0 %v4217
        %5086 = vmatpush.bf16.msra.mxu0 %v4212
        %5087 = vmatpush.bf16.msra.mxu0 %v4207
        %5088 = vmatpush.bf16.msra.mxu0 %v4202
        %5089 = vmatmul.bf16.gmra.mxu0 %v2662
        %v5090 = vpop.f32.mrf.mxu0
        %v5091 = vadd.f32 %v5078, %v5090
        %v5092 = vpop.f32.mrf.mxu0
        %5093 = vdwg.mxu0
        %5094 = vmatpush.bf16.msra.mxu0 %v4277
        %5095 = vmatpush.bf16.msra.mxu0 %v4272
        %5096 = vmatpush.bf16.msra.mxu0 %v4267
        %5097 = vmatpush.bf16.msra.mxu0 %v4262
        %5098 = vmatpush.bf16.msra.mxu0 %v4257
        %5099 = vmatpush.bf16.msra.mxu0 %v4252
        %5100 = vmatpush.bf16.msra.mxu0 %v4247
        %5101 = vmatpush.bf16.msra.mxu0 %v4242
        %5102 = vmatmul.bf16.gmra.mxu0 %v2663
        %v5103 = vpop.f32.mrf.mxu0
        %v5104 = vadd.f32 %v5091, %v5103
        %v5105 = vpop.f32.mrf.mxu0
        %5106 = vdwg.mxu0
        %5107 = vmatpush.bf16.msra.mxu0 %v4317
        %5108 = vmatpush.bf16.msra.mxu0 %v4312
        %5109 = vmatpush.bf16.msra.mxu0 %v4307
        %5110 = vmatpush.bf16.msra.mxu0 %v4302
        %5111 = vmatpush.bf16.msra.mxu0 %v4297
        %5112 = vmatpush.bf16.msra.mxu0 %v4292
        %5113 = vmatpush.bf16.msra.mxu0 %v4287
        %5114 = vmatpush.bf16.msra.mxu0 %v4282
        %5115 = vmatmul.bf16.gmra.mxu0 %v2664
        %v5116 = vpop.f32.mrf.mxu0
        %v5117 = vadd.f32 %v5104, %v5116
        %v5118 = vpop.f32.mrf.mxu0
        %5119 = vdwg.mxu0
        %5120 = vmatpush.bf16.msra.mxu0 %v4357
        %5121 = vmatpush.bf16.msra.mxu0 %v4352
        %5122 = vmatpush.bf16.msra.mxu0 %v4347
        %5123 = vmatpush.bf16.msra.mxu0 %v4342
        %5124 = vmatpush.bf16.msra.mxu0 %v4337
        %5125 = vmatpush.bf16.msra.mxu0 %v4332
        %5126 = vmatpush.bf16.msra.mxu0 %v4327
        %5127 = vmatpush.bf16.msra.mxu0 %v4322
        %5128 = vmatmul.bf16.gmra.mxu0 %v2665
        %v5129 = vpop.f32.mrf.mxu0
        %v5130 = vadd.f32 %v5117, %v5129
        %v5131 = vpop.f32.mrf.mxu0
        %5132 = vdwg.mxu0
        %5133 = vmatpush.bf16.msra.mxu0 %v4397
        %5134 = vmatpush.bf16.msra.mxu0 %v4392
        %5135 = vmatpush.bf16.msra.mxu0 %v4387
        %5136 = vmatpush.bf16.msra.mxu0 %v4382
        %5137 = vmatpush.bf16.msra.mxu0 %v4377
        %5138 = vmatpush.bf16.msra.mxu0 %v4372
        %5139 = vmatpush.bf16.msra.mxu0 %v4367
        %5140 = vmatpush.bf16.msra.mxu0 %v4362
        %5141 = vmatmul.bf16.gmra.mxu0 %v2666
        %v5142 = vpop.f32.mrf.mxu0
        %v5143 = vadd.f32 %v5130, %v5142
        %v5144 = vpop.f32.mrf.mxu0
        %5145 = vdwg.mxu0
        %5146 = vmatpush.bf16.msra.mxu0 %v4118
        %5147 = vmatpush.bf16.msra.mxu0 %v4113
        %5148 = vmatpush.bf16.msra.mxu0 %v4108
        %5149 = vmatpush.bf16.msra.mxu0 %v4103
        %5150 = vmatpush.bf16.msra.mxu0 %v4098
        %5151 = vmatpush.bf16.msra.mxu0 %v4093
        %5152 = vmatpush.bf16.msra.mxu0 %v4088
        %5153 = vmatpush.bf16.msra.mxu0 %v4083
        %5154 = vmatmul.bf16.gmra.mxu0 %v2659
        %v5155 = vpop.f32.mrf.mxu0
        %v5156 = vadd.f32 %v4724, %v5155
        %v5157 = vpop.f32.mrf.mxu0
        %5158 = vdwg.mxu0
        %5159 = vmatpush.bf16.msra.mxu0 %v4158
        %5160 = vmatpush.bf16.msra.mxu0 %v4153
        %5161 = vmatpush.bf16.msra.mxu0 %v4148
        %5162 = vmatpush.bf16.msra.mxu0 %v4143
        %5163 = vmatpush.bf16.msra.mxu0 %v4138
        %5164 = vmatpush.bf16.msra.mxu0 %v4133
        %5165 = vmatpush.bf16.msra.mxu0 %v4128
        %5166 = vmatpush.bf16.msra.mxu0 %v4123
        %5167 = vmatmul.bf16.gmra.mxu0 %v2660
        %v5168 = vpop.f32.mrf.mxu0
        %v5169 = vadd.f32 %v5156, %v5168
        %v5170 = vpop.f32.mrf.mxu0
        %5171 = vdwg.mxu0
        %5172 = vmatpush.bf16.msra.mxu0 %v4198
        %5173 = vmatpush.bf16.msra.mxu0 %v4193
        %5174 = vmatpush.bf16.msra.mxu0 %v4188
        %5175 = vmatpush.bf16.msra.mxu0 %v4183
        %5176 = vmatpush.bf16.msra.mxu0 %v4178
        %5177 = vmatpush.bf16.msra.mxu0 %v4173
        %5178 = vmatpush.bf16.msra.mxu0 %v4168
        %5179 = vmatpush.bf16.msra.mxu0 %v4163
        %5180 = vmatmul.bf16.gmra.mxu0 %v2661
        %v5181 = vpop.f32.mrf.mxu0
        %v5182 = vadd.f32 %v5169, %v5181
        %v5183 = vpop.f32.mrf.mxu0
        %5184 = vdwg.mxu0
        %5185 = vmatpush.bf16.msra.mxu0 %v4238
        %5186 = vmatpush.bf16.msra.mxu0 %v4233
        %5187 = vmatpush.bf16.msra.mxu0 %v4228
        %5188 = vmatpush.bf16.msra.mxu0 %v4223
        %5189 = vmatpush.bf16.msra.mxu0 %v4218
        %5190 = vmatpush.bf16.msra.mxu0 %v4213
        %5191 = vmatpush.bf16.msra.mxu0 %v4208
        %5192 = vmatpush.bf16.msra.mxu0 %v4203
        %5193 = vmatmul.bf16.gmra.mxu0 %v2662
        %v5194 = vpop.f32.mrf.mxu0
        %v5195 = vadd.f32 %v5182, %v5194
        %v5196 = vpop.f32.mrf.mxu0
        %5197 = vdwg.mxu0
        %5198 = vmatpush.bf16.msra.mxu0 %v4278
        %5199 = vmatpush.bf16.msra.mxu0 %v4273
        %5200 = vmatpush.bf16.msra.mxu0 %v4268
        %5201 = vmatpush.bf16.msra.mxu0 %v4263
        %5202 = vmatpush.bf16.msra.mxu0 %v4258
        %5203 = vmatpush.bf16.msra.mxu0 %v4253
        %5204 = vmatpush.bf16.msra.mxu0 %v4248
        %5205 = vmatpush.bf16.msra.mxu0 %v4243
        %5206 = vmatmul.bf16.gmra.mxu0 %v2663
        %v5207 = vpop.f32.mrf.mxu0
        %v5208 = vadd.f32 %v5195, %v5207
        %v5209 = vpop.f32.mrf.mxu0
        %5210 = vdwg.mxu0
        %5211 = vmatpush.bf16.msra.mxu0 %v4318
        %5212 = vmatpush.bf16.msra.mxu0 %v4313
        %5213 = vmatpush.bf16.msra.mxu0 %v4308
        %5214 = vmatpush.bf16.msra.mxu0 %v4303
        %5215 = vmatpush.bf16.msra.mxu0 %v4298
        %5216 = vmatpush.bf16.msra.mxu0 %v4293
        %5217 = vmatpush.bf16.msra.mxu0 %v4288
        %5218 = vmatpush.bf16.msra.mxu0 %v4283
        %5219 = vmatmul.bf16.gmra.mxu0 %v2664
        %v5220 = vpop.f32.mrf.mxu0
        %v5221 = vadd.f32 %v5208, %v5220
        %v5222 = vpop.f32.mrf.mxu0
        %5223 = vdwg.mxu0
        %5224 = vmatpush.bf16.msra.mxu0 %v4358
        %5225 = vmatpush.bf16.msra.mxu0 %v4353
        %5226 = vmatpush.bf16.msra.mxu0 %v4348
        %5227 = vmatpush.bf16.msra.mxu0 %v4343
        %5228 = vmatpush.bf16.msra.mxu0 %v4338
        %5229 = vmatpush.bf16.msra.mxu0 %v4333
        %5230 = vmatpush.bf16.msra.mxu0 %v4328
        %5231 = vmatpush.bf16.msra.mxu0 %v4323
        %5232 = vmatmul.bf16.gmra.mxu0 %v2665
        %v5233 = vpop.f32.mrf.mxu0
        %v5234 = vadd.f32 %v5221, %v5233
        %v5235 = vpop.f32.mrf.mxu0
        %5236 = vdwg.mxu0
        %5237 = vmatpush.bf16.msra.mxu0 %v4398
        %5238 = vmatpush.bf16.msra.mxu0 %v4393
        %5239 = vmatpush.bf16.msra.mxu0 %v4388
        %5240 = vmatpush.bf16.msra.mxu0 %v4383
        %5241 = vmatpush.bf16.msra.mxu0 %v4378
        %5242 = vmatpush.bf16.msra.mxu0 %v4373
        %5243 = vmatpush.bf16.msra.mxu0 %v4368
        %5244 = vmatpush.bf16.msra.mxu0 %v4363
        %5245 = vmatmul.bf16.gmra.mxu0 %v2666
        %v5246 = vpop.f32.mrf.mxu0
        %v5247 = vadd.f32 %v5234, %v5246
        %v5248 = vpop.f32.mrf.mxu0
        %5249 = vdwg.mxu0
        %s5250 = scalar_lea.vmem [#allocation25], 45
        %v5251 = vld [vmem:[%s5250] ss:$8 sm:$0xf]
        %s5252 = scalar_lea.vmem [#allocation25], 46
        %v5253 = vld [vmem:[%s5252] ss:$8 sm:$0xf]
        %v5254 = vsel %vm799, %v4831, 0.0
        %v5255 = vsel %vm799, %v4935, 0.0
        %v5256 = vadd.f32 %v5254, %v5255
        %v5257 = vsel %vm799, %v5039, 0.0
        %v5258 = vadd.f32 %v5256, %v5257
        %v5259 = vsel %vm799, %v5143, 0.0
        %v5260 = vadd.f32 %v5258, %v5259
        %5261 = vadd.xlane.f32.xlu0 %v5260
        %v5262 = vpop.xlane.xlu0 %5261
        %v5263 = vrcp.pop 512.0
        %v5264 = vmul.f32 512.0, %v5263
        %v5265 = vsub.f32 1.0, %v5264
        %v5266 = vmul.f32 %v5263, %v5265
        %v5267 = vadd.f32 %v5263, %v5266
        %vm5268 = vweird.f32 %v5263
        %v5269 = vsel %vm5268, %v5263, %v5267
        %v5270 = vmul.f32 %v5262, %v5269
        %v5271 = vsub.f32 %v4831, %v5270
        %v5272 = vsub.f32 %v4935, %v5270
        %v5273 = vsub.f32 %v5039, %v5270
        %v5274 = vsub.f32 %v5143, %v5270
        %v5275 = vmul.f32 %v5271, %v5271
        %v5276 = vmul.f32 %v5272, %v5272
        %v5277 = vmul.f32 %v5273, %v5273
        %v5278 = vmul.f32 %v5274, %v5274
        %v5279 = vsel %vm799, %v5275, 0.0
        %v5280 = vsel %vm799, %v5276, 0.0
        %v5281 = vadd.f32 %v5279, %v5280
        %v5282 = vsel %vm799, %v5277, 0.0
        %v5283 = vadd.f32 %v5281, %v5282
        %v5284 = vsel %vm799, %v5278, 0.0
        %v5285 = vadd.f32 %v5283, %v5284
        %5286 = vadd.xlane.f32.xlu0 %v5285
        %v5287 = vpop.xlane.xlu0 %5286
        %v5288 = vmul.f32 %v5287, %v5269
        %v5289 = vadd.f32 %v5288, 1e-05
        %v5290 = vrsqrt.pop %v5289
        %v5291 = vmul.f32 %v5290, %v5289
        %v5292 = vmul.f32 %v5291, %v5290
        %v5293 = vmul.f32 0.5, %v5292
        %v5294 = vsub.f32 1.5, %v5293
        %v5295 = vmul.f32 %v5290, %v5294
        %vm5296 = vweird.f32 %v5289
        %vm5297 = vweird.f32 %v5290
        %vm5298 = vmor %vm5296, %vm5297
        %v5299 = vsel %vm5298, %v5290, %v5295
        %v5300 = vmul.f32 %v5271, %v5299
        %v5301 = vmul.f32 %v5272, %v5299
        %v5302 = vmul.f32 %v5273, %v5299
        %v5303 = vmul.f32 %v5274, %v5299
        %v5305 = vperm.slane %v5251, 0
        %v5306 = vperm.slane %v5251, 1
        %v5307 = vperm.slane %v5251, 2
        %v5308 = vperm.slane %v5251, 3
        %v5313 = vmul.f32 %v5300, %v5305
        %v5314 = vmul.f32 %v5301, %v5306
        %v5315 = vmul.f32 %v5302, %v5307
        %v5316 = vmul.f32 %v5303, %v5308
        %v5318 = vperm.slane %v5253, 0
        %v5319 = vperm.slane %v5253, 1
        %v5320 = vperm.slane %v5253, 2
        %v5321 = vperm.slane %v5253, 3
        %v5326 = vadd.f32 %v5313, %v5318
        %v5327 = vadd.f32 %v5314, %v5319
        %v5328 = vadd.f32 %v5315, %v5320
        %v5329 = vadd.f32 %v5316, %v5321
        %v5330 = vmul.f32 %v5326, 0.5
        %v5331 = vmul.f32 %v5327, 0.5
        %v5332 = vmul.f32 %v5328, 0.5
        %v5333 = vmul.f32 %v5329, 0.5
        %v5334 = vmul.f32 %v5326, 0.044715
        %v5335 = vmul.f32 %v5327, 0.044715
        %v5336 = vmul.f32 %v5328, 0.044715
        %v5337 = vmul.f32 %v5329, 0.044715
        %v5338 = vmul.f32 %v5334, %v5326
        %v5339 = vmul.f32 %v5335, %v5327
        %v5340 = vmul.f32 %v5336, %v5328
        %v5341 = vmul.f32 %v5337, %v5329
        %v5342 = vmul.f32 %v5338, %v5326
        %v5343 = vmul.f32 %v5339, %v5327
        %v5344 = vmul.f32 %v5340, %v5328
        %v5345 = vmul.f32 %v5341, %v5329
        %v5346 = vadd.f32 %v5326, %v5342
        %v5347 = vadd.f32 %v5327, %v5343
        %v5348 = vadd.f32 %v5328, %v5344
        %v5349 = vadd.f32 %v5329, %v5345
        %v5350 = vmul.f32 %v5346, 0.7978846
        %v5351 = vmul.f32 %v5347, 0.7978846
        %v5352 = vmul.f32 %v5348, 0.7978846
        %v5353 = vmul.f32 %v5349, 0.7978846
        %v5354 = vtanh.pop %v5350
        %v5355 = vtanh.pop %v5351
        %v5356 = vtanh.pop %v5352
        %v5357 = vtanh.pop %v5353
        %v5358 = vadd.f32 %v5354, 1.0
        %v5359 = vadd.f32 %v5355, 1.0
        %v5360 = vadd.f32 %v5356, 1.0
        %v5361 = vadd.f32 %v5357, 1.0
        %v5362 = vmul.f32 %v5330, %v5358
        %v5363 = vmul.f32 %v5331, %v5359
        %v5364 = vmul.f32 %v5332, %v5360
        %v5365 = vmul.f32 %v5333, %v5361
        %v5366 = vpack.c.bf16 %v5362, %v5362
        %v5367 = vpack.c.bf16 %v5363, %v5363
        %v5368 = vpack.c.bf16 %v5364, %v5364
        %v5369 = vpack.c.bf16 %v5365, %v5365
        %v5370 = vld [vmem:[#allocation23] sm:$0xf]
        %v5371 = vld [vmem:[#allocation23 + $0x4] sm:$0xf]
        %v5372 = vld [vmem:[#allocation23 + $0x8] sm:$0xf]
        %v5373 = vld [vmem:[#allocation23 + $0xc] sm:$0xf]
        %v5374 = vld [vmem:[#allocation23 + $0x10] sm:$0xf]
        %v5375 = vld [vmem:[#allocation23 + $0x14] sm:$0xf]
        %v5376 = vld [vmem:[#allocation23 + $0x18] sm:$0xf]
        %v5377 = vld [vmem:[#allocation23 + $0x1c] sm:$0xf]
        %v5378 = vld [vmem:[#allocation23 + $0x20] sm:$0xf]
        %v5379 = vld [vmem:[#allocation23 + $0x24] sm:$0xf]
        %v5380 = vld [vmem:[#allocation23 + $0x28] sm:$0xf]
        %v5381 = vld [vmem:[#allocation23 + $0x2c] sm:$0xf]
        %v5382 = vld [vmem:[#allocation23 + $0x30] sm:$0xf]
        %v5383 = vld [vmem:[#allocation23 + $0x34] sm:$0xf]
        %v5384 = vld [vmem:[#allocation23 + $0x38] sm:$0xf]
        %v5385 = vld [vmem:[#allocation23 + $0x3c] sm:$0xf]
        %v5386 = vld [vmem:[#allocation23 + $0x40] sm:$0xf]
        %v5387 = vld [vmem:[#allocation23 + $0x44] sm:$0xf]
        %v5388 = vld [vmem:[#allocation23 + $0x48] sm:$0xf]
        %v5389 = vld [vmem:[#allocation23 + $0x4c] sm:$0xf]
        %v5390 = vld [vmem:[#allocation23 + $0x50] sm:$0xf]
        %v5391 = vld [vmem:[#allocation23 + $0x54] sm:$0xf]
        %v5392 = vld [vmem:[#allocation23 + $0x58] sm:$0xf]
        %v5393 = vld [vmem:[#allocation23 + $0x5c] sm:$0xf]
        %v5394 = vld [vmem:[#allocation23 + $0x60] sm:$0xf]
        %v5395 = vld [vmem:[#allocation23 + $0x64] sm:$0xf]
        %v5396 = vld [vmem:[#allocation23 + $0x68] sm:$0xf]
        %v5397 = vld [vmem:[#allocation23 + $0x6c] sm:$0xf]
        %v5398 = vld [vmem:[#allocation23 + $0x70] sm:$0xf]
        %v5399 = vld [vmem:[#allocation23 + $0x74] sm:$0xf]
        %v5400 = vld [vmem:[#allocation23 + $0x78] sm:$0xf]
        %v5401 = vld [vmem:[#allocation23 + $0x7c] sm:$0xf]
        %v5402 = vld [vmem:[#allocation23 + $0x80] sm:$0xf]
        %v5403 = vld [vmem:[#allocation23 + $0x84] sm:$0xf]
        %v5404 = vld [vmem:[#allocation23 + $0x88] sm:$0xf]
        %v5405 = vld [vmem:[#allocation23 + $0x8c] sm:$0xf]
        %v5406 = vld [vmem:[#allocation23 + $0x90] sm:$0xf]
        %v5407 = vld [vmem:[#allocation23 + $0x94] sm:$0xf]
        %v5408 = vld [vmem:[#allocation23 + $0x98] sm:$0xf]
        %v5409 = vld [vmem:[#allocation23 + $0x9c] sm:$0xf]
        %v5410 = vld [vmem:[#allocation23 + $0xa0] sm:$0xf]
        %v5411 = vld [vmem:[#allocation23 + $0xa4] sm:$0xf]
        %v5412 = vld [vmem:[#allocation23 + $0xa8] sm:$0xf]
        %v5413 = vld [vmem:[#allocation23 + $0xac] sm:$0xf]
        %v5414 = vld [vmem:[#allocation23 + $0xb0] sm:$0xf]
        %v5415 = vld [vmem:[#allocation23 + $0xb4] sm:$0xf]
        %v5416 = vld [vmem:[#allocation23 + $0xb8] sm:$0xf]
        %v5417 = vld [vmem:[#allocation23 + $0xbc] sm:$0xf]
        %v5418 = vld [vmem:[#allocation23 + $0xc0] sm:$0xf]
        %v5419 = vld [vmem:[#allocation23 + $0xc4] sm:$0xf]
        %v5420 = vld [vmem:[#allocation23 + $0xc8] sm:$0xf]
        %v5421 = vld [vmem:[#allocation23 + $0xcc] sm:$0xf]
        %v5422 = vld [vmem:[#allocation23 + $0xd0] sm:$0xf]
        %v5423 = vld [vmem:[#allocation23 + $0xd4] sm:$0xf]
        %v5424 = vld [vmem:[#allocation23 + $0xd8] sm:$0xf]
        %v5425 = vld [vmem:[#allocation23 + $0xdc] sm:$0xf]
        %v5426 = vld [vmem:[#allocation23 + $0xe0] sm:$0xf]
        %v5427 = vld [vmem:[#allocation23 + $0xe4] sm:$0xf]
        %v5428 = vld [vmem:[#allocation23 + $0xe8] sm:$0xf]
        %v5429 = vld [vmem:[#allocation23 + $0xec] sm:$0xf]
        %v5430 = vld [vmem:[#allocation23 + $0xf0] sm:$0xf]
        %v5431 = vld [vmem:[#allocation23 + $0xf4] sm:$0xf]
        %v5432 = vld [vmem:[#allocation23 + $0xf8] sm:$0xf]
        %v5433 = vld [vmem:[#allocation23 + $0xfc] sm:$0xf]
        %v5434 = vld [vmem:[#allocation25 + $0x2f] ss:$0 sm:$0xff]
        %v5499 = vunpack.c.l.b16 %v5370
        %v5500 = vunpack.c.l.b16 %v5371
        %v5501 = vunpack.c.l.b16 %v5372
        %v5502 = vunpack.c.l.b16 %v5373
        %v5503 = vunpack.c.l.b16 %v5374
        %v5504 = vunpack.c.l.b16 %v5375
        %v5505 = vunpack.c.l.b16 %v5376
        %v5506 = vunpack.c.l.b16 %v5377
        %v5507 = vunpack.c.l.b16 %v5378
        %v5508 = vunpack.c.l.b16 %v5379
        %v5509 = vunpack.c.l.b16 %v5380
        %v5510 = vunpack.c.l.b16 %v5381
        %v5511 = vunpack.c.l.b16 %v5382
        %v5512 = vunpack.c.l.b16 %v5383
        %v5513 = vunpack.c.l.b16 %v5384
        %v5514 = vunpack.c.l.b16 %v5385
        %v5515 = vunpack.c.l.b16 %v5386
        %v5516 = vunpack.c.l.b16 %v5387
        %v5517 = vunpack.c.l.b16 %v5388
        %v5518 = vunpack.c.l.b16 %v5389
        %v5519 = vunpack.c.l.b16 %v5390
        %v5520 = vunpack.c.l.b16 %v5391
        %v5521 = vunpack.c.l.b16 %v5392
        %v5522 = vunpack.c.l.b16 %v5393
        %v5523 = vunpack.c.l.b16 %v5394
        %v5524 = vunpack.c.l.b16 %v5395
        %v5525 = vunpack.c.l.b16 %v5396
        %v5526 = vunpack.c.l.b16 %v5397
        %v5527 = vunpack.c.l.b16 %v5398
        %v5528 = vunpack.c.l.b16 %v5399
        %v5529 = vunpack.c.l.b16 %v5400
        %v5530 = vunpack.c.l.b16 %v5401
        %v5531 = vunpack.c.l.b16 %v5402
        %v5532 = vunpack.c.l.b16 %v5403
        %v5533 = vunpack.c.l.b16 %v5404
        %v5534 = vunpack.c.l.b16 %v5405
        %v5535 = vunpack.c.l.b16 %v5406
        %v5536 = vunpack.c.l.b16 %v5407
        %v5537 = vunpack.c.l.b16 %v5408
        %v5538 = vunpack.c.l.b16 %v5409
        %v5539 = vunpack.c.l.b16 %v5410
        %v5540 = vunpack.c.l.b16 %v5411
        %v5541 = vunpack.c.l.b16 %v5412
        %v5542 = vunpack.c.l.b16 %v5413
        %v5543 = vunpack.c.l.b16 %v5414
        %v5544 = vunpack.c.l.b16 %v5415
        %v5545 = vunpack.c.l.b16 %v5416
        %v5546 = vunpack.c.l.b16 %v5417
        %v5547 = vunpack.c.l.b16 %v5418
        %v5548 = vunpack.c.l.b16 %v5419
        %v5549 = vunpack.c.l.b16 %v5420
        %v5550 = vunpack.c.l.b16 %v5421
        %v5551 = vunpack.c.l.b16 %v5422
        %v5552 = vunpack.c.l.b16 %v5423
        %v5553 = vunpack.c.l.b16 %v5424
        %v5554 = vunpack.c.l.b16 %v5425
        %v5555 = vunpack.c.l.b16 %v5426
        %v5556 = vunpack.c.l.b16 %v5427
        %v5557 = vunpack.c.l.b16 %v5428
        %v5558 = vunpack.c.l.b16 %v5429
        %v5559 = vunpack.c.l.b16 %v5430
        %v5560 = vunpack.c.l.b16 %v5431
        %v5561 = vunpack.c.l.b16 %v5432
        %v5562 = vunpack.c.l.b16 %v5433
        %v5563 = vpack.c.b16 %v5500, %v5499
        %v5564 = vpack.c.b16 %v5502, %v5501
        %v5565 = vpack.c.b16 %v5504, %v5503
        %v5566 = vpack.c.b16 %v5506, %v5505
        %v5567 = vpack.c.b16 %v5508, %v5507
        %v5568 = vpack.c.b16 %v5510, %v5509
        %v5569 = vpack.c.b16 %v5512, %v5511
        %v5570 = vpack.c.b16 %v5514, %v5513
        %v5571 = vpack.c.b16 %v5516, %v5515
        %v5572 = vpack.c.b16 %v5518, %v5517
        %v5573 = vpack.c.b16 %v5520, %v5519
        %v5574 = vpack.c.b16 %v5522, %v5521
        %v5575 = vpack.c.b16 %v5524, %v5523
        %v5576 = vpack.c.b16 %v5526, %v5525
        %v5577 = vpack.c.b16 %v5528, %v5527
        %v5578 = vpack.c.b16 %v5530, %v5529
        %v5579 = vpack.c.b16 %v5532, %v5531
        %v5580 = vpack.c.b16 %v5534, %v5533
        %v5581 = vpack.c.b16 %v5536, %v5535
        %v5582 = vpack.c.b16 %v5538, %v5537
        %v5583 = vpack.c.b16 %v5540, %v5539
        %v5584 = vpack.c.b16 %v5542, %v5541
        %v5585 = vpack.c.b16 %v5544, %v5543
        %v5586 = vpack.c.b16 %v5546, %v5545
        %v5587 = vpack.c.b16 %v5548, %v5547
        %v5588 = vpack.c.b16 %v5550, %v5549
        %v5589 = vpack.c.b16 %v5552, %v5551
        %v5590 = vpack.c.b16 %v5554, %v5553
        %v5591 = vpack.c.b16 %v5556, %v5555
        %v5592 = vpack.c.b16 %v5558, %v5557
        %v5593 = vpack.c.b16 %v5560, %v5559
        %v5594 = vpack.c.b16 %v5562, %v5561
        %5627 = vmatpush.bf16.msra.mxu0 %v5570
        %5628 = vmatpush.bf16.msra.mxu0 %v5569
        %5629 = vmatpush.bf16.msra.mxu0 %v5568
        %5630 = vmatpush.bf16.msra.mxu0 %v5567
        %5631 = vmatpush.bf16.msra.mxu0 %v5566
        %5632 = vmatpush.bf16.msra.mxu0 %v5565
        %5633 = vmatpush.bf16.msra.mxu0 %v5564
        %5634 = vmatpush.bf16.msra.mxu0 %v5563
        %5635 = vmatmul.bf16.gmra.mxu0 %v5366
        %v5636 = vpop.f32.mrf.mxu0
        %v5637 = vadd.f32 %v5434, %v5636
        %v5638 = vpop.f32.mrf.mxu0
        %5639 = vdwg.mxu0
        %5640 = vmatpush.bf16.msra.mxu0 %v5578
        %5641 = vmatpush.bf16.msra.mxu0 %v5577
        %5642 = vmatpush.bf16.msra.mxu0 %v5576
        %5643 = vmatpush.bf16.msra.mxu0 %v5575
        %5644 = vmatpush.bf16.msra.mxu0 %v5574
        %5645 = vmatpush.bf16.msra.mxu0 %v5573
        %5646 = vmatpush.bf16.msra.mxu0 %v5572
        %5647 = vmatpush.bf16.msra.mxu0 %v5571
        %5648 = vmatmul.bf16.gmra.mxu0 %v5367
        %v5649 = vpop.f32.mrf.mxu0
        %v5650 = vadd.f32 %v5637, %v5649
        %v5651 = vpop.f32.mrf.mxu0
        %5652 = vdwg.mxu0
        %5653 = vmatpush.bf16.msra.mxu0 %v5586
        %5654 = vmatpush.bf16.msra.mxu0 %v5585
        %5655 = vmatpush.bf16.msra.mxu0 %v5584
        %5656 = vmatpush.bf16.msra.mxu0 %v5583
        %5657 = vmatpush.bf16.msra.mxu0 %v5582
        %5658 = vmatpush.bf16.msra.mxu0 %v5581
        %5659 = vmatpush.bf16.msra.mxu0 %v5580
        %5660 = vmatpush.bf16.msra.mxu0 %v5579
        %5661 = vmatmul.bf16.gmra.mxu0 %v5368
        %v5662 = vpop.f32.mrf.mxu0
        %v5663 = vadd.f32 %v5650, %v5662
        %v5664 = vpop.f32.mrf.mxu0
        %5665 = vdwg.mxu0
        %5666 = vmatpush.bf16.msra.mxu0 %v5594
        %5667 = vmatpush.bf16.msra.mxu0 %v5593
        %5668 = vmatpush.bf16.msra.mxu0 %v5592
        %5669 = vmatpush.bf16.msra.mxu0 %v5591
        %5670 = vmatpush.bf16.msra.mxu0 %v5590
        %5671 = vmatpush.bf16.msra.mxu0 %v5589
        %5672 = vmatpush.bf16.msra.mxu0 %v5588
        %5673 = vmatpush.bf16.msra.mxu0 %v5587
        %5674 = vmatmul.bf16.gmra.mxu0 %v5369
        %v5675 = vpop.f32.mrf.mxu0
        %v5676 = vadd.f32 %v5663, %v5675
        %v5677 = vpop.f32.mrf.mxu0
        %5678 = vdwg.mxu0
        %v5679 = vadd.f32 %v5676, %v5247
        %5680 = vst [vmem:[%s611] sm:$0x1] %v5679
        %s5681 = sand.u32 %s320, 1
        %s5682 = scalar_lea.sflag [#allocation10], %s5681
        %s5683 = sand.u32 %s320, 1
        %s5684 = scalar_lea.vmem [#allocation26], %s5683
        // Predicated region
        $region121: #{enhanced_hybrid_encoder_forward.1} parent=71 // pred_check
          %p5685 = pneg %p330
        $region122: #{enhanced_hybrid_encoder_forward.1} parent=71 // pred_check_branch
          %5687 = sbr.rel (%p5685) target = $region124
        $region123: #{enhanced_hybrid_encoder_forward.1} parent=71 // pred_region
          %5689 = vsyncadd %s5682, 0
          %s5690 = scalar_lea.hbm %s14, %s34
          %s5692 = sshll.u32 %s5684, 4
          %s5693 = int_to_ptr.vmem [resolvable:$true] %s5692
          %s5694 = sshll.u32 %s5690, 4
          %s5695 = int_to_ptr.hbm [resolvable:$true] %s5694
          %5697 = dma.vmem_to_hbm [thread:$0]  %s5693, 16, %s5695, %s5682
        $region124: #{enhanced_hybrid_encoder_forward.1} parent=71 // pred_fallthru
          _
      $region72: #{enhanced_hybrid_encoder_forward.1} parent=5 // pred_fallthru
        _
      %p5698 = scmp.le.s32.totalorder 2, %s29
      // Predicated region
      $region125: #{enhanced_hybrid_encoder_forward.1} parent=5 // pred_check
        %p5699 = pneg %p5698
      $region126: #{enhanced_hybrid_encoder_forward.1} parent=5 // pred_check_branch
        %5701 = sbr.rel (%p5699) target = $region128
      $region127: #{enhanced_hybrid_encoder_forward.1} parent=5 // pred_region
        %s5702 = ssub.s32 %s29, 2
        // Predicated region
        $region129: #{enhanced_hybrid_encoder_forward.1} parent=127 // pred_check
          %p5703 = pneg %p336
        $region130: #{enhanced_hybrid_encoder_forward.1} parent=127 // pred_check_branch
          %5705 = sbr.rel (%p5703) target = $region132
        $region131: #{enhanced_hybrid_encoder_forward.1} parent=127 // pred_region
          %s5706 = sand.u32 %s321, 1
          %s5707 = scalar_lea.sflag [#allocation10], %s5706
          %s5708 = sand.u32 %s321, 1
          %s5709 = scalar_lea.vmem [#allocation26], %s5708
          %5711 = dma.done %s5707, 16
        $region132: #{enhanced_hybrid_encoder_forward.1} parent=127 // pred_fallthru
          _
      $region128: #{enhanced_hybrid_encoder_forward.1} parent=5 // pred_fallthru
        _
    $region6: #{enhanced_hybrid_encoder_forward.1} parent=1 // loop_footer
      %s33 = sadd.s32 1, %s29
    $region7: #{enhanced_hybrid_encoder_forward.1} parent=1 // loop_footer_branch
      %28 = sbr.rel target = $region3
    $region8: #{enhanced_hybrid_encoder_forward.1} parent=1 // loop_exit
      _
    %5712 = vsyncpa [#allocation9], 1
    %s5713 = scalar_lea.sflag [#allocation9], 1
    %5714 = vsyncpa %s5713, 1
    %5715 = vsyncpa [#allocation12], 1
    %5716 = vsyncpa [#allocation15], 1
    %5717 = vsyncpa [#allocation18], 1
    %5718 = vsyncpa [#allocation21], 1
    %5719 = vsyncpa [#allocation24], 1
    %5720 = vsyncpa [#allocation10], 1
    %s5721 = scalar_lea.sflag [#allocation10], 1
    %5722 = vsyncpa %s5721, 1
  %5723 = vsyncmov [#allocation3]
  %s5724 = vpop.sfrf %5723
  %p5725 = scmp.eq.s32.totalorder %s5724, 0
  %p5726 = pneg %p5725
  %5728 = shalt.err (%p5726)

</llo_original>
